<compile_context>
chip_gen: v7x
topology: tpu7x:2x2x1
jax: 0.10.0
libtpu: 0.0.40
codegen_flags: <defaults>
</compile_context>

<pallas_src>
import functools

import jax
import jax.numpy as jnp
from jax.experimental import pallas as pl
from jax.experimental.pallas import tpu as pltpu

PRELU_ALPHA = 0.25          # PyTorch nn.PReLU() default init
BN_EPS = 1e-5
LANE = 128                  # TPU lane width
VMEM_LIMIT_BYTES = 48 * 1024 * 1024   # < 64 MiB physical on v7x, > default scoped limit


def _pick_row_tile(m):
    """Largest row tile (multiple of 8, <=512) that evenly divides m."""
    for t in (512, 256, 128, 64, 32, 16, 8):
        if m % t == 0:
            return t
    return m  # block == full dim is always legal


# ----------------------------------------------------------------------------
# Fused (im2col-matmul) conv + per-channel affine + activation (+ residual)
# ----------------------------------------------------------------------------
def _fused_matmul_epilogue(patches, w2d, scale, shift, residual, act):
    """out = act( (patches @ w2d) * scale + shift (+ residual) ).

    patches : (M, K)  bfloat16   -- im2col activations
    w2d     : (K, Cp) bfloat16   -- weights, Cout zero-padded to Cp (mult. of 128)
    scale   : (1, Cp) float32
    shift   : (1, Cp) float32
    residual: (M, Cp) float32 or None (padded lanes are zero)
    returns : (M, Cp) float32
    """
    M, K = patches.shape
    Cp = w2d.shape[1]
    tm = _pick_row_tile(M)
    tn = LANE
    grid = (M // tm, Cp // tn)
    has_res = residual is not None

    def kernel(*refs):
        if has_res:
            p_ref, w_ref, sc_ref, sh_ref, r_ref, o_ref = refs
        else:
            p_ref, w_ref, sc_ref, sh_ref, o_ref = refs

        # One big lane-dense MXU matmul: K = KH*KW*Cin, f32 accumulation.
        acc = jnp.dot(p_ref[...], w_ref[...], preferred_element_type=jnp.float32)

        # Hoisted broadcasts; epilogue entirely in f32.
        sc = sc_ref[...]            # (1, tn)
        sh = sh_ref[...]            # (1, tn)
        out = acc * sc + sh
        if has_res:
            out = out + r_ref[...]
        if act == "prelu":
            out = jnp.where(out >= 0.0, out, PRELU_ALPHA * out)
        elif act == "tanh":
            out = jnp.tanh(out)
        o_ref[...] = out

    in_specs = [
        pl.BlockSpec((tm, K), lambda i, j: (i, 0)),    # patches row tile
        pl.BlockSpec((K, tn), lambda i, j: (0, j)),    # weight column tile
        pl.BlockSpec((1, tn), lambda i, j: (0, j)),    # scale
        pl.BlockSpec((1, tn), lambda i, j: (0, j)),    # shift
    ]
    inputs = [patches, w2d, scale, shift]
    if has_res:
        in_specs.append(pl.BlockSpec((tm, tn), lambda i, j: (i, j)))
        inputs.append(residual)

    flops = 2 * M * K * Cp
    transcendentals = M * Cp if act == "tanh" else 0
    bytes_accessed = (M * K * 2 + K * Cp * 2 + 2 * Cp * 4 + M * Cp * 4
                      + (M * Cp * 4 if has_res else 0))

    return pl.pallas_call(
        kernel,
        out_shape=jax.ShapeDtypeStruct((M, Cp), jnp.float32),
        grid=grid,
        in_specs=in_specs,
        out_specs=pl.BlockSpec((tm, tn), lambda i, j: (i, j)),
        compiler_params=pltpu.CompilerParams(
            dimension_semantics=("parallel", "parallel"),
            vmem_limit_bytes=VMEM_LIMIT_BYTES),
        cost_estimate=pl.CostEstimate(flops=flops,
                                      transcendentals=transcendentals,
                                      bytes_accessed=bytes_accessed),
    )(*inputs)


def conv2d_affine_act(x, w, scale, shift, *, act="none", residual=None):
    """x: (N, H, W, Cin) f32 NHWC. w: (KH, KW, Cin, Cout). scale/shift: (Cout,).

    Computes act( conv(x, w, stride=1, 'same') * scale + shift (+ residual) ).
    """
    N, H, W, Cin = x.shape
    KH, KW, _, Cout = w.shape
    ph, pw = KH // 2, KW // 2
    K = KH * KW * Cin

    # ---- wrapper-side im2col (layout glue) --------------------------------
    xp = jnp.pad(x, ((0, 0), (ph, ph), (pw, pw), (0, 0)))
    taps = [xp[:, kh:kh + H, kw:kw + W, :]
            for kh in range(KH) for kw in range(KW)]
    patches = jnp.concatenate(taps, axis=-1).reshape(N * H * W, K)
    patches = patches.astype(jnp.bfloat16)          # bf16 MXU operands

    # ---- pad Cout to a lane-dense multiple of 128 --------------------------
    Cp = ((Cout + LANE - 1) // LANE) * LANE
    w2d = w.astype(jnp.bfloat16).reshape(K, Cout)
    w2d = jnp.pad(w2d, ((0, 0), (0, Cp - Cout)))     # zero columns -> padded out = 0
    sc = jnp.pad(scale.astype(jnp.float32), (0, Cp - Cout)).reshape(1, Cp)
    sh = jnp.pad(shift.astype(jnp.float32), (0, Cp - Cout)).reshape(1, Cp)

    res = None
    if residual is not None:
        res = residual.astype(jnp.float32).reshape(N * H * W, Cout)
        res = jnp.pad(res, ((0, 0), (0, Cp - Cout)))  # padded lanes stay exactly 0

    out = _fused_matmul_epilogue(patches, w2d, sc, sh, res, act)
    return out[:, :Cout].reshape(N, H, W, Cout)


# ----------------------------------------------------------------------------
# Layout glue
# ----------------------------------------------------------------------------
def pixel_shuffle_nhwc(x, r):
    """NHWC PixelShuffle matching torch semantics (channel index = c*r^2 + i*r + j)."""
    N, H, W, C = x.shape
    c = C // (r * r)
    x = x.reshape(N, H, W, c, r, r)
    x = jnp.transpose(x, (0, 1, 4, 2, 5, 3))
    return x.reshape(N, H * r, W * r, c)


# ----------------------------------------------------------------------------
# Deterministic parameter construction
# ----------------------------------------------------------------------------
def _conv_init(key, kh, kw, cin, cout):
    k1, k2 = jax.random.split(key)
    w = 0.05 * jax.random.normal(k1, (kh, kw, cin, cout), jnp.float32)
    b = 0.01 * jax.random.normal(k2, (cout,), jnp.float32)
    return w, b


def _spectral_normalize(w, n_iter=3):
    """Divide weight by a power-iteration estimate of its spectral norm
    (mirrors torch.nn.utils.spectral_norm with the weight flattened to (Cout, -1))."""
    cout = w.shape[-1]
    wm = jnp.transpose(w, (3, 2, 0, 1)).reshape(cout, -1)
    u = jnp.ones((cout,), jnp.float32) / jnp.sqrt(jnp.float32(cout))
    v = None
    for _ in range(n_iter):
        v = wm.T @ u
        v = v / (jnp.linalg.norm(v) + 1e-12)
        u = wm @ v
        u = u / (jnp.linalg.norm(u) + 1e-12)
    sigma = u @ (wm @ v)
    return w / sigma


def _bn_init(key, c):
    k1, k2, k3, k4 = jax.random.split(key, 4)
    gamma = 1.0 + 0.1 * jax.random.normal(k1, (c,), jnp.float32)
    beta = 0.1 * jax.random.normal(k2, (c,), jnp.float32)
    mean = 0.05 * jax.random.normal(k3, (c,), jnp.float32)
    var = 1.0 + 0.1 * jnp.abs(jax.random.normal(k4, (c,), jnp.float32))
    return gamma, beta, mean, var


def _fold_bn(conv_bias, gamma, beta, mean, var):
    scale = gamma / jnp.sqrt(var + BN_EPS)
    shift = (conv_bias - mean) * scale + beta
    return scale, shift


def init_generator_params(key, n_blocks, n_features_block, n_features_last,
                          list_scales, input_channels):
    assert n_features_last % 4 == 0
    keys = iter(jax.random.split(key, 8 + 4 * n_blocks + 2 * len(list_scales)))
    params = {}

    # first_layers: sn(Conv 9x9 in_ch -> n_feat) + PReLU
    w, b = _conv_init(next(keys), 9, 9, input_channels, n_features_block)
    params["first"] = dict(w=_spectral_normalize(w),
                           scale=jnp.ones((n_features_block,), jnp.float32),
                           shift=b)

    # block_list: n_blocks x [sn(Conv3x3)+BN+PReLU+sn(Conv3x3)+BN, residual]
    blocks = []
    for _ in range(n_blocks):
        w1, b1 = _conv_init(next(keys), 3, 3, n_features_block, n_features_block)
        s1, sh1 = _fold_bn(b1, *_bn_init(next(keys), n_features_block))
        w2, b2 = _conv_init(next(keys), 3, 3, n_features_block, n_features_block)
        s2, sh2 = _fold_bn(b2, *_bn_init(next(keys), n_features_block))
        blocks.append(dict(w1=_spectral_normalize(w1), scale1=s1, shift1=sh1,
                           w2=_spectral_normalize(w2), scale2=s2, shift2=sh2))
    params["blocks"] = blocks

    # block_list_end: sn(Conv3x3) + BN
    w, b = _conv_init(next(keys), 3, 3, n_features_block, n_features_block)
    s, sh = _fold_bn(b, *_bn_init(next(keys), n_features_block))
    params["block_end"] = dict(w=_spectral_normalize(w), scale=s, shift=sh)

    # upscale (use_sn=False branch): Conv3x3 -> PixelShuffle(r) -> PReLU
    ups = []
    cin = n_features_block
    for i, r in enumerate(list_scales):
        w, b = _conv_init(next(keys), 3, 3, cin, n_features_last)
        ups.append(dict(w=w,
                        scale=jnp.ones((n_features_last,), jnp.float32),
                        shift=b))
        cin = n_features_last // (r * r)
    params["upscale"] = ups

    # end: Conv3x3 -> Tanh
    w, b = _conv_init(next(keys), 3, 3, cin, input_channels)
    params["end"] = dict(w=w,
                         scale=jnp.ones((input_channels,), jnp.float32),
                         shift=b)
    return params


# ----------------------------------------------------------------------------
# Generator forward
# ----------------------------------------------------------------------------
@functools.partial(jax.jit, static_argnames=("scales",))
def generator_forward(x_nchw, params, *, scales):
    # NCHW (PyTorch) -> NHWC (kernel layout)
    x = jnp.transpose(x_nchw, (0, 2, 3, 1)).astype(jnp.float32)

    p = params["first"]
    x = conv2d_affine_act(x, p["w"], p["scale"], p["shift"], act="prelu")
    residual = x

    for bp in params["blocks"]:
        r = x
        x = conv2d_affine_act(x, bp["w1"], bp["scale1"], bp["shift1"], act="prelu")
        # second conv+BN of the block, fused with the residual add
        x = conv2d_affine_act(x, bp["w2"], bp["scale2"], bp["shift2"],
                              act="none", residual=r)

    p = params["block_end"]
    x = conv2d_affine_act(x, p["w"], p["scale"], p["shift"],
                          act="none", residual=residual)

    for up, r in zip(params["upscale"], scales):
        # PReLU is elementwise and PixelShuffle a permutation, so the PReLU is
        # fused into the conv kernel before the (glue) shuffle.
        x = conv2d_affine_act(x, up["w"], up["scale"], up["shift"], act="prelu")
        x = pixel_shuffle_nhwc(x, r)

    p = params["end"]
    x = conv2d_affine_act(x, p["w"], p["scale"], p["shift"], act="tanh")

    # back to NCHW
    return jnp.transpose(x, (0, 3, 1, 2))


if __name__ == "__main__":
    key = jax.random.PRNGKey(0)
    kx, kp = jax.random.split(key)

    # Small, forward-consistent shapes.
    N, C, H, W = 2, 3, 16, 16
    n_blocks = 2
    n_features_block = 8
    n_features_last = 16          # divisible by 4 as asserted in __init__
    list_scales = (2,)            # single x2 PixelShuffle stage

    x = jax.random.normal(kx, (N, C, H, W), jnp.float32)
    params = init_generator_params(kp, n_blocks, n_features_block,
                                   n_features_last, list_scales, C)

    out = generator_forward(x, params, scales=list_scales)
    out = jax.block_until_ready(out)

    expected = (N, C, H * list_scales[-1], W * list_scales[-1])
    assert out.shape == expected, (out.shape, expected)
    assert bool(jnp.all(jnp.isfinite(out)))
    assert bool(jnp.all(jnp.abs(out) <= 1.0 + 1e-5))  # tanh output range

    print("KERNEL_OK")
</pallas_src>

<mosaic_0001>
module attributes {stable_mosaic.version = 11 : i64} {
  func.func @kernel(%arg0: i32, %arg1: i32, %arg2: memref<512x243xbf16, #tpu.memory_space<vmem>>, %arg3: memref<243x128xbf16, #tpu.memory_space<vmem>>, %arg4: memref<1x128xf32, #tpu.memory_space<vmem>>, %arg5: memref<1x128xf32, #tpu.memory_space<vmem>>, %arg6: memref<512x128xf32, #tpu.memory_space<vmem>>) attributes {dimension_semantics = [#tpu.dimension_semantics<parallel>, #tpu.dimension_semantics<parallel>], iteration_bounds = array<i64: 1, 1>, scalar_prefetch = 0 : i64, scratch_operands = 0 : i64, tpu.core_type = #tpu.core_type<tc>, window_params = [{transform_indices = @transform_0, window_bounds = array<i64: 512, 243>}, {transform_indices = @transform_1, window_bounds = array<i64: 243, 128>}, {transform_indices = @transform_2, window_bounds = array<i64: 1, 128>}, {transform_indices = @transform_3, window_bounds = array<i64: 1, 128>}, {transform_indices = @transform_4, window_bounds = array<i64: 512, 128>}]} {
    %c0 = arith.constant 0 : index
    %c0_0 = arith.constant 0 : index
    %0 = vector.load %arg2[%c0, %c0_0] : memref<512x243xbf16, #tpu.memory_space<vmem>>, vector<512x243xbf16>
    %c0_1 = arith.constant 0 : index
    %c0_2 = arith.constant 0 : index
    %1 = vector.load %arg3[%c0_1, %c0_2] : memref<243x128xbf16, #tpu.memory_space<vmem>>, vector<243x128xbf16>
    %cst = arith.constant dense<0.000000e+00> : vector<512x128xf32>
    %2 = tpu.matmul %0, %1, %cst {dimension_numbers = #tpu.dot_dimension_numbers<[1], [0], [0], [1], [0, 0, 1, 1], [], []>} : vector<512x243xbf16>, vector<243x128xbf16>, vector<512x128xf32> -> vector<512x128xf32>
    %c0_3 = arith.constant 0 : index
    %c0_4 = arith.constant 0 : index
    %3 = vector.load %arg4[%c0_3, %c0_4] : memref<1x128xf32, #tpu.memory_space<vmem>>, vector<1x128xf32>
    %c0_5 = arith.constant 0 : index
    %c0_6 = arith.constant 0 : index
    %4 = vector.load %arg5[%c0_5, %c0_6] : memref<1x128xf32, #tpu.memory_space<vmem>>, vector<1x128xf32>
    %5 = vector.broadcast %3 : vector<1x128xf32> to vector<512x128xf32>
    %6 = arith.mulf %2, %5 : vector<512x128xf32>
    %7 = vector.broadcast %4 : vector<1x128xf32> to vector<512x128xf32>
    %8 = arith.addf %6, %7 : vector<512x128xf32>
    %cst_7 = arith.constant 0.000000e+00 : f32
    %9 = vector.broadcast %cst_7 : f32 to vector<512x128xf32>
    %10 = arith.cmpf oge, %8, %9 : vector<512x128xf32>
    %cst_8 = arith.constant 2.500000e-01 : f32
    %11 = vector.broadcast %cst_8 : f32 to vector<512x128xf32>
    %12 = arith.mulf %11, %8 : vector<512x128xf32>
    %13 = arith.select %10, %8, %12 : vector<512x128xi1>, vector<512x128xf32>
    %c0_9 = arith.constant 0 : index
    %c0_10 = arith.constant 0 : index
    %14 = vector.load %arg6[%c0_9, %c0_10] : memref<512x128xf32, #tpu.memory_space<vmem>>, vector<512x128xf32>
    tpu.vector_store %arg6[%c0_9, %c0_10], %13 {strides = array<i32>} : memref<512x128xf32, #tpu.memory_space<vmem>>, vector<512x128xf32>,
    return
  }
  func.func @transform_0(%arg0: i32, %arg1: i32) -> (i32, i32) {
    %c0_i32 = arith.constant 0 : i32
    %c0_i32_0 = arith.constant 0 : i32
    return %arg0, %c0_i32 : i32, i32
  }
  func.func @transform_1(%arg0: i32, %arg1: i32) -> (i32, i32) {
    %c0_i32 = arith.constant 0 : i32
    %c0_i32_0 = arith.constant 0 : i32
    return %c0_i32, %arg1 : i32, i32
  }
  func.func @transform_2(%arg0: i32, %arg1: i32) -> (i32, i32) {
    %c0_i32 = arith.constant 0 : i32
    %c0_i32_0 = arith.constant 0 : i32
    return %c0_i32, %arg1 : i32, i32
  }
  func.func @transform_3(%arg0: i32, %arg1: i32) -> (i32, i32) {
    %c0_i32 = arith.constant 0 : i32
    %c0_i32_0 = arith.constant 0 : i32
    return %c0_i32, %arg1 : i32, i32
  }
  func.func @transform_4(%arg0: i32, %arg1: i32) -> (i32, i32) {
    %c0_i32 = arith.constant 0 : i32
    return %arg0, %arg1 : i32, i32
  }
}

module attributes {stable_mosaic.version = 11 : i64} {
  func.func @kernel(%arg0: i32, %arg1: i32, %arg2: memref<512x72xbf16, #tpu.memory_space<vmem>>, %arg3: memref<72x128xbf16, #tpu.memory_space<vmem>>, %arg4: memref<1x128xf32, #tpu.memory_space<vmem>>, %arg5: memref<1x128xf32, #tpu.memory_space<vmem>>, %arg6: memref<512x128xf32, #tpu.memory_space<vmem>>) attributes {dimension_semantics = [#tpu.dimension_semantics<parallel>, #tpu.dimension_semantics<parallel>], iteration_bounds = array<i64: 1, 1>, scalar_prefetch = 0 : i64, scratch_operands = 0 : i64, tpu.core_type = #tpu.core_type<tc>, window_params = [{transform_indices = @transform_0, window_bounds = array<i64: 512, 72>}, {transform_indices = @transform_1, window_bounds = array<i64: 72, 128>}, {transform_indices = @transform_2, window_bounds = array<i64: 1, 128>}, {transform_indices = @transform_3, window_bounds = array<i64: 1, 128>}, {transform_indices = @transform_4, window_bounds = array<i64: 512, 128>}]} {
    %c0 = arith.constant 0 : index
    %c0_0 = arith.constant 0 : index
    %0 = vector.load %arg2[%c0, %c0_0] : memref<512x72xbf16, #tpu.memory_space<vmem>>, vector<512x72xbf16>
    %c0_1 = arith.constant 0 : index
    %c0_2 = arith.constant 0 : index
    %1 = vector.load %arg3[%c0_1, %c0_2] : memref<72x128xbf16, #tpu.memory_space<vmem>>, vector<72x128xbf16>
    %cst = arith.constant dense<0.000000e+00> : vector<512x128xf32>
    %2 = tpu.matmul %0, %1, %cst {dimension_numbers = #tpu.dot_dimension_numbers<[1], [0], [0], [1], [0, 0, 1, 1], [], []>} : vector<512x72xbf16>, vector<72x128xbf16>, vector<512x128xf32> -> vector<512x128xf32>
    %c0_3 = arith.constant 0 : index
    %c0_4 = arith.constant 0 : index
    %3 = vector.load %arg4[%c0_3, %c0_4] : memref<1x128xf32, #tpu.memory_space<vmem>>, vector<1x128xf32>
    %c0_5 = arith.constant 0 : index
    %c0_6 = arith.constant 0 : index
    %4 = vector.load %arg5[%c0_5, %c0_6] : memref<1x128xf32, #tpu.memory_space<vmem>>, vector<1x128xf32>
    %5 = vector.broadcast %3 : vector<1x128xf32> to vector<512x128xf32>
    %6 = arith.mulf %2, %5 : vector<512x128xf32>
    %7 = vector.broadcast %4 : vector<1x128xf32> to vector<512x128xf32>
    %8 = arith.addf %6, %7 : vector<512x128xf32>
    %cst_7 = arith.constant 0.000000e+00 : f32
    %9 = vector.broadcast %cst_7 : f32 to vector<512x128xf32>
    %10 = arith.cmpf oge, %8, %9 : vector<512x128xf32>
    %cst_8 = arith.constant 2.500000e-01 : f32
    %11 = vector.broadcast %cst_8 : f32 to vector<512x128xf32>
    %12 = arith.mulf %11, %8 : vector<512x128xf32>
    %13 = arith.select %10, %8, %12 : vector<512x128xi1>, vector<512x128xf32>
    %c0_9 = arith.constant 0 : index
    %c0_10 = arith.constant 0 : index
    %14 = vector.load %arg6[%c0_9, %c0_10] : memref<512x128xf32, #tpu.memory_space<vmem>>, vector<512x128xf32>
    tpu.vector_store %arg6[%c0_9, %c0_10], %13 {strides = array<i32>} : memref<512x128xf32, #tpu.memory_space<vmem>>, vector<512x128xf32>,
    return
  }
  func.func @transform_0(%arg0: i32, %arg1: i32) -> (i32, i32) {
    %c0_i32 = arith.constant 0 : i32
    %c0_i32_0 = arith.constant 0 : i32
    return %arg0, %c0_i32 : i32, i32
  }
  func.func @transform_1(%arg0: i32, %arg1: i32) -> (i32, i32) {
    %c0_i32 = arith.constant 0 : i32
    %c0_i32_0 = arith.constant 0 : i32
    return %c0_i32, %arg1 : i32, i32
  }
  func.func @transform_2(%arg0: i32, %arg1: i32) -> (i32, i32) {
    %c0_i32 = arith.constant 0 : i32
    %c0_i32_0 = arith.constant 0 : i32
    return %c0_i32, %arg1 : i32, i32
  }
  func.func @transform_3(%arg0: i32, %arg1: i32) -> (i32, i32) {
    %c0_i32 = arith.constant 0 : i32
    %c0_i32_0 = arith.constant 0 : i32
    return %c0_i32, %arg1 : i32, i32
  }
  func.func @transform_4(%arg0: i32, %arg1: i32) -> (i32, i32) {
    %c0_i32 = arith.constant 0 : i32
    return %arg0, %arg1 : i32, i32
  }
}

module attributes {stable_mosaic.version = 11 : i64} {
  func.func @kernel(%arg0: i32, %arg1: i32, %arg2: memref<512x72xbf16, #tpu.memory_space<vmem>>, %arg3: memref<72x128xbf16, #tpu.memory_space<vmem>>, %arg4: memref<1x128xf32, #tpu.memory_space<vmem>>, %arg5: memref<1x128xf32, #tpu.memory_space<vmem>>, %arg6: memref<512x128xf32, #tpu.memory_space<vmem>>, %arg7: memref<512x128xf32, #tpu.memory_space<vmem>>) attributes {dimension_semantics = [#tpu.dimension_semantics<parallel>, #tpu.dimension_semantics<parallel>], iteration_bounds = array<i64: 1, 1>, scalar_prefetch = 0 : i64, scratch_operands = 0 : i64, tpu.core_type = #tpu.core_type<tc>, window_params = [{transform_indices = @transform_0, window_bounds = array<i64: 512, 72>}, {transform_indices = @transform_1, window_bounds = array<i64: 72, 128>}, {transform_indices = @transform_2, window_bounds = array<i64: 1, 128>}, {transform_indices = @transform_3, window_bounds = array<i64: 1, 128>}, {transform_indices = @transform_4, window_bounds = array<i64: 512, 128>}, {transform_indices = @transform_5, window_bounds = array<i64: 512, 128>}]} {
    %c0 = arith.constant 0 : index
    %c0_0 = arith.constant 0 : index
    %0 = vector.load %arg2[%c0, %c0_0] : memref<512x72xbf16, #tpu.memory_space<vmem>>, vector<512x72xbf16>
    %c0_1 = arith.constant 0 : index
    %c0_2 = arith.constant 0 : index
    %1 = vector.load %arg3[%c0_1, %c0_2] : memref<72x128xbf16, #tpu.memory_space<vmem>>, vector<72x128xbf16>
    %cst = arith.constant dense<0.000000e+00> : vector<512x128xf32>
    %2 = tpu.matmul %0, %1, %cst {dimension_numbers = #tpu.dot_dimension_numbers<[1], [0], [0], [1], [0, 0, 1, 1], [], []>} : vector<512x72xbf16>, vector<72x128xbf16>, vector<512x128xf32> -> vector<512x128xf32>
    %c0_3 = arith.constant 0 : index
    %c0_4 = arith.constant 0 : index
    %3 = vector.load %arg4[%c0_3, %c0_4] : memref<1x128xf32, #tpu.memory_space<vmem>>, vector<1x128xf32>
    %c0_5 = arith.constant 0 : index
    %c0_6 = arith.constant 0 : index
    %4 = vector.load %arg5[%c0_5, %c0_6] : memref<1x128xf32, #tpu.memory_space<vmem>>, vector<1x128xf32>
    %5 = vector.broadcast %3 : vector<1x128xf32> to vector<512x128xf32>
    %6 = arith.mulf %2, %5 : vector<512x128xf32>
    %7 = vector.broadcast %4 : vector<1x128xf32> to vector<512x128xf32>
    %8 = arith.addf %6, %7 : vector<512x128xf32>
    %c0_7 = arith.constant 0 : index
    %c0_8 = arith.constant 0 : index
    %9 = vector.load %arg6[%c0_7, %c0_8] : memref<512x128xf32, #tpu.memory_space<vmem>>, vector<512x128xf32>
    %10 = arith.addf %8, %9 : vector<512x128xf32>
    %c0_9 = arith.constant 0 : index
    %c0_10 = arith.constant 0 : index
    %11 = vector.load %arg7[%c0_9, %c0_10] : memref<512x128xf32, #tpu.memory_space<vmem>>, vector<512x128xf32>
    tpu.vector_store %arg7[%c0_9, %c0_10], %10 {strides = array<i32>} : memref<512x128xf32, #tpu.memory_space<vmem>>, vector<512x128xf32>,
    return
  }
  func.func @transform_0(%arg0: i32, %arg1: i32) -> (i32, i32) {
    %c0_i32 = arith.constant 0 : i32
    %c0_i32_0 = arith.constant 0 : i32
    return %arg0, %c0_i32 : i32, i32
  }
  func.func @transform_1(%arg0: i32, %arg1: i32) -> (i32, i32) {
    %c0_i32 = arith.constant 0 : i32
    %c0_i32_0 = arith.constant 0 : i32
    return %c0_i32, %arg1 : i32, i32
  }
  func.func @transform_2(%arg0: i32, %arg1: i32) -> (i32, i32) {
    %c0_i32 = arith.constant 0 : i32
    %c0_i32_0 = arith.constant 0 : i32
    return %c0_i32, %arg1 : i32, i32
  }
  func.func @transform_3(%arg0: i32, %arg1: i32) -> (i32, i32) {
    %c0_i32 = arith.constant 0 : i32
    %c0_i32_0 = arith.constant 0 : i32
    return %c0_i32, %arg1 : i32, i32
  }
  func.func @transform_4(%arg0: i32, %arg1: i32) -> (i32, i32) {
    %c0_i32 = arith.constant 0 : i32
    return %arg0, %arg1 : i32, i32
  }
  func.func @transform_5(%arg0: i32, %arg1: i32) -> (i32, i32) {
    %c0_i32 = arith.constant 0 : i32
    return %arg0, %arg1 : i32, i32
  }
}

module attributes {stable_mosaic.version = 11 : i64} {
  func.func @kernel(%arg0: i32, %arg1: i32, %arg2: memref<512x36xbf16, #tpu.memory_space<vmem>>, %arg3: memref<36x128xbf16, #tpu.memory_space<vmem>>, %arg4: memref<1x128xf32, #tpu.memory_space<vmem>>, %arg5: memref<1x128xf32, #tpu.memory_space<vmem>>, %arg6: memref<512x128xf32, #tpu.memory_space<vmem>>) attributes {dimension_semantics = [#tpu.dimension_semantics<parallel>, #tpu.dimension_semantics<parallel>], iteration_bounds = array<i64: 4, 1>, scalar_prefetch = 0 : i64, scratch_operands = 0 : i64, tpu.core_type = #tpu.core_type<tc>, window_params = [{transform_indices = @transform_0, window_bounds = array<i64: 512, 36>}, {transform_indices = @transform_1, window_bounds = array<i64: 36, 128>}, {transform_indices = @transform_2, window_bounds = array<i64: 1, 128>}, {transform_indices = @transform_3, window_bounds = array<i64: 1, 128>}, {transform_indices = @transform_4, window_bounds = array<i64: 512, 128>}]} {
    %c0 = arith.constant 0 : index
    %c0_0 = arith.constant 0 : index
    %0 = vector.load %arg2[%c0, %c0_0] : memref<512x36xbf16, #tpu.memory_space<vmem>>, vector<512x36xbf16>
    %c0_1 = arith.constant 0 : index
    %c0_2 = arith.constant 0 : index
    %1 = vector.load %arg3[%c0_1, %c0_2] : memref<36x128xbf16, #tpu.memory_space<vmem>>, vector<36x128xbf16>
    %cst = arith.constant dense<0.000000e+00> : vector<512x128xf32>
    %2 = tpu.matmul %0, %1, %cst {dimension_numbers = #tpu.dot_dimension_numbers<[1], [0], [0], [1], [0, 0, 1, 1], [], []>} : vector<512x36xbf16>, vector<36x128xbf16>, vector<512x128xf32> -> vector<512x128xf32>
    %c0_3 = arith.constant 0 : index
    %c0_4 = arith.constant 0 : index
    %3 = vector.load %arg4[%c0_3, %c0_4] : memref<1x128xf32, #tpu.memory_space<vmem>>, vector<1x128xf32>
    %c0_5 = arith.constant 0 : index
    %c0_6 = arith.constant 0 : index
    %4 = vector.load %arg5[%c0_5, %c0_6] : memref<1x128xf32, #tpu.memory_space<vmem>>, vector<1x128xf32>
    %5 = vector.broadcast %3 : vector<1x128xf32> to vector<512x128xf32>
    %6 = arith.mulf %2, %5 : vector<512x128xf32>
    %7 = vector.broadcast %4 : vector<1x128xf32> to vector<512x128xf32>
    %8 = arith.addf %6, %7 : vector<512x128xf32>
    %9 = math.tanh %8 : vector<512x128xf32>
    %c0_7 = arith.constant 0 : index
    %c0_8 = arith.constant 0 : index
    %10 = vector.load %arg6[%c0_7, %c0_8] : memref<512x128xf32, #tpu.memory_space<vmem>>, vector<512x128xf32>
    tpu.vector_store %arg6[%c0_7, %c0_8], %9 {strides = array<i32>} : memref<512x128xf32, #tpu.memory_space<vmem>>, vector<512x128xf32>,
    return
  }
  func.func @transform_0(%arg0: i32, %arg1: i32) -> (i32, i32) {
    %c0_i32 = arith.constant 0 : i32
    %c0_i32_0 = arith.constant 0 : i32
    return %arg0, %c0_i32 : i32, i32
  }
  func.func @transform_1(%arg0: i32, %arg1: i32) -> (i32, i32) {
    %c0_i32 = arith.constant 0 : i32
    %c0_i32_0 = arith.constant 0 : i32
    return %c0_i32, %arg1 : i32, i32
  }
  func.func @transform_2(%arg0: i32, %arg1: i32) -> (i32, i32) {
    %c0_i32 = arith.constant 0 : i32
    %c0_i32_0 = arith.constant 0 : i32
    return %c0_i32, %arg1 : i32, i32
  }
  func.func @transform_3(%arg0: i32, %arg1: i32) -> (i32, i32) {
    %c0_i32 = arith.constant 0 : i32
    %c0_i32_0 = arith.constant 0 : i32
    return %c0_i32, %arg1 : i32, i32
  }
  func.func @transform_4(%arg0: i32, %arg1: i32) -> (i32, i32) {
    %c0_i32 = arith.constant 0 : i32
    return %arg0, %arg1 : i32, i32
  }
}

</mosaic_0001>

<llo_original>
// kernel: generator_forward.8
$region0: #{generator_forward.8}
  #allocation0 [shape = 'u32[]', space=smem, size = 0x4, offset = 0x4, fixed_abs, tag = 'smem constant byte address 0x4 - core index']
  #allocation1 [shape = 'u32[144,128]{1,0:T(1,128)}', space=vmem, size = 0x12000, scoped, tag = 'internal scratch']
  %s0 = inlined_call_operand.vmem [shape: bf16[512,243], index: 0, kind: input, shape index: {}]
  %s1 = inlined_call_operand.vmem [shape: bf16[243,128], index: 1, kind: input, shape index: {}]
  %s2 = inlined_call_operand.vmem [shape: f32[1,128], index: 2, kind: input, shape index: {}]
  %s3 = inlined_call_operand.vmem [shape: f32[1,128], index: 3, kind: input, shape index: {}]
  %s4 = inlined_call_operand.vmem [shape: f32[512,128], index: 4, kind: output, shape index: {}]
  %s5 = sld [smem:[#allocation0]]
  $region26: #{generator_forward.8} parent=0
    _
  %s7 = ssub.s32 1, %s5
  %s8 = scalar_select 0, %s7, %s5
  // Predicated region
  $region2: #{generator_forward.8} parent=0 // pred_check
    _
  $region3: #{generator_forward.8} parent=0 // pred_check_branch
    %10 = sbr.rel (0) target = $region5
  $region4: #{generator_forward.8} parent=0 // pred_region
    _
  $region5: #{generator_forward.8} parent=0 // pred_fallthru
    _
  // Predicated region
  $region6: #{generator_forward.8} parent=0 // pred_check
    _
  $region7: #{generator_forward.8} parent=0 // pred_check_branch
    %12 = sbr.rel (0) target = $region9
  $region8: #{generator_forward.8} parent=0 // pred_region
    _
  $region9: #{generator_forward.8} parent=0 // pred_fallthru
    _
  // Predicated region
  $region10: #{generator_forward.8} parent=0 // pred_check
    _
  $region11: #{generator_forward.8} parent=0 // pred_check_branch
    %14 = sbr.rel (0) target = $region13
  $region12: #{generator_forward.8} parent=0 // pred_region
    _
  $region13: #{generator_forward.8} parent=0 // pred_fallthru
    _
  // Predicated region
  $region14: #{generator_forward.8} parent=0 // pred_check
    _
  $region15: #{generator_forward.8} parent=0 // pred_check_branch
    %16 = sbr.rel (0) target = $region17
  $region16: #{generator_forward.8} parent=0 // pred_region
    _
  $region17: #{generator_forward.8} parent=0 // pred_fallthru
    _
  %v18 = vld [vmem:[%s0] sm:$0xff]
  %v19 = vld [vmem:[%s0 + $0x8] sm:$0xff]
  %v20 = vld [vmem:[%s0 + $0x10] sm:$0xff]
  %v21 = vld [vmem:[%s0 + $0x18] sm:$0xff]
  %v22 = vld [vmem:[%s0 + $0x20] sm:$0xff]
  %v23 = vld [vmem:[%s0 + $0x28] sm:$0xff]
  %v24 = vld [vmem:[%s0 + $0x30] sm:$0xff]
  %v25 = vld [vmem:[%s0 + $0x38] sm:$0xff]
  %v26 = vld [vmem:[%s0 + $0x40] sm:$0xff]
  %v27 = vld [vmem:[%s0 + $0x48] sm:$0xff]
  %v28 = vld [vmem:[%s0 + $0x50] sm:$0xff]
  %v29 = vld [vmem:[%s0 + $0x58] sm:$0xff]
  %v30 = vld [vmem:[%s0 + $0x60] sm:$0xff]
  %v31 = vld [vmem:[%s0 + $0x68] sm:$0xff]
  %v32 = vld [vmem:[%s0 + $0x70] sm:$0xff]
  %v33 = vld [vmem:[%s0 + $0x78] sm:$0xff]
  %v34 = vld [vmem:[%s0 + $0x80] sm:$0xff]
  %v35 = vld [vmem:[%s0 + $0x88] sm:$0xff]
  %v36 = vld [vmem:[%s0 + $0x90] sm:$0xff]
  %v37 = vld [vmem:[%s0 + $0x98] sm:$0xff]
  %v38 = vld [vmem:[%s0 + $0xa0] sm:$0xff]
  %v39 = vld [vmem:[%s0 + $0xa8] sm:$0xff]
  %v40 = vld [vmem:[%s0 + $0xb0] sm:$0xff]
  %v41 = vld [vmem:[%s0 + $0xb8] sm:$0xff]
  %v42 = vld [vmem:[%s0 + $0xc0] sm:$0xff]
  %v43 = vld [vmem:[%s0 + $0xc8] sm:$0xff]
  %v44 = vld [vmem:[%s0 + $0xd0] sm:$0xff]
  %v45 = vld [vmem:[%s0 + $0xd8] sm:$0xff]
  %v46 = vld [vmem:[%s0 + $0xe0] sm:$0xff]
  %v47 = vld [vmem:[%s0 + $0xe8] sm:$0xff]
  %v48 = vld [vmem:[%s0 + $0xf0] sm:$0xff]
  %v49 = vld [vmem:[%s0 + $0xf8] sm:$0xff]
  %v50 = vld [vmem:[%s0 + $0x100] sm:$0xff]
  %v51 = vld [vmem:[%s0 + $0x108] sm:$0xff]
  %v52 = vld [vmem:[%s0 + $0x110] sm:$0xff]
  %v53 = vld [vmem:[%s0 + $0x118] sm:$0xff]
  %v54 = vld [vmem:[%s0 + $0x120] sm:$0xff]
  %v55 = vld [vmem:[%s0 + $0x128] sm:$0xff]
  %v56 = vld [vmem:[%s0 + $0x130] sm:$0xff]
  %v57 = vld [vmem:[%s0 + $0x138] sm:$0xff]
  %v58 = vld [vmem:[%s0 + $0x140] sm:$0xff]
  %v59 = vld [vmem:[%s0 + $0x148] sm:$0xff]
  %v60 = vld [vmem:[%s0 + $0x150] sm:$0xff]
  %v61 = vld [vmem:[%s0 + $0x158] sm:$0xff]
  %v62 = vld [vmem:[%s0 + $0x160] sm:$0xff]
  %v63 = vld [vmem:[%s0 + $0x168] sm:$0xff]
  %v64 = vld [vmem:[%s0 + $0x170] sm:$0xff]
  %v65 = vld [vmem:[%s0 + $0x178] sm:$0xff]
  %v66 = vld [vmem:[%s0 + $0x180] sm:$0xff]
  %v67 = vld [vmem:[%s0 + $0x188] sm:$0xff]
  %v68 = vld [vmem:[%s0 + $0x190] sm:$0xff]
  %v69 = vld [vmem:[%s0 + $0x198] sm:$0xff]
  %v70 = vld [vmem:[%s0 + $0x1a0] sm:$0xff]
  %v71 = vld [vmem:[%s0 + $0x1a8] sm:$0xff]
  %v72 = vld [vmem:[%s0 + $0x1b0] sm:$0xff]
  %v73 = vld [vmem:[%s0 + $0x1b8] sm:$0xff]
  %v74 = vld [vmem:[%s0 + $0x1c0] sm:$0xff]
  %v75 = vld [vmem:[%s0 + $0x1c8] sm:$0xff]
  %v76 = vld [vmem:[%s0 + $0x1d0] sm:$0xff]
  %v77 = vld [vmem:[%s0 + $0x1d8] sm:$0xff]
  %v78 = vld [vmem:[%s0 + $0x1e0] sm:$0xff]
  %v79 = vld [vmem:[%s0 + $0x1e8] sm:$0xff]
  %v80 = vld [vmem:[%s0 + $0x1f0] sm:$0xff]
  %v81 = vld [vmem:[%s0 + $0x1f8] sm:$0xff]
  %v82 = vld [vmem:[%s1] sm:$0xf]
  %v83 = vld [vmem:[%s1 + $0x4] sm:$0xf]
  %v84 = vld [vmem:[%s1 + $0x8] sm:$0xf]
  %v85 = vld [vmem:[%s1 + $0xc] sm:$0xf]
  %v86 = vld [vmem:[%s1 + $0x10] sm:$0xf]
  %v87 = vld [vmem:[%s1 + $0x14] sm:$0xf]
  %v88 = vld [vmem:[%s1 + $0x18] sm:$0xf]
  %v89 = vld [vmem:[%s1 + $0x1c] sm:$0xf]
  %v90 = vld [vmem:[%s1 + $0x20] sm:$0xf]
  %v91 = vld [vmem:[%s1 + $0x24] sm:$0xf]
  %v92 = vld [vmem:[%s1 + $0x28] sm:$0xf]
  %v93 = vld [vmem:[%s1 + $0x2c] sm:$0xf]
  %v94 = vld [vmem:[%s1 + $0x30] sm:$0xf]
  %v95 = vld [vmem:[%s1 + $0x34] sm:$0xf]
  %v96 = vld [vmem:[%s1 + $0x38] sm:$0xf]
  %v97 = vld [vmem:[%s1 + $0x3c] sm:$0xf]
  %v98 = vld [vmem:[%s1 + $0x40] sm:$0xf]
  %v99 = vld [vmem:[%s1 + $0x44] sm:$0xf]
  %v100 = vld [vmem:[%s1 + $0x48] sm:$0xf]
  %v101 = vld [vmem:[%s1 + $0x4c] sm:$0xf]
  %v102 = vld [vmem:[%s1 + $0x50] sm:$0xf]
  %v103 = vld [vmem:[%s1 + $0x54] sm:$0xf]
  %v104 = vld [vmem:[%s1 + $0x58] sm:$0xf]
  %v105 = vld [vmem:[%s1 + $0x5c] sm:$0xf]
  %v106 = vld [vmem:[%s1 + $0x60] sm:$0xf]
  %v107 = vld [vmem:[%s1 + $0x64] sm:$0xf]
  %v108 = vld [vmem:[%s1 + $0x68] sm:$0xf]
  %v109 = vld [vmem:[%s1 + $0x6c] sm:$0xf]
  %v110 = vld [vmem:[%s1 + $0x70] sm:$0xf]
  %v111 = vld [vmem:[%s1 + $0x74] sm:$0xf]
  %v112 = vld [vmem:[%s1 + $0x78] sm:$0x3]
  %v177 = vunpack.c.l.b16 %v18
  %v178 = vunpack.c.h.b16 %v18
  %v179 = vunpack.c.l.b16 %v19
  %v180 = vunpack.c.h.b16 %v19
  %v181 = vunpack.c.l.b16 %v20
  %v182 = vunpack.c.h.b16 %v20
  %v183 = vunpack.c.l.b16 %v21
  %v184 = vunpack.c.h.b16 %v21
  %v185 = vunpack.c.l.b16 %v22
  %v186 = vunpack.c.h.b16 %v22
  %v187 = vunpack.c.l.b16 %v23
  %v188 = vunpack.c.h.b16 %v23
  %v189 = vunpack.c.l.b16 %v24
  %v190 = vunpack.c.h.b16 %v24
  %v191 = vunpack.c.l.b16 %v25
  %v192 = vunpack.c.h.b16 %v25
  %v193 = vunpack.c.l.b16 %v26
  %v194 = vunpack.c.h.b16 %v26
  %v195 = vunpack.c.l.b16 %v27
  %v196 = vunpack.c.h.b16 %v27
  %v197 = vunpack.c.l.b16 %v28
  %v198 = vunpack.c.h.b16 %v28
  %v199 = vunpack.c.l.b16 %v29
  %v200 = vunpack.c.h.b16 %v29
  %v201 = vunpack.c.l.b16 %v30
  %v202 = vunpack.c.h.b16 %v30
  %v203 = vunpack.c.l.b16 %v31
  %v204 = vunpack.c.h.b16 %v31
  %v205 = vunpack.c.l.b16 %v32
  %v206 = vunpack.c.h.b16 %v32
  %v207 = vunpack.c.l.b16 %v33
  %v208 = vunpack.c.h.b16 %v33
  %v209 = vunpack.c.l.b16 %v34
  %v210 = vunpack.c.h.b16 %v34
  %v211 = vunpack.c.l.b16 %v35
  %v212 = vunpack.c.h.b16 %v35
  %v213 = vunpack.c.l.b16 %v36
  %v214 = vunpack.c.h.b16 %v36
  %v215 = vunpack.c.l.b16 %v37
  %v216 = vunpack.c.h.b16 %v37
  %v217 = vunpack.c.l.b16 %v38
  %v218 = vunpack.c.h.b16 %v38
  %v219 = vunpack.c.l.b16 %v39
  %v220 = vunpack.c.h.b16 %v39
  %v221 = vunpack.c.l.b16 %v40
  %v222 = vunpack.c.h.b16 %v40
  %v223 = vunpack.c.l.b16 %v41
  %v224 = vunpack.c.h.b16 %v41
  %v225 = vunpack.c.l.b16 %v42
  %v226 = vunpack.c.h.b16 %v42
  %v227 = vunpack.c.l.b16 %v43
  %v228 = vunpack.c.h.b16 %v43
  %v229 = vunpack.c.l.b16 %v44
  %v230 = vunpack.c.h.b16 %v44
  %v231 = vunpack.c.l.b16 %v45
  %v232 = vunpack.c.h.b16 %v45
  %v233 = vunpack.c.l.b16 %v46
  %v234 = vunpack.c.h.b16 %v46
  %v235 = vunpack.c.l.b16 %v47
  %v236 = vunpack.c.h.b16 %v47
  %v237 = vunpack.c.l.b16 %v48
  %v238 = vunpack.c.h.b16 %v48
  %v239 = vunpack.c.l.b16 %v49
  %v240 = vunpack.c.h.b16 %v49
  %v241 = vunpack.c.l.b16 %v50
  %v242 = vunpack.c.h.b16 %v50
  %v243 = vunpack.c.l.b16 %v51
  %v244 = vunpack.c.h.b16 %v51
  %v245 = vunpack.c.l.b16 %v52
  %v246 = vunpack.c.h.b16 %v52
  %v247 = vunpack.c.l.b16 %v53
  %v248 = vunpack.c.h.b16 %v53
  %v249 = vunpack.c.l.b16 %v54
  %v250 = vunpack.c.h.b16 %v54
  %v251 = vunpack.c.l.b16 %v55
  %v252 = vunpack.c.h.b16 %v55
  %v253 = vunpack.c.l.b16 %v56
  %v254 = vunpack.c.h.b16 %v56
  %v255 = vunpack.c.l.b16 %v57
  %v256 = vunpack.c.h.b16 %v57
  %v257 = vunpack.c.l.b16 %v58
  %v258 = vunpack.c.h.b16 %v58
  %v259 = vunpack.c.l.b16 %v59
  %v260 = vunpack.c.h.b16 %v59
  %v261 = vunpack.c.l.b16 %v60
  %v262 = vunpack.c.h.b16 %v60
  %v263 = vunpack.c.l.b16 %v61
  %v264 = vunpack.c.h.b16 %v61
  %v265 = vunpack.c.l.b16 %v62
  %v266 = vunpack.c.h.b16 %v62
  %v267 = vunpack.c.l.b16 %v63
  %v268 = vunpack.c.h.b16 %v63
  %v269 = vunpack.c.l.b16 %v64
  %v270 = vunpack.c.h.b16 %v64
  %v271 = vunpack.c.l.b16 %v65
  %v272 = vunpack.c.h.b16 %v65
  %v273 = vunpack.c.l.b16 %v66
  %v274 = vunpack.c.h.b16 %v66
  %v275 = vunpack.c.l.b16 %v67
  %v276 = vunpack.c.h.b16 %v67
  %v277 = vunpack.c.l.b16 %v68
  %v278 = vunpack.c.h.b16 %v68
  %v279 = vunpack.c.l.b16 %v69
  %v280 = vunpack.c.h.b16 %v69
  %v281 = vunpack.c.l.b16 %v70
  %v282 = vunpack.c.h.b16 %v70
  %v283 = vunpack.c.l.b16 %v71
  %v284 = vunpack.c.h.b16 %v71
  %v285 = vunpack.c.l.b16 %v72
  %v286 = vunpack.c.h.b16 %v72
  %v287 = vunpack.c.l.b16 %v73
  %v288 = vunpack.c.h.b16 %v73
  %v289 = vunpack.c.l.b16 %v74
  %v290 = vunpack.c.h.b16 %v74
  %v291 = vunpack.c.l.b16 %v75
  %v292 = vunpack.c.h.b16 %v75
  %v293 = vunpack.c.l.b16 %v76
  %v294 = vunpack.c.h.b16 %v76
  %v295 = vunpack.c.l.b16 %v77
  %v296 = vunpack.c.h.b16 %v77
  %v297 = vunpack.c.l.b16 %v78
  %v298 = vunpack.c.h.b16 %v78
  %v299 = vunpack.c.l.b16 %v79
  %v300 = vunpack.c.h.b16 %v79
  %v301 = vunpack.c.l.b16 %v80
  %v302 = vunpack.c.h.b16 %v80
  %v303 = vunpack.c.l.b16 %v81
  %v304 = vunpack.c.h.b16 %v81
  %v305 = vpack.c.b16 %v179, %v177
  %v306 = vpack.c.b16 %v180, %v178
  %v307 = vpack.c.b16 %v183, %v181
  %v308 = vpack.c.b16 %v184, %v182
  %v309 = vpack.c.b16 %v187, %v185
  %v310 = vpack.c.b16 %v188, %v186
  %v311 = vpack.c.b16 %v191, %v189
  %v312 = vpack.c.b16 %v192, %v190
  %v313 = vpack.c.b16 %v195, %v193
  %v314 = vpack.c.b16 %v196, %v194
  %v315 = vpack.c.b16 %v199, %v197
  %v316 = vpack.c.b16 %v200, %v198
  %v317 = vpack.c.b16 %v203, %v201
  %v318 = vpack.c.b16 %v204, %v202
  %v319 = vpack.c.b16 %v207, %v205
  %v320 = vpack.c.b16 %v208, %v206
  %v321 = vpack.c.b16 %v211, %v209
  %v322 = vpack.c.b16 %v212, %v210
  %v323 = vpack.c.b16 %v215, %v213
  %v324 = vpack.c.b16 %v216, %v214
  %v325 = vpack.c.b16 %v219, %v217
  %v326 = vpack.c.b16 %v220, %v218
  %v327 = vpack.c.b16 %v223, %v221
  %v328 = vpack.c.b16 %v224, %v222
  %v329 = vpack.c.b16 %v227, %v225
  %v330 = vpack.c.b16 %v228, %v226
  %v331 = vpack.c.b16 %v231, %v229
  %v332 = vpack.c.b16 %v232, %v230
  %v333 = vpack.c.b16 %v235, %v233
  %v334 = vpack.c.b16 %v236, %v234
  %v335 = vpack.c.b16 %v239, %v237
  %v336 = vpack.c.b16 %v240, %v238
  %v337 = vpack.c.b16 %v243, %v241
  %v338 = vpack.c.b16 %v244, %v242
  %v339 = vpack.c.b16 %v247, %v245
  %v340 = vpack.c.b16 %v248, %v246
  %v341 = vpack.c.b16 %v251, %v249
  %v342 = vpack.c.b16 %v252, %v250
  %v343 = vpack.c.b16 %v255, %v253
  %v344 = vpack.c.b16 %v256, %v254
  %v345 = vpack.c.b16 %v259, %v257
  %v346 = vpack.c.b16 %v260, %v258
  %v347 = vpack.c.b16 %v263, %v261
  %v348 = vpack.c.b16 %v264, %v262
  %v349 = vpack.c.b16 %v267, %v265
  %v350 = vpack.c.b16 %v268, %v266
  %v351 = vpack.c.b16 %v271, %v269
  %v352 = vpack.c.b16 %v272, %v270
  %v353 = vpack.c.b16 %v275, %v273
  %v354 = vpack.c.b16 %v276, %v274
  %v355 = vpack.c.b16 %v279, %v277
  %v356 = vpack.c.b16 %v280, %v278
  %v357 = vpack.c.b16 %v283, %v281
  %v358 = vpack.c.b16 %v284, %v282
  %v359 = vpack.c.b16 %v287, %v285
  %v360 = vpack.c.b16 %v288, %v286
  %v361 = vpack.c.b16 %v291, %v289
  %v362 = vpack.c.b16 %v292, %v290
  %v363 = vpack.c.b16 %v295, %v293
  %v364 = vpack.c.b16 %v296, %v294
  %v365 = vpack.c.b16 %v299, %v297
  %v366 = vpack.c.b16 %v300, %v298
  %v367 = vpack.c.b16 %v303, %v301
  %v368 = vpack.c.b16 %v304, %v302
  %v432 = vunpack.c.l.b16 %v82
  %v433 = vunpack.c.l.b16 %v83
  %v434 = vunpack.c.l.b16 %v84
  %v435 = vunpack.c.l.b16 %v85
  %v436 = vunpack.c.l.b16 %v86
  %v437 = vunpack.c.l.b16 %v87
  %v438 = vunpack.c.l.b16 %v88
  %v439 = vunpack.c.l.b16 %v89
  %v440 = vunpack.c.l.b16 %v90
  %v441 = vunpack.c.l.b16 %v91
  %v442 = vunpack.c.l.b16 %v92
  %v443 = vunpack.c.l.b16 %v93
  %v444 = vunpack.c.l.b16 %v94
  %v445 = vunpack.c.l.b16 %v95
  %v446 = vunpack.c.l.b16 %v96
  %v447 = vunpack.c.l.b16 %v97
  %v448 = vunpack.c.l.b16 %v98
  %v449 = vunpack.c.l.b16 %v99
  %v450 = vunpack.c.l.b16 %v100
  %v451 = vunpack.c.l.b16 %v101
  %v452 = vunpack.c.l.b16 %v102
  %v453 = vunpack.c.l.b16 %v103
  %v454 = vunpack.c.l.b16 %v104
  %v455 = vunpack.c.l.b16 %v105
  %v456 = vunpack.c.l.b16 %v106
  %v457 = vunpack.c.l.b16 %v107
  %v458 = vunpack.c.l.b16 %v108
  %v459 = vunpack.c.l.b16 %v109
  %v460 = vunpack.c.l.b16 %v110
  %v461 = vunpack.c.l.b16 %v111
  %v462 = vunpack.c.l.b16 %v112
  %v463 = vpack.c.b16 %v433, %v432
  %v464 = vpack.c.b16 %v435, %v434
  %v465 = vpack.c.b16 %v437, %v436
  %v466 = vpack.c.b16 %v439, %v438
  %v467 = vpack.c.b16 %v441, %v440
  %v468 = vpack.c.b16 %v443, %v442
  %v469 = vpack.c.b16 %v445, %v444
  %v470 = vpack.c.b16 %v447, %v446
  %v471 = vpack.c.b16 %v449, %v448
  %v472 = vpack.c.b16 %v451, %v450
  %v473 = vpack.c.b16 %v453, %v452
  %v474 = vpack.c.b16 %v455, %v454
  %v475 = vpack.c.b16 %v457, %v456
  %v476 = vpack.c.b16 %v459, %v458
  %v477 = vpack.c.b16 %v461, %v460
  %v478 = vpack.c.b16 %v462, %v462
  %vm494 = vcmask 941056
  %v496 = vsel %vm494, %v306, 0
  %v499 = vsel %vm494, %v308, 0
  %v502 = vsel %vm494, %v310, 0
  %v505 = vsel %vm494, %v312, 0
  %v508 = vsel %vm494, %v314, 0
  %v511 = vsel %vm494, %v316, 0
  %v514 = vsel %vm494, %v318, 0
  %v517 = vsel %vm494, %v320, 0
  %v520 = vsel %vm494, %v322, 0
  %v523 = vsel %vm494, %v324, 0
  %v526 = vsel %vm494, %v326, 0
  %v529 = vsel %vm494, %v328, 0
  %v532 = vsel %vm494, %v330, 0
  %v535 = vsel %vm494, %v332, 0
  %v538 = vsel %vm494, %v334, 0
  %v541 = vsel %vm494, %v336, 0
  %v544 = vsel %vm494, %v338, 0
  %v547 = vsel %vm494, %v340, 0
  %v550 = vsel %vm494, %v342, 0
  %v553 = vsel %vm494, %v344, 0
  %v556 = vsel %vm494, %v346, 0
  %v559 = vsel %vm494, %v348, 0
  %v562 = vsel %vm494, %v350, 0
  %v565 = vsel %vm494, %v352, 0
  %v568 = vsel %vm494, %v354, 0
  %v571 = vsel %vm494, %v356, 0
  %v574 = vsel %vm494, %v358, 0
  %v577 = vsel %vm494, %v360, 0
  %v580 = vsel %vm494, %v362, 0
  %v583 = vsel %vm494, %v364, 0
  %v586 = vsel %vm494, %v366, 0
  %v589 = vsel %vm494, %v368, 0
  %vm591 = vcmask 1040384
  %vm592 = vcmask 1041408
  %v593 = vsel %vm591, 4294967295, 65535
  %v594 = vsel %vm592, %v593, 0
  %v596 = vand.u32 %v478, %v594
  %598 = vmatprep.subr.bf16.mxu0 0
  %599 = vmatpush1.bf16.msra.mxu0 %v463
  %600 = vmatprep.subr.bf16.mxu0 0
  %601 = vmatpush1.bf16.msra.mxu0 %v464
  %602 = vmatprep.subr.bf16.mxu0 0
  %603 = vmatpush1.bf16.msra.mxu0 %v465
  %604 = vmatprep.subr.bf16.mxu0 0
  %605 = vmatpush1.bf16.msra.mxu0 %v466
  %606 = vmatprep.subr.bf16.mxu0 0
  %607 = vmatpush1.bf16.msra.mxu0 %v467
  %608 = vmatprep.subr.bf16.mxu0 0
  %609 = vmatpush1.bf16.msra.mxu0 %v468
  %610 = vmatprep.subr.bf16.mxu0 0
  %611 = vmatpush1.bf16.msra.mxu0 %v469
  %612 = vmatprep.subr.bf16.mxu0 0
  %613 = vmatpush1.bf16.msra.mxu0 %v470
  %614 = vmatprep.subr.bf16.mxu0 0
  %615 = vmatpush1.bf16.msra.mxu0 %v471
  %616 = vmatprep.subr.bf16.mxu0 0
  %617 = vmatpush1.bf16.msra.mxu0 %v472
  %618 = vmatprep.subr.bf16.mxu0 0
  %619 = vmatpush1.bf16.msra.mxu0 %v473
  %620 = vmatprep.subr.bf16.mxu0 0
  %621 = vmatpush1.bf16.msra.mxu0 %v474
  %622 = vmatprep.subr.bf16.mxu0 0
  %623 = vmatpush1.bf16.msra.mxu0 %v475
  %624 = vmatprep.subr.bf16.mxu0 0
  %625 = vmatpush1.bf16.msra.mxu0 %v476
  %626 = vmatprep.subr.bf16.mxu0 0
  %627 = vmatpush1.bf16.msra.mxu0 %v477
  %628 = vmatprep.subr.bf16.mxu0 0
  %629 = vmatpush1.bf16.msra.mxu0 %v596
  %630 = vmatprep.mubr.bf16.mxu0 %v496
  %631 = vmatmul.mubr.bf16.gmra.mrb[0].mxu0 %v305
  %v632 = vpop.f32.mrb[0].mxu0
  %v633 = vadd.f32 0.0, %v632
  %v634 = vpop.f32.mrb[0].mxu0
  %v635 = vpop.f32.mrb[0].mxu0
  %v636 = vadd.f32 0.0, %v635
  %v637 = vpop.f32.mrb[0].mxu0
  %638 = vmatprep.mubr.bf16.mxu0 %v499
  %639 = vmatmul.mubr.bf16.gmra.mrb[0].mxu0 %v307
  %v640 = vpop.f32.mrb[0].mxu0
  %v641 = vadd.f32 0.0, %v640
  %v642 = vpop.f32.mrb[0].mxu0
  %v643 = vpop.f32.mrb[0].mxu0
  %v644 = vadd.f32 0.0, %v643
  %v645 = vpop.f32.mrb[0].mxu0
  %646 = vmatprep.mubr.bf16.mxu0 %v502
  %647 = vmatmul.mubr.bf16.gmra.mrb[0].mxu0 %v309
  %v648 = vpop.f32.mrb[0].mxu0
  %v649 = vadd.f32 0.0, %v648
  %v650 = vpop.f32.mrb[0].mxu0
  %v651 = vpop.f32.mrb[0].mxu0
  %v652 = vadd.f32 0.0, %v651
  %v653 = vpop.f32.mrb[0].mxu0
  %654 = vmatprep.mubr.bf16.mxu0 %v505
  %655 = vmatmul.mubr.bf16.gmra.mrb[0].mxu0 %v311
  %v656 = vpop.f32.mrb[0].mxu0
  %v657 = vadd.f32 0.0, %v656
  %v658 = vpop.f32.mrb[0].mxu0
  %v659 = vpop.f32.mrb[0].mxu0
  %v660 = vadd.f32 0.0, %v659
  %v661 = vpop.f32.mrb[0].mxu0
  %662 = vmatprep.mubr.bf16.mxu0 %v508
  %663 = vmatmul.mubr.bf16.gmra.mrb[0].mxu0 %v313
  %v664 = vpop.f32.mrb[0].mxu0
  %v665 = vadd.f32 0.0, %v664
  %v666 = vpop.f32.mrb[0].mxu0
  %v667 = vpop.f32.mrb[0].mxu0
  %v668 = vadd.f32 0.0, %v667
  %v669 = vpop.f32.mrb[0].mxu0
  %670 = vmatprep.mubr.bf16.mxu0 %v511
  %671 = vmatmul.mubr.bf16.gmra.mrb[0].mxu0 %v315
  %v672 = vpop.f32.mrb[0].mxu0
  %v673 = vadd.f32 0.0, %v672
  %v674 = vpop.f32.mrb[0].mxu0
  %v675 = vpop.f32.mrb[0].mxu0
  %v676 = vadd.f32 0.0, %v675
  %v677 = vpop.f32.mrb[0].mxu0
  %678 = vmatprep.mubr.bf16.mxu0 %v514
  %679 = vmatmul.mubr.bf16.gmra.mrb[0].mxu0 %v317
  %v680 = vpop.f32.mrb[0].mxu0
  %v681 = vadd.f32 0.0, %v680
  %v682 = vpop.f32.mrb[0].mxu0
  %v683 = vpop.f32.mrb[0].mxu0
  %v684 = vadd.f32 0.0, %v683
  %v685 = vpop.f32.mrb[0].mxu0
  %686 = vmatprep.mubr.bf16.mxu0 %v517
  %687 = vmatmul.mubr.bf16.gmra.mrb[0].mxu0 %v319
  %v688 = vpop.f32.mrb[0].mxu0
  %v689 = vadd.f32 0.0, %v688
  %v690 = vpop.f32.mrb[0].mxu0
  %v691 = vpop.f32.mrb[0].mxu0
  %v692 = vadd.f32 0.0, %v691
  %v693 = vpop.f32.mrb[0].mxu0
  %694 = vmatprep.mubr.bf16.mxu0 %v520
  %695 = vmatmul.mubr.bf16.gmra.mrb[0].mxu0 %v321
  %v696 = vpop.f32.mrb[0].mxu0
  %v697 = vadd.f32 0.0, %v696
  %v698 = vpop.f32.mrb[0].mxu0
  %v699 = vpop.f32.mrb[0].mxu0
  %v700 = vadd.f32 0.0, %v699
  %v701 = vpop.f32.mrb[0].mxu0
  %702 = vmatprep.mubr.bf16.mxu0 %v523
  %703 = vmatmul.mubr.bf16.gmra.mrb[0].mxu0 %v323
  %v704 = vpop.f32.mrb[0].mxu0
  %v705 = vadd.f32 0.0, %v704
  %v706 = vpop.f32.mrb[0].mxu0
  %v707 = vpop.f32.mrb[0].mxu0
  %v708 = vadd.f32 0.0, %v707
  %v709 = vpop.f32.mrb[0].mxu0
  %710 = vmatprep.mubr.bf16.mxu0 %v526
  %711 = vmatmul.mubr.bf16.gmra.mrb[0].mxu0 %v325
  %v712 = vpop.f32.mrb[0].mxu0
  %v713 = vadd.f32 0.0, %v712
  %v714 = vpop.f32.mrb[0].mxu0
  %v715 = vpop.f32.mrb[0].mxu0
  %v716 = vadd.f32 0.0, %v715
  %v717 = vpop.f32.mrb[0].mxu0
  %718 = vmatprep.mubr.bf16.mxu0 %v529
  %719 = vmatmul.mubr.bf16.gmra.mrb[0].mxu0 %v327
  %v720 = vpop.f32.mrb[0].mxu0
  %v721 = vadd.f32 0.0, %v720
  %v722 = vpop.f32.mrb[0].mxu0
  %v723 = vpop.f32.mrb[0].mxu0
  %v724 = vadd.f32 0.0, %v723
  %v725 = vpop.f32.mrb[0].mxu0
  %726 = vmatprep.mubr.bf16.mxu0 %v532
  %727 = vmatmul.mubr.bf16.gmra.mrb[0].mxu0 %v329
  %v728 = vpop.f32.mrb[0].mxu0
  %v729 = vadd.f32 0.0, %v728
  %v730 = vpop.f32.mrb[0].mxu0
  %v731 = vpop.f32.mrb[0].mxu0
  %v732 = vadd.f32 0.0, %v731
  %v733 = vpop.f32.mrb[0].mxu0
  %734 = vmatprep.mubr.bf16.mxu0 %v535
  %735 = vmatmul.mubr.bf16.gmra.mrb[0].mxu0 %v331
  %v736 = vpop.f32.mrb[0].mxu0
  %v737 = vadd.f32 0.0, %v736
  %v738 = vpop.f32.mrb[0].mxu0
  %v739 = vpop.f32.mrb[0].mxu0
  %v740 = vadd.f32 0.0, %v739
  %v741 = vpop.f32.mrb[0].mxu0
  %742 = vmatprep.mubr.bf16.mxu0 %v538
  %743 = vmatmul.mubr.bf16.gmra.mrb[0].mxu0 %v333
  %v744 = vpop.f32.mrb[0].mxu0
  %v745 = vadd.f32 0.0, %v744
  %v746 = vpop.f32.mrb[0].mxu0
  %v747 = vpop.f32.mrb[0].mxu0
  %v748 = vadd.f32 0.0, %v747
  %v749 = vpop.f32.mrb[0].mxu0
  %750 = vmatprep.mubr.bf16.mxu0 %v541
  %751 = vmatmul.mubr.bf16.gmra.mrb[0].mxu0 %v335
  %v752 = vpop.f32.mrb[0].mxu0
  %v753 = vadd.f32 0.0, %v752
  %v754 = vpop.f32.mrb[0].mxu0
  %v755 = vpop.f32.mrb[0].mxu0
  %v756 = vadd.f32 0.0, %v755
  %v757 = vpop.f32.mrb[0].mxu0
  %758 = vmatprep.mubr.bf16.mxu0 %v544
  %759 = vmatmul.mubr.bf16.gmra.mrb[0].mxu0 %v337
  %v760 = vpop.f32.mrb[0].mxu0
  %v761 = vadd.f32 0.0, %v760
  %v762 = vpop.f32.mrb[0].mxu0
  %v763 = vpop.f32.mrb[0].mxu0
  %v764 = vadd.f32 0.0, %v763
  %v765 = vpop.f32.mrb[0].mxu0
  %766 = vmatprep.mubr.bf16.mxu0 %v547
  %767 = vmatmul.mubr.bf16.gmra.mrb[0].mxu0 %v339
  %v768 = vpop.f32.mrb[0].mxu0
  %v769 = vadd.f32 0.0, %v768
  %v770 = vpop.f32.mrb[0].mxu0
  %v771 = vpop.f32.mrb[0].mxu0
  %v772 = vadd.f32 0.0, %v771
  %v773 = vpop.f32.mrb[0].mxu0
  %774 = vmatprep.mubr.bf16.mxu0 %v550
  %775 = vmatmul.mubr.bf16.gmra.mrb[0].mxu0 %v341
  %v776 = vpop.f32.mrb[0].mxu0
  %v777 = vadd.f32 0.0, %v776
  %v778 = vpop.f32.mrb[0].mxu0
  %v779 = vpop.f32.mrb[0].mxu0
  %v780 = vadd.f32 0.0, %v779
  %v781 = vpop.f32.mrb[0].mxu0
  %782 = vmatprep.mubr.bf16.mxu0 %v553
  %783 = vmatmul.mubr.bf16.gmra.mrb[0].mxu0 %v343
  %v784 = vpop.f32.mrb[0].mxu0
  %v785 = vadd.f32 0.0, %v784
  %v786 = vpop.f32.mrb[0].mxu0
  %v787 = vpop.f32.mrb[0].mxu0
  %v788 = vadd.f32 0.0, %v787
  %v789 = vpop.f32.mrb[0].mxu0
  %790 = vmatprep.mubr.bf16.mxu0 %v556
  %791 = vmatmul.mubr.bf16.gmra.mrb[0].mxu0 %v345
  %v792 = vpop.f32.mrb[0].mxu0
  %v793 = vadd.f32 0.0, %v792
  %v794 = vpop.f32.mrb[0].mxu0
  %v795 = vpop.f32.mrb[0].mxu0
  %v796 = vadd.f32 0.0, %v795
  %v797 = vpop.f32.mrb[0].mxu0
  %798 = vmatprep.mubr.bf16.mxu0 %v559
  %799 = vmatmul.mubr.bf16.gmra.mrb[0].mxu0 %v347
  %v800 = vpop.f32.mrb[0].mxu0
  %v801 = vadd.f32 0.0, %v800
  %v802 = vpop.f32.mrb[0].mxu0
  %v803 = vpop.f32.mrb[0].mxu0
  %v804 = vadd.f32 0.0, %v803
  %v805 = vpop.f32.mrb[0].mxu0
  %806 = vmatprep.mubr.bf16.mxu0 %v562
  %807 = vmatmul.mubr.bf16.gmra.mrb[0].mxu0 %v349
  %v808 = vpop.f32.mrb[0].mxu0
  %v809 = vadd.f32 0.0, %v808
  %v810 = vpop.f32.mrb[0].mxu0
  %v811 = vpop.f32.mrb[0].mxu0
  %v812 = vadd.f32 0.0, %v811
  %v813 = vpop.f32.mrb[0].mxu0
  %814 = vmatprep.mubr.bf16.mxu0 %v565
  %815 = vmatmul.mubr.bf16.gmra.mrb[0].mxu0 %v351
  %v816 = vpop.f32.mrb[0].mxu0
  %v817 = vadd.f32 0.0, %v816
  %v818 = vpop.f32.mrb[0].mxu0
  %v819 = vpop.f32.mrb[0].mxu0
  %v820 = vadd.f32 0.0, %v819
  %v821 = vpop.f32.mrb[0].mxu0
  %822 = vmatprep.mubr.bf16.mxu0 %v568
  %823 = vmatmul.mubr.bf16.gmra.mrb[0].mxu0 %v353
  %v824 = vpop.f32.mrb[0].mxu0
  %v825 = vadd.f32 0.0, %v824
  %v826 = vpop.f32.mrb[0].mxu0
  %v827 = vpop.f32.mrb[0].mxu0
  %v828 = vadd.f32 0.0, %v827
  %v829 = vpop.f32.mrb[0].mxu0
  %830 = vmatprep.mubr.bf16.mxu0 %v571
  %831 = vmatmul.mubr.bf16.gmra.mrb[0].mxu0 %v355
  %v832 = vpop.f32.mrb[0].mxu0
  %v833 = vadd.f32 0.0, %v832
  %v834 = vpop.f32.mrb[0].mxu0
  %v835 = vpop.f32.mrb[0].mxu0
  %v836 = vadd.f32 0.0, %v835
  %v837 = vpop.f32.mrb[0].mxu0
  %838 = vmatprep.mubr.bf16.mxu0 %v574
  %839 = vmatmul.mubr.bf16.gmra.mrb[0].mxu0 %v357
  %v840 = vpop.f32.mrb[0].mxu0
  %v841 = vadd.f32 0.0, %v840
  %v842 = vpop.f32.mrb[0].mxu0
  %v843 = vpop.f32.mrb[0].mxu0
  %v844 = vadd.f32 0.0, %v843
  %v845 = vpop.f32.mrb[0].mxu0
  %846 = vmatprep.mubr.bf16.mxu0 %v577
  %847 = vmatmul.mubr.bf16.gmra.mrb[0].mxu0 %v359
  %v848 = vpop.f32.mrb[0].mxu0
  %v849 = vadd.f32 0.0, %v848
  %v850 = vpop.f32.mrb[0].mxu0
  %v851 = vpop.f32.mrb[0].mxu0
  %v852 = vadd.f32 0.0, %v851
  %v853 = vpop.f32.mrb[0].mxu0
  %854 = vmatprep.mubr.bf16.mxu0 %v580
  %855 = vmatmul.mubr.bf16.gmra.mrb[0].mxu0 %v361
  %v856 = vpop.f32.mrb[0].mxu0
  %v857 = vadd.f32 0.0, %v856
  %v858 = vpop.f32.mrb[0].mxu0
  %v859 = vpop.f32.mrb[0].mxu0
  %v860 = vadd.f32 0.0, %v859
  %v861 = vpop.f32.mrb[0].mxu0
  %862 = vmatprep.mubr.bf16.mxu0 %v583
  %863 = vmatmul.mubr.bf16.gmra.mrb[0].mxu0 %v363
  %v864 = vpop.f32.mrb[0].mxu0
  %v865 = vadd.f32 0.0, %v864
  %v866 = vpop.f32.mrb[0].mxu0
  %v867 = vpop.f32.mrb[0].mxu0
  %v868 = vadd.f32 0.0, %v867
  %v869 = vpop.f32.mrb[0].mxu0
  %870 = vmatprep.mubr.bf16.mxu0 %v586
  %871 = vmatmul.mubr.bf16.gmra.mrb[0].mxu0 %v365
  %v872 = vpop.f32.mrb[0].mxu0
  %v873 = vadd.f32 0.0, %v872
  %v874 = vpop.f32.mrb[0].mxu0
  %v875 = vpop.f32.mrb[0].mxu0
  %v876 = vadd.f32 0.0, %v875
  %v877 = vpop.f32.mrb[0].mxu0
  %878 = vmatprep.mubr.bf16.mxu0 %v589
  %879 = vmatmul.mubr.bf16.gmra.mrb[0].mxu0 %v367
  %v880 = vpop.f32.mrb[0].mxu0
  %v881 = vadd.f32 0.0, %v880
  %v882 = vpop.f32.mrb[0].mxu0
  %v883 = vpop.f32.mrb[0].mxu0
  %v884 = vadd.f32 0.0, %v883
  %v885 = vpop.f32.mrb[0].mxu0
  %886 = vdwg.mxu0
  %v887 = vld [vmem:[%s2] sm:$0x1]
  %v888 = vld [vmem:[%s3] sm:$0x1]
  %v890 = vlaneseq
  %v891 = vshrl.u32 %v890, 7
  %v892 = vsub.s32 0, %v891
  %v893 = vrot.slane %v887, %v892
  %v895 = vmul.f32 %v633, %v893
  %v896 = vmul.f32 %v636, %v893
  %v897 = vmul.f32 %v641, %v893
  %v898 = vmul.f32 %v644, %v893
  %v899 = vmul.f32 %v649, %v893
  %v900 = vmul.f32 %v652, %v893
  %v901 = vmul.f32 %v657, %v893
  %v902 = vmul.f32 %v660, %v893
  %v903 = vmul.f32 %v665, %v893
  %v904 = vmul.f32 %v668, %v893
  %v905 = vmul.f32 %v673, %v893
  %v906 = vmul.f32 %v676, %v893
  %v907 = vmul.f32 %v681, %v893
  %v908 = vmul.f32 %v684, %v893
  %v909 = vmul.f32 %v689, %v893
  %v910 = vmul.f32 %v692, %v893
  %v911 = vmul.f32 %v697, %v893
  %v912 = vmul.f32 %v700, %v893
  %v913 = vmul.f32 %v705, %v893
  %v914 = vmul.f32 %v708, %v893
  %v915 = vmul.f32 %v713, %v893
  %v916 = vmul.f32 %v716, %v893
  %v917 = vmul.f32 %v721, %v893
  %v918 = vmul.f32 %v724, %v893
  %v919 = vmul.f32 %v729, %v893
  %v920 = vmul.f32 %v732, %v893
  %v921 = vmul.f32 %v737, %v893
  %v922 = vmul.f32 %v740, %v893
  %v923 = vmul.f32 %v745, %v893
  %v924 = vmul.f32 %v748, %v893
  %v925 = vmul.f32 %v753, %v893
  %v926 = vmul.f32 %v756, %v893
  %v927 = vmul.f32 %v761, %v893
  %v928 = vmul.f32 %v764, %v893
  %v929 = vmul.f32 %v769, %v893
  %v930 = vmul.f32 %v772, %v893
  %v931 = vmul.f32 %v777, %v893
  %v932 = vmul.f32 %v780, %v893
  %v933 = vmul.f32 %v785, %v893
  %v934 = vmul.f32 %v788, %v893
  %v935 = vmul.f32 %v793, %v893
  %v936 = vmul.f32 %v796, %v893
  %v937 = vmul.f32 %v801, %v893
  %v938 = vmul.f32 %v804, %v893
  %v939 = vmul.f32 %v809, %v893
  %v940 = vmul.f32 %v812, %v893
  %v941 = vmul.f32 %v817, %v893
  %v942 = vmul.f32 %v820, %v893
  %v943 = vmul.f32 %v825, %v893
  %v944 = vmul.f32 %v828, %v893
  %v945 = vmul.f32 %v833, %v893
  %v946 = vmul.f32 %v836, %v893
  %v947 = vmul.f32 %v841, %v893
  %v948 = vmul.f32 %v844, %v893
  %v949 = vmul.f32 %v849, %v893
  %v950 = vmul.f32 %v852, %v893
  %v951 = vmul.f32 %v857, %v893
  %v952 = vmul.f32 %v860, %v893
  %v953 = vmul.f32 %v865, %v893
  %v954 = vmul.f32 %v868, %v893
  %v955 = vmul.f32 %v873, %v893
  %v956 = vmul.f32 %v876, %v893
  %v957 = vmul.f32 %v881, %v893
  %v958 = vmul.f32 %v884, %v893
  %v960 = vlaneseq
  %v961 = vshrl.u32 %v960, 7
  %v962 = vsub.s32 0, %v961
  %v963 = vrot.slane %v888, %v962
  %v965 = vadd.f32 %v895, %v963
  %v966 = vadd.f32 %v896, %v963
  %v967 = vadd.f32 %v897, %v963
  %v968 = vadd.f32 %v898, %v963
  %v969 = vadd.f32 %v899, %v963
  %v970 = vadd.f32 %v900, %v963
  %v971 = vadd.f32 %v901, %v963
  %v972 = vadd.f32 %v902, %v963
  %v973 = vadd.f32 %v903, %v963
  %v974 = vadd.f32 %v904, %v963
  %v975 = vadd.f32 %v905, %v963
  %v976 = vadd.f32 %v906, %v963
  %v977 = vadd.f32 %v907, %v963
  %v978 = vadd.f32 %v908, %v963
  %v979 = vadd.f32 %v909, %v963
  %v980 = vadd.f32 %v910, %v963
  %v981 = vadd.f32 %v911, %v963
  %v982 = vadd.f32 %v912, %v963
  %v983 = vadd.f32 %v913, %v963
  %v984 = vadd.f32 %v914, %v963
  %v985 = vadd.f32 %v915, %v963
  %v986 = vadd.f32 %v916, %v963
  %v987 = vadd.f32 %v917, %v963
  %v988 = vadd.f32 %v918, %v963
  %v989 = vadd.f32 %v919, %v963
  %v990 = vadd.f32 %v920, %v963
  %v991 = vadd.f32 %v921, %v963
  %v992 = vadd.f32 %v922, %v963
  %v993 = vadd.f32 %v923, %v963
  %v994 = vadd.f32 %v924, %v963
  %v995 = vadd.f32 %v925, %v963
  %v996 = vadd.f32 %v926, %v963
  %v997 = vadd.f32 %v927, %v963
  %v998 = vadd.f32 %v928, %v963
  %v999 = vadd.f32 %v929, %v963
  %v1000 = vadd.f32 %v930, %v963
  %v1001 = vadd.f32 %v931, %v963
  %v1002 = vadd.f32 %v932, %v963
  %v1003 = vadd.f32 %v933, %v963
  %v1004 = vadd.f32 %v934, %v963
  %v1005 = vadd.f32 %v935, %v963
  %v1006 = vadd.f32 %v936, %v963
  %v1007 = vadd.f32 %v937, %v963
  %v1008 = vadd.f32 %v938, %v963
  %v1009 = vadd.f32 %v939, %v963
  %v1010 = vadd.f32 %v940, %v963
  %v1011 = vadd.f32 %v941, %v963
  %v1012 = vadd.f32 %v942, %v963
  %v1013 = vadd.f32 %v943, %v963
  %v1014 = vadd.f32 %v944, %v963
  %v1015 = vadd.f32 %v945, %v963
  %v1016 = vadd.f32 %v946, %v963
  %v1017 = vadd.f32 %v947, %v963
  %v1018 = vadd.f32 %v948, %v963
  %v1019 = vadd.f32 %v949, %v963
  %v1020 = vadd.f32 %v950, %v963
  %v1021 = vadd.f32 %v951, %v963
  %v1022 = vadd.f32 %v952, %v963
  %v1023 = vadd.f32 %v953, %v963
  %v1024 = vadd.f32 %v954, %v963
  %v1025 = vadd.f32 %v955, %v963
  %v1026 = vadd.f32 %v956, %v963
  %v1027 = vadd.f32 %v957, %v963
  %v1028 = vadd.f32 %v958, %v963
  %vm1029 = vcmp.ge.f32.partialorder %v965, 0.0
  %vm1030 = vcmp.ge.f32.partialorder %v966, 0.0
  %vm1031 = vcmp.ge.f32.partialorder %v967, 0.0
  %vm1032 = vcmp.ge.f32.partialorder %v968, 0.0
  %vm1033 = vcmp.ge.f32.partialorder %v969, 0.0
  %vm1034 = vcmp.ge.f32.partialorder %v970, 0.0
  %vm1035 = vcmp.ge.f32.partialorder %v971, 0.0
  %vm1036 = vcmp.ge.f32.partialorder %v972, 0.0
  %vm1037 = vcmp.ge.f32.partialorder %v973, 0.0
  %vm1038 = vcmp.ge.f32.partialorder %v974, 0.0
  %vm1039 = vcmp.ge.f32.partialorder %v975, 0.0
  %vm1040 = vcmp.ge.f32.partialorder %v976, 0.0
  %vm1041 = vcmp.ge.f32.partialorder %v977, 0.0
  %vm1042 = vcmp.ge.f32.partialorder %v978, 0.0
  %vm1043 = vcmp.ge.f32.partialorder %v979, 0.0
  %vm1044 = vcmp.ge.f32.partialorder %v980, 0.0
  %vm1045 = vcmp.ge.f32.partialorder %v981, 0.0
  %vm1046 = vcmp.ge.f32.partialorder %v982, 0.0
  %vm1047 = vcmp.ge.f32.partialorder %v983, 0.0
  %vm1048 = vcmp.ge.f32.partialorder %v984, 0.0
  %vm1049 = vcmp.ge.f32.partialorder %v985, 0.0
  %vm1050 = vcmp.ge.f32.partialorder %v986, 0.0
  %vm1051 = vcmp.ge.f32.partialorder %v987, 0.0
  %vm1052 = vcmp.ge.f32.partialorder %v988, 0.0
  %vm1053 = vcmp.ge.f32.partialorder %v989, 0.0
  %vm1054 = vcmp.ge.f32.partialorder %v990, 0.0
  %vm1055 = vcmp.ge.f32.partialorder %v991, 0.0
  %vm1056 = vcmp.ge.f32.partialorder %v992, 0.0
  %vm1057 = vcmp.ge.f32.partialorder %v993, 0.0
  %vm1058 = vcmp.ge.f32.partialorder %v994, 0.0
  %vm1059 = vcmp.ge.f32.partialorder %v995, 0.0
  %vm1060 = vcmp.ge.f32.partialorder %v996, 0.0
  %vm1061 = vcmp.ge.f32.partialorder %v997, 0.0
  %vm1062 = vcmp.ge.f32.partialorder %v998, 0.0
  %vm1063 = vcmp.ge.f32.partialorder %v999, 0.0
  %vm1064 = vcmp.ge.f32.partialorder %v1000, 0.0
  %vm1065 = vcmp.ge.f32.partialorder %v1001, 0.0
  %vm1066 = vcmp.ge.f32.partialorder %v1002, 0.0
  %vm1067 = vcmp.ge.f32.partialorder %v1003, 0.0
  %vm1068 = vcmp.ge.f32.partialorder %v1004, 0.0
  %vm1069 = vcmp.ge.f32.partialorder %v1005, 0.0
  %vm1070 = vcmp.ge.f32.partialorder %v1006, 0.0
  %vm1071 = vcmp.ge.f32.partialorder %v1007, 0.0
  %vm1072 = vcmp.ge.f32.partialorder %v1008, 0.0
  %vm1073 = vcmp.ge.f32.partialorder %v1009, 0.0
  %vm1074 = vcmp.ge.f32.partialorder %v1010, 0.0
  %vm1075 = vcmp.ge.f32.partialorder %v1011, 0.0
  %vm1076 = vcmp.ge.f32.partialorder %v1012, 0.0
  %vm1077 = vcmp.ge.f32.partialorder %v1013, 0.0
  %vm1078 = vcmp.ge.f32.partialorder %v1014, 0.0
  %vm1079 = vcmp.ge.f32.partialorder %v1015, 0.0
  %vm1080 = vcmp.ge.f32.partialorder %v1016, 0.0
  %vm1081 = vcmp.ge.f32.partialorder %v1017, 0.0
  %vm1082 = vcmp.ge.f32.partialorder %v1018, 0.0
  %vm1083 = vcmp.ge.f32.partialorder %v1019, 0.0
  %vm1084 = vcmp.ge.f32.partialorder %v1020, 0.0
  %vm1085 = vcmp.ge.f32.partialorder %v1021, 0.0
  %vm1086 = vcmp.ge.f32.partialorder %v1022, 0.0
  %vm1087 = vcmp.ge.f32.partialorder %v1023, 0.0
  %vm1088 = vcmp.ge.f32.partialorder %v1024, 0.0
  %vm1089 = vcmp.ge.f32.partialorder %v1025, 0.0
  %vm1090 = vcmp.ge.f32.partialorder %v1026, 0.0
  %vm1091 = vcmp.ge.f32.partialorder %v1027, 0.0
  %vm1092 = vcmp.ge.f32.partialorder %v1028, 0.0
  %v1093 = vmul.f32 %v965, 0.25
  %v1094 = vmul.f32 %v966, 0.25
  %v1095 = vmul.f32 %v967, 0.25
  %v1096 = vmul.f32 %v968, 0.25
  %v1097 = vmul.f32 %v969, 0.25
  %v1098 = vmul.f32 %v970, 0.25
  %v1099 = vmul.f32 %v971, 0.25
  %v1100 = vmul.f32 %v972, 0.25
  %v1101 = vmul.f32 %v973, 0.25
  %v1102 = vmul.f32 %v974, 0.25
  %v1103 = vmul.f32 %v975, 0.25
  %v1104 = vmul.f32 %v976, 0.25
  %v1105 = vmul.f32 %v977, 0.25
  %v1106 = vmul.f32 %v978, 0.25
  %v1107 = vmul.f32 %v979, 0.25
  %v1108 = vmul.f32 %v980, 0.25
  %v1109 = vmul.f32 %v981, 0.25
  %v1110 = vmul.f32 %v982, 0.25
  %v1111 = vmul.f32 %v983, 0.25
  %v1112 = vmul.f32 %v984, 0.25
  %v1113 = vmul.f32 %v985, 0.25
  %v1114 = vmul.f32 %v986, 0.25
  %v1115 = vmul.f32 %v987, 0.25
  %v1116 = vmul.f32 %v988, 0.25
  %v1117 = vmul.f32 %v989, 0.25
  %v1118 = vmul.f32 %v990, 0.25
  %v1119 = vmul.f32 %v991, 0.25
  %v1120 = vmul.f32 %v992, 0.25
  %v1121 = vmul.f32 %v993, 0.25
  %v1122 = vmul.f32 %v994, 0.25
  %v1123 = vmul.f32 %v995, 0.25
  %v1124 = vmul.f32 %v996, 0.25
  %v1125 = vmul.f32 %v997, 0.25
  %v1126 = vmul.f32 %v998, 0.25
  %v1127 = vmul.f32 %v999, 0.25
  %v1128 = vmul.f32 %v1000, 0.25
  %v1129 = vmul.f32 %v1001, 0.25
  %v1130 = vmul.f32 %v1002, 0.25
  %v1131 = vmul.f32 %v1003, 0.25
  %v1132 = vmul.f32 %v1004, 0.25
  %v1133 = vmul.f32 %v1005, 0.25
  %v1134 = vmul.f32 %v1006, 0.25
  %v1135 = vmul.f32 %v1007, 0.25
  %v1136 = vmul.f32 %v1008, 0.25
  %v1137 = vmul.f32 %v1009, 0.25
  %v1138 = vmul.f32 %v1010, 0.25
  %v1139 = vmul.f32 %v1011, 0.25
  %v1140 = vmul.f32 %v1012, 0.25
  %v1141 = vmul.f32 %v1013, 0.25
  %v1142 = vmul.f32 %v1014, 0.25
  %v1143 = vmul.f32 %v1015, 0.25
  %v1144 = vmul.f32 %v1016, 0.25
  %v1145 = vmul.f32 %v1017, 0.25
  %v1146 = vmul.f32 %v1018, 0.25
  %v1147 = vmul.f32 %v1019, 0.25
  %v1148 = vmul.f32 %v1020, 0.25
  %v1149 = vmul.f32 %v1021, 0.25
  %v1150 = vmul.f32 %v1022, 0.25
  %v1151 = vmul.f32 %v1023, 0.25
  %v1152 = vmul.f32 %v1024, 0.25
  %v1153 = vmul.f32 %v1025, 0.25
  %v1154 = vmul.f32 %v1026, 0.25
  %v1155 = vmul.f32 %v1027, 0.25
  %v1156 = vmul.f32 %v1028, 0.25
  %v1157 = vsel %vm1029, %v965, %v1093
  %v1158 = vsel %vm1030, %v966, %v1094
  %v1159 = vsel %vm1031, %v967, %v1095
  %v1160 = vsel %vm1032, %v968, %v1096
  %v1161 = vsel %vm1033, %v969, %v1097
  %v1162 = vsel %vm1034, %v970, %v1098
  %v1163 = vsel %vm1035, %v971, %v1099
  %v1164 = vsel %vm1036, %v972, %v1100
  %v1165 = vsel %vm1037, %v973, %v1101
  %v1166 = vsel %vm1038, %v974, %v1102
  %v1167 = vsel %vm1039, %v975, %v1103
  %v1168 = vsel %vm1040, %v976, %v1104
  %v1169 = vsel %vm1041, %v977, %v1105
  %v1170 = vsel %vm1042, %v978, %v1106
  %v1171 = vsel %vm1043, %v979, %v1107
  %v1172 = vsel %vm1044, %v980, %v1108
  %v1173 = vsel %vm1045, %v981, %v1109
  %v1174 = vsel %vm1046, %v982, %v1110
  %v1175 = vsel %vm1047, %v983, %v1111
  %v1176 = vsel %vm1048, %v984, %v1112
  %v1177 = vsel %vm1049, %v985, %v1113
  %v1178 = vsel %vm1050, %v986, %v1114
  %v1179 = vsel %vm1051, %v987, %v1115
  %v1180 = vsel %vm1052, %v988, %v1116
  %v1181 = vsel %vm1053, %v989, %v1117
  %v1182 = vsel %vm1054, %v990, %v1118
  %v1183 = vsel %vm1055, %v991, %v1119
  %v1184 = vsel %vm1056, %v992, %v1120
  %v1185 = vsel %vm1057, %v993, %v1121
  %v1186 = vsel %vm1058, %v994, %v1122
  %v1187 = vsel %vm1059, %v995, %v1123
  %v1188 = vsel %vm1060, %v996, %v1124
  %v1189 = vsel %vm1061, %v997, %v1125
  %v1190 = vsel %vm1062, %v998, %v1126
  %v1191 = vsel %vm1063, %v999, %v1127
  %v1192 = vsel %vm1064, %v1000, %v1128
  %v1193 = vsel %vm1065, %v1001, %v1129
  %v1194 = vsel %vm1066, %v1002, %v1130
  %v1195 = vsel %vm1067, %v1003, %v1131
  %v1196 = vsel %vm1068, %v1004, %v1132
  %v1197 = vsel %vm1069, %v1005, %v1133
  %v1198 = vsel %vm1070, %v1006, %v1134
  %v1199 = vsel %vm1071, %v1007, %v1135
  %v1200 = vsel %vm1072, %v1008, %v1136
  %v1201 = vsel %vm1073, %v1009, %v1137
  %v1202 = vsel %vm1074, %v1010, %v1138
  %v1203 = vsel %vm1075, %v1011, %v1139
  %v1204 = vsel %vm1076, %v1012, %v1140
  %v1205 = vsel %vm1077, %v1013, %v1141
  %v1206 = vsel %vm1078, %v1014, %v1142
  %v1207 = vsel %vm1079, %v1015, %v1143
  %v1208 = vsel %vm1080, %v1016, %v1144
  %v1209 = vsel %vm1081, %v1017, %v1145
  %v1210 = vsel %vm1082, %v1018, %v1146
  %v1211 = vsel %vm1083, %v1019, %v1147
  %v1212 = vsel %vm1084, %v1020, %v1148
  %v1213 = vsel %vm1085, %v1021, %v1149
  %v1214 = vsel %vm1086, %v1022, %v1150
  %v1215 = vsel %vm1087, %v1023, %v1151
  %v1216 = vsel %vm1088, %v1024, %v1152
  %v1217 = vsel %vm1089, %v1025, %v1153
  %v1218 = vsel %vm1090, %v1026, %v1154
  %v1219 = vsel %vm1091, %v1027, %v1155
  %v1220 = vsel %vm1092, %v1028, %v1156
  %1221 = vst [vmem:[%s4] sm:$0xff] %v1157
  %1222 = vst [vmem:[%s4 + $0x8] sm:$0xff] %v1158
  %1223 = vst [vmem:[%s4 + $0x10] sm:$0xff] %v1159
  %1224 = vst [vmem:[%s4 + $0x18] sm:$0xff] %v1160
  %1225 = vst [vmem:[%s4 + $0x20] sm:$0xff] %v1161
  %1226 = vst [vmem:[%s4 + $0x28] sm:$0xff] %v1162
  %1227 = vst [vmem:[%s4 + $0x30] sm:$0xff] %v1163
  %1228 = vst [vmem:[%s4 + $0x38] sm:$0xff] %v1164
  %1229 = vst [vmem:[%s4 + $0x40] sm:$0xff] %v1165
  %1230 = vst [vmem:[%s4 + $0x48] sm:$0xff] %v1166
  %1231 = vst [vmem:[%s4 + $0x50] sm:$0xff] %v1167
  %1232 = vst [vmem:[%s4 + $0x58] sm:$0xff] %v1168
  %1233 = vst [vmem:[%s4 + $0x60] sm:$0xff] %v1169
  %1234 = vst [vmem:[%s4 + $0x68] sm:$0xff] %v1170
  %1235 = vst [vmem:[%s4 + $0x70] sm:$0xff] %v1171
  %1236 = vst [vmem:[%s4 + $0x78] sm:$0xff] %v1172
  %1237 = vst [vmem:[%s4 + $0x80] sm:$0xff] %v1173
  %1238 = vst [vmem:[%s4 + $0x88] sm:$0xff] %v1174
  %1239 = vst [vmem:[%s4 + $0x90] sm:$0xff] %v1175
  %1240 = vst [vmem:[%s4 + $0x98] sm:$0xff] %v1176
  %1241 = vst [vmem:[%s4 + $0xa0] sm:$0xff] %v1177
  %1242 = vst [vmem:[%s4 + $0xa8] sm:$0xff] %v1178
  %1243 = vst [vmem:[%s4 + $0xb0] sm:$0xff] %v1179
  %1244 = vst [vmem:[%s4 + $0xb8] sm:$0xff] %v1180
  %1245 = vst [vmem:[%s4 + $0xc0] sm:$0xff] %v1181
  %1246 = vst [vmem:[%s4 + $0xc8] sm:$0xff] %v1182
  %1247 = vst [vmem:[%s4 + $0xd0] sm:$0xff] %v1183
  %1248 = vst [vmem:[%s4 + $0xd8] sm:$0xff] %v1184
  %1249 = vst [vmem:[%s4 + $0xe0] sm:$0xff] %v1185
  %1250 = vst [vmem:[%s4 + $0xe8] sm:$0xff] %v1186
  %1251 = vst [vmem:[%s4 + $0xf0] sm:$0xff] %v1187
  %1252 = vst [vmem:[%s4 + $0xf8] sm:$0xff] %v1188
  %1253 = vst [vmem:[%s4 + $0x100] sm:$0xff] %v1189
  %1254 = vst [vmem:[%s4 + $0x108] sm:$0xff] %v1190
  %1255 = vst [vmem:[%s4 + $0x110] sm:$0xff] %v1191
  %1256 = vst [vmem:[%s4 + $0x118] sm:$0xff] %v1192
  %1257 = vst [vmem:[%s4 + $0x120] sm:$0xff] %v1193
  %1258 = vst [vmem:[%s4 + $0x128] sm:$0xff] %v1194
  %1259 = vst [vmem:[%s4 + $0x130] sm:$0xff] %v1195
  %1260 = vst [vmem:[%s4 + $0x138] sm:$0xff] %v1196
  %1261 = vst [vmem:[%s4 + $0x140] sm:$0xff] %v1197
  %1262 = vst [vmem:[%s4 + $0x148] sm:$0xff] %v1198
  %1263 = vst [vmem:[%s4 + $0x150] sm:$0xff] %v1199
  %1264 = vst [vmem:[%s4 + $0x158] sm:$0xff] %v1200
  %1265 = vst [vmem:[%s4 + $0x160] sm:$0xff] %v1201
  %1266 = vst [vmem:[%s4 + $0x168] sm:$0xff] %v1202
  %1267 = vst [vmem:[%s4 + $0x170] sm:$0xff] %v1203
  %1268 = vst [vmem:[%s4 + $0x178] sm:$0xff] %v1204
  %1269 = vst [vmem:[%s4 + $0x180] sm:$0xff] %v1205
  %1270 = vst [vmem:[%s4 + $0x188] sm:$0xff] %v1206
  %1271 = vst [vmem:[%s4 + $0x190] sm:$0xff] %v1207
  %1272 = vst [vmem:[%s4 + $0x198] sm:$0xff] %v1208
  %1273 = vst [vmem:[%s4 + $0x1a0] sm:$0xff] %v1209
  %1274 = vst [vmem:[%s4 + $0x1a8] sm:$0xff] %v1210
  %1275 = vst [vmem:[%s4 + $0x1b0] sm:$0xff] %v1211
  %1276 = vst [vmem:[%s4 + $0x1b8] sm:$0xff] %v1212
  %1277 = vst [vmem:[%s4 + $0x1c0] sm:$0xff] %v1213
  %1278 = vst [vmem:[%s4 + $0x1c8] sm:$0xff] %v1214
  %1279 = vst [vmem:[%s4 + $0x1d0] sm:$0xff] %v1215
  %1280 = vst [vmem:[%s4 + $0x1d8] sm:$0xff] %v1216
  %1281 = vst [vmem:[%s4 + $0x1e0] sm:$0xff] %v1217
  %1282 = vst [vmem:[%s4 + $0x1e8] sm:$0xff] %v1218
  %1283 = vst [vmem:[%s4 + $0x1f0] sm:$0xff] %v1219
  %1284 = vst [vmem:[%s4 + $0x1f8] sm:$0xff] %v1220
  // Predicated region
  $region18: #{generator_forward.8} parent=0 // pred_check
    _
  $region19: #{generator_forward.8} parent=0 // pred_check_branch
    %1286 = sbr.rel (0) target = $region21
  $region20: #{generator_forward.8} parent=0 // pred_region
    _
  $region21: #{generator_forward.8} parent=0 // pred_fallthru
    _
  // Predicated region
  $region22: #{generator_forward.8} parent=0 // pred_check
    _
  $region23: #{generator_forward.8} parent=0 // pred_check_branch
    %1288 = sbr.rel (0) target = $region25
  $region24: #{generator_forward.8} parent=0 // pred_region
    _
  $region25: #{generator_forward.8} parent=0 // pred_fallthru
    _

// kernel: generator_forward.9
$region0: #{generator_forward.9}
  #allocation0 [shape = 'u32[]', space=smem, size = 0x4, offset = 0x4, fixed_abs, tag = 'smem constant byte address 0x4 - core index']
  #allocation1 [shape = 'u32[144,128]{1,0:T(1,128)}', space=vmem, size = 0x12000, scoped, tag = 'internal scratch']
  %s0 = inlined_call_operand.vmem [shape: bf16[512,72], index: 0, kind: input, shape index: {}]
  %s1 = inlined_call_operand.vmem [shape: bf16[72,128], index: 1, kind: input, shape index: {}]
  %s2 = inlined_call_operand.vmem [shape: f32[1,128], index: 2, kind: input, shape index: {}]
  %s3 = inlined_call_operand.vmem [shape: f32[1,128], index: 3, kind: input, shape index: {}]
  %s4 = inlined_call_operand.vmem [shape: f32[512,128], index: 4, kind: output, shape index: {}]
  %s5 = sld [smem:[#allocation0]]
  $region26: #{generator_forward.9} parent=0
    _
  %s7 = ssub.s32 1, %s5
  %s8 = scalar_select 0, %s7, %s5
  // Predicated region
  $region2: #{generator_forward.9} parent=0 // pred_check
    _
  $region3: #{generator_forward.9} parent=0 // pred_check_branch
    %10 = sbr.rel (0) target = $region5
  $region4: #{generator_forward.9} parent=0 // pred_region
    _
  $region5: #{generator_forward.9} parent=0 // pred_fallthru
    _
  // Predicated region
  $region6: #{generator_forward.9} parent=0 // pred_check
    _
  $region7: #{generator_forward.9} parent=0 // pred_check_branch
    %12 = sbr.rel (0) target = $region9
  $region8: #{generator_forward.9} parent=0 // pred_region
    _
  $region9: #{generator_forward.9} parent=0 // pred_fallthru
    _
  // Predicated region
  $region10: #{generator_forward.9} parent=0 // pred_check
    _
  $region11: #{generator_forward.9} parent=0 // pred_check_branch
    %14 = sbr.rel (0) target = $region13
  $region12: #{generator_forward.9} parent=0 // pred_region
    _
  $region13: #{generator_forward.9} parent=0 // pred_fallthru
    _
  // Predicated region
  $region14: #{generator_forward.9} parent=0 // pred_check
    _
  $region15: #{generator_forward.9} parent=0 // pred_check_branch
    %16 = sbr.rel (0) target = $region17
  $region16: #{generator_forward.9} parent=0 // pred_region
    _
  $region17: #{generator_forward.9} parent=0 // pred_fallthru
    _
  %v18 = vld [vmem:[%s0] sm:$0xf]
  %v19 = vld [vmem:[%s0 + $0x4] sm:$0xf]
  %v20 = vld [vmem:[%s0 + $0x8] sm:$0xf]
  %v21 = vld [vmem:[%s0 + $0xc] sm:$0xf]
  %v22 = vld [vmem:[%s0 + $0x10] sm:$0xf]
  %v23 = vld [vmem:[%s0 + $0x14] sm:$0xf]
  %v24 = vld [vmem:[%s0 + $0x18] sm:$0xf]
  %v25 = vld [vmem:[%s0 + $0x1c] sm:$0xf]
  %v26 = vld [vmem:[%s0 + $0x20] sm:$0xf]
  %v27 = vld [vmem:[%s0 + $0x24] sm:$0xf]
  %v28 = vld [vmem:[%s0 + $0x28] sm:$0xf]
  %v29 = vld [vmem:[%s0 + $0x2c] sm:$0xf]
  %v30 = vld [vmem:[%s0 + $0x30] sm:$0xf]
  %v31 = vld [vmem:[%s0 + $0x34] sm:$0xf]
  %v32 = vld [vmem:[%s0 + $0x38] sm:$0xf]
  %v33 = vld [vmem:[%s0 + $0x3c] sm:$0xf]
  %v34 = vld [vmem:[%s0 + $0x40] sm:$0xf]
  %v35 = vld [vmem:[%s0 + $0x44] sm:$0xf]
  %v36 = vld [vmem:[%s0 + $0x48] sm:$0xf]
  %v37 = vld [vmem:[%s0 + $0x4c] sm:$0xf]
  %v38 = vld [vmem:[%s0 + $0x50] sm:$0xf]
  %v39 = vld [vmem:[%s0 + $0x54] sm:$0xf]
  %v40 = vld [vmem:[%s0 + $0x58] sm:$0xf]
  %v41 = vld [vmem:[%s0 + $0x5c] sm:$0xf]
  %v42 = vld [vmem:[%s0 + $0x60] sm:$0xf]
  %v43 = vld [vmem:[%s0 + $0x64] sm:$0xf]
  %v44 = vld [vmem:[%s0 + $0x68] sm:$0xf]
  %v45 = vld [vmem:[%s0 + $0x6c] sm:$0xf]
  %v46 = vld [vmem:[%s0 + $0x70] sm:$0xf]
  %v47 = vld [vmem:[%s0 + $0x74] sm:$0xf]
  %v48 = vld [vmem:[%s0 + $0x78] sm:$0xf]
  %v49 = vld [vmem:[%s0 + $0x7c] sm:$0xf]
  %v50 = vld [vmem:[%s0 + $0x80] sm:$0xf]
  %v51 = vld [vmem:[%s0 + $0x84] sm:$0xf]
  %v52 = vld [vmem:[%s0 + $0x88] sm:$0xf]
  %v53 = vld [vmem:[%s0 + $0x8c] sm:$0xf]
  %v54 = vld [vmem:[%s0 + $0x90] sm:$0xf]
  %v55 = vld [vmem:[%s0 + $0x94] sm:$0xf]
  %v56 = vld [vmem:[%s0 + $0x98] sm:$0xf]
  %v57 = vld [vmem:[%s0 + $0x9c] sm:$0xf]
  %v58 = vld [vmem:[%s0 + $0xa0] sm:$0xf]
  %v59 = vld [vmem:[%s0 + $0xa4] sm:$0xf]
  %v60 = vld [vmem:[%s0 + $0xa8] sm:$0xf]
  %v61 = vld [vmem:[%s0 + $0xac] sm:$0xf]
  %v62 = vld [vmem:[%s0 + $0xb0] sm:$0xf]
  %v63 = vld [vmem:[%s0 + $0xb4] sm:$0xf]
  %v64 = vld [vmem:[%s0 + $0xb8] sm:$0xf]
  %v65 = vld [vmem:[%s0 + $0xbc] sm:$0xf]
  %v66 = vld [vmem:[%s0 + $0xc0] sm:$0xf]
  %v67 = vld [vmem:[%s0 + $0xc4] sm:$0xf]
  %v68 = vld [vmem:[%s0 + $0xc8] sm:$0xf]
  %v69 = vld [vmem:[%s0 + $0xcc] sm:$0xf]
  %v70 = vld [vmem:[%s0 + $0xd0] sm:$0xf]
  %v71 = vld [vmem:[%s0 + $0xd4] sm:$0xf]
  %v72 = vld [vmem:[%s0 + $0xd8] sm:$0xf]
  %v73 = vld [vmem:[%s0 + $0xdc] sm:$0xf]
  %v74 = vld [vmem:[%s0 + $0xe0] sm:$0xf]
  %v75 = vld [vmem:[%s0 + $0xe4] sm:$0xf]
  %v76 = vld [vmem:[%s0 + $0xe8] sm:$0xf]
  %v77 = vld [vmem:[%s0 + $0xec] sm:$0xf]
  %v78 = vld [vmem:[%s0 + $0xf0] sm:$0xf]
  %v79 = vld [vmem:[%s0 + $0xf4] sm:$0xf]
  %v80 = vld [vmem:[%s0 + $0xf8] sm:$0xf]
  %v81 = vld [vmem:[%s0 + $0xfc] sm:$0xf]
  %v82 = vld [vmem:[%s1] sm:$0xf]
  %v83 = vld [vmem:[%s1 + $0x4] sm:$0xf]
  %v84 = vld [vmem:[%s1 + $0x8] sm:$0xf]
  %v85 = vld [vmem:[%s1 + $0xc] sm:$0xf]
  %v86 = vld [vmem:[%s1 + $0x10] sm:$0xf]
  %v87 = vld [vmem:[%s1 + $0x14] sm:$0xf]
  %v88 = vld [vmem:[%s1 + $0x18] sm:$0xf]
  %v89 = vld [vmem:[%s1 + $0x1c] sm:$0xf]
  %v90 = vld [vmem:[%s1 + $0x20] sm:$0xf]
  %v155 = vunpack.c.l.b16 %v18
  %v156 = vunpack.c.l.b16 %v19
  %v157 = vunpack.c.l.b16 %v20
  %v158 = vunpack.c.l.b16 %v21
  %v159 = vunpack.c.l.b16 %v22
  %v160 = vunpack.c.l.b16 %v23
  %v161 = vunpack.c.l.b16 %v24
  %v162 = vunpack.c.l.b16 %v25
  %v163 = vunpack.c.l.b16 %v26
  %v164 = vunpack.c.l.b16 %v27
  %v165 = vunpack.c.l.b16 %v28
  %v166 = vunpack.c.l.b16 %v29
  %v167 = vunpack.c.l.b16 %v30
  %v168 = vunpack.c.l.b16 %v31
  %v169 = vunpack.c.l.b16 %v32
  %v170 = vunpack.c.l.b16 %v33
  %v171 = vunpack.c.l.b16 %v34
  %v172 = vunpack.c.l.b16 %v35
  %v173 = vunpack.c.l.b16 %v36
  %v174 = vunpack.c.l.b16 %v37
  %v175 = vunpack.c.l.b16 %v38
  %v176 = vunpack.c.l.b16 %v39
  %v177 = vunpack.c.l.b16 %v40
  %v178 = vunpack.c.l.b16 %v41
  %v179 = vunpack.c.l.b16 %v42
  %v180 = vunpack.c.l.b16 %v43
  %v181 = vunpack.c.l.b16 %v44
  %v182 = vunpack.c.l.b16 %v45
  %v183 = vunpack.c.l.b16 %v46
  %v184 = vunpack.c.l.b16 %v47
  %v185 = vunpack.c.l.b16 %v48
  %v186 = vunpack.c.l.b16 %v49
  %v187 = vunpack.c.l.b16 %v50
  %v188 = vunpack.c.l.b16 %v51
  %v189 = vunpack.c.l.b16 %v52
  %v190 = vunpack.c.l.b16 %v53
  %v191 = vunpack.c.l.b16 %v54
  %v192 = vunpack.c.l.b16 %v55
  %v193 = vunpack.c.l.b16 %v56
  %v194 = vunpack.c.l.b16 %v57
  %v195 = vunpack.c.l.b16 %v58
  %v196 = vunpack.c.l.b16 %v59
  %v197 = vunpack.c.l.b16 %v60
  %v198 = vunpack.c.l.b16 %v61
  %v199 = vunpack.c.l.b16 %v62
  %v200 = vunpack.c.l.b16 %v63
  %v201 = vunpack.c.l.b16 %v64
  %v202 = vunpack.c.l.b16 %v65
  %v203 = vunpack.c.l.b16 %v66
  %v204 = vunpack.c.l.b16 %v67
  %v205 = vunpack.c.l.b16 %v68
  %v206 = vunpack.c.l.b16 %v69
  %v207 = vunpack.c.l.b16 %v70
  %v208 = vunpack.c.l.b16 %v71
  %v209 = vunpack.c.l.b16 %v72
  %v210 = vunpack.c.l.b16 %v73
  %v211 = vunpack.c.l.b16 %v74
  %v212 = vunpack.c.l.b16 %v75
  %v213 = vunpack.c.l.b16 %v76
  %v214 = vunpack.c.l.b16 %v77
  %v215 = vunpack.c.l.b16 %v78
  %v216 = vunpack.c.l.b16 %v79
  %v217 = vunpack.c.l.b16 %v80
  %v218 = vunpack.c.l.b16 %v81
  %v219 = vpack.c.b16 %v156, %v155
  %v220 = vpack.c.b16 %v158, %v157
  %v221 = vpack.c.b16 %v160, %v159
  %v222 = vpack.c.b16 %v162, %v161
  %v223 = vpack.c.b16 %v164, %v163
  %v224 = vpack.c.b16 %v166, %v165
  %v225 = vpack.c.b16 %v168, %v167
  %v226 = vpack.c.b16 %v170, %v169
  %v227 = vpack.c.b16 %v172, %v171
  %v228 = vpack.c.b16 %v174, %v173
  %v229 = vpack.c.b16 %v176, %v175
  %v230 = vpack.c.b16 %v178, %v177
  %v231 = vpack.c.b16 %v180, %v179
  %v232 = vpack.c.b16 %v182, %v181
  %v233 = vpack.c.b16 %v184, %v183
  %v234 = vpack.c.b16 %v186, %v185
  %v235 = vpack.c.b16 %v188, %v187
  %v236 = vpack.c.b16 %v190, %v189
  %v237 = vpack.c.b16 %v192, %v191
  %v238 = vpack.c.b16 %v194, %v193
  %v239 = vpack.c.b16 %v196, %v195
  %v240 = vpack.c.b16 %v198, %v197
  %v241 = vpack.c.b16 %v200, %v199
  %v242 = vpack.c.b16 %v202, %v201
  %v243 = vpack.c.b16 %v204, %v203
  %v244 = vpack.c.b16 %v206, %v205
  %v245 = vpack.c.b16 %v208, %v207
  %v246 = vpack.c.b16 %v210, %v209
  %v247 = vpack.c.b16 %v212, %v211
  %v248 = vpack.c.b16 %v214, %v213
  %v249 = vpack.c.b16 %v216, %v215
  %v250 = vpack.c.b16 %v218, %v217
  %v260 = vunpack.c.l.b16 %v82
  %v261 = vunpack.c.l.b16 %v83
  %v262 = vunpack.c.l.b16 %v84
  %v263 = vunpack.c.l.b16 %v85
  %v264 = vunpack.c.l.b16 %v86
  %v265 = vunpack.c.l.b16 %v87
  %v266 = vunpack.c.l.b16 %v88
  %v267 = vunpack.c.l.b16 %v89
  %v268 = vunpack.c.l.b16 %v90
  %v269 = vpack.c.b16 %v261, %v260
  %v270 = vpack.c.b16 %v263, %v262
  %v271 = vpack.c.b16 %v265, %v264
  %v272 = vpack.c.b16 %v267, %v266
  %v273 = vpack.c.b16 %v268, %v268
  %vm278 = vcmask 588800
  %v280 = vsel %vm278, %v219, 0
  %v283 = vsel %vm278, %v220, 0
  %v286 = vsel %vm278, %v221, 0
  %v289 = vsel %vm278, %v222, 0
  %v292 = vsel %vm278, %v223, 0
  %v295 = vsel %vm278, %v224, 0
  %v298 = vsel %vm278, %v225, 0
  %v301 = vsel %vm278, %v226, 0
  %v304 = vsel %vm278, %v227, 0
  %v307 = vsel %vm278, %v228, 0
  %v310 = vsel %vm278, %v229, 0
  %v313 = vsel %vm278, %v230, 0
  %v316 = vsel %vm278, %v231, 0
  %v319 = vsel %vm278, %v232, 0
  %v322 = vsel %vm278, %v233, 0
  %v325 = vsel %vm278, %v234, 0
  %v328 = vsel %vm278, %v235, 0
  %v331 = vsel %vm278, %v236, 0
  %v334 = vsel %vm278, %v237, 0
  %v337 = vsel %vm278, %v238, 0
  %v340 = vsel %vm278, %v239, 0
  %v343 = vsel %vm278, %v240, 0
  %v346 = vsel %vm278, %v241, 0
  %v349 = vsel %vm278, %v242, 0
  %v352 = vsel %vm278, %v243, 0
  %v355 = vsel %vm278, %v244, 0
  %v358 = vsel %vm278, %v245, 0
  %v361 = vsel %vm278, %v246, 0
  %v364 = vsel %vm278, %v247, 0
  %v367 = vsel %vm278, %v248, 0
  %v370 = vsel %vm278, %v249, 0
  %v373 = vsel %vm278, %v250, 0
  %vm375 = vcmask 1043456
  %v377 = vsel %vm375, %v273, 0
  %379 = vmatprep.subr.bf16.mxu0 0
  %380 = vmatpush1.bf16.msra.mxu0 %v269
  %381 = vmatprep.subr.bf16.mxu0 0
  %382 = vmatpush1.bf16.msra.mxu0 %v270
  %383 = vmatprep.subr.bf16.mxu0 0
  %384 = vmatpush1.bf16.msra.mxu0 %v271
  %385 = vmatprep.subr.bf16.mxu0 0
  %386 = vmatpush1.bf16.msra.mxu0 %v272
  %387 = vmatprep.subr.bf16.mxu0 0
  %388 = vmatpush1.bf16.msra.mxu0 %v377
  %389 = vmatprep.subr.bf16.mxu0 0
  %390 = vmatpush1.bf16.msra.mxu0 0
  %391 = vmatprep.subr.bf16.mxu0 0
  %392 = vmatpush1.bf16.msra.mxu0 0
  %393 = vmatprep.subr.bf16.mxu0 0
  %394 = vmatpush1.bf16.msra.mxu0 0
  %395 = vmatprep.subr.bf16.mxu0 0
  %396 = vmatpush1.bf16.msra.mxu0 0
  %397 = vmatprep.subr.bf16.mxu0 0
  %398 = vmatpush1.bf16.msra.mxu0 0
  %399 = vmatprep.subr.bf16.mxu0 0
  %400 = vmatpush1.bf16.msra.mxu0 0
  %401 = vmatprep.subr.bf16.mxu0 0
  %402 = vmatpush1.bf16.msra.mxu0 0
  %403 = vmatprep.subr.bf16.mxu0 0
  %404 = vmatpush1.bf16.msra.mxu0 0
  %405 = vmatprep.subr.bf16.mxu0 0
  %406 = vmatpush1.bf16.msra.mxu0 0
  %407 = vmatprep.subr.bf16.mxu0 0
  %408 = vmatpush1.bf16.msra.mxu0 0
  %409 = vmatprep.subr.bf16.mxu0 0
  %410 = vmatpush1.bf16.msra.mxu0 0
  %411 = vmatprep.mubr.bf16.mxu0 0
  %412 = vmatmul.mubr.bf16.gmra.mrb[0].mxu0 %v280
  %v413 = vpop.f32.mrb[0].mxu0
  %v414 = vadd.f32 0.0, %v413
  %v415 = vpop.f32.mrb[0].mxu0
  %v416 = vpop.f32.mrb[0].mxu0
  %v417 = vadd.f32 0.0, %v416
  %v418 = vpop.f32.mrb[0].mxu0
  %419 = vmatprep.mubr.bf16.mxu0 0
  %420 = vmatmul.mubr.bf16.gmra.mrb[0].mxu0 %v283
  %v421 = vpop.f32.mrb[0].mxu0
  %v422 = vadd.f32 0.0, %v421
  %v423 = vpop.f32.mrb[0].mxu0
  %v424 = vpop.f32.mrb[0].mxu0
  %v425 = vadd.f32 0.0, %v424
  %v426 = vpop.f32.mrb[0].mxu0
  %427 = vmatprep.mubr.bf16.mxu0 0
  %428 = vmatmul.mubr.bf16.gmra.mrb[0].mxu0 %v286
  %v429 = vpop.f32.mrb[0].mxu0
  %v430 = vadd.f32 0.0, %v429
  %v431 = vpop.f32.mrb[0].mxu0
  %v432 = vpop.f32.mrb[0].mxu0
  %v433 = vadd.f32 0.0, %v432
  %v434 = vpop.f32.mrb[0].mxu0
  %435 = vmatprep.mubr.bf16.mxu0 0
  %436 = vmatmul.mubr.bf16.gmra.mrb[0].mxu0 %v289
  %v437 = vpop.f32.mrb[0].mxu0
  %v438 = vadd.f32 0.0, %v437
  %v439 = vpop.f32.mrb[0].mxu0
  %v440 = vpop.f32.mrb[0].mxu0
  %v441 = vadd.f32 0.0, %v440
  %v442 = vpop.f32.mrb[0].mxu0
  %443 = vmatprep.mubr.bf16.mxu0 0
  %444 = vmatmul.mubr.bf16.gmra.mrb[0].mxu0 %v292
  %v445 = vpop.f32.mrb[0].mxu0
  %v446 = vadd.f32 0.0, %v445
  %v447 = vpop.f32.mrb[0].mxu0
  %v448 = vpop.f32.mrb[0].mxu0
  %v449 = vadd.f32 0.0, %v448
  %v450 = vpop.f32.mrb[0].mxu0
  %451 = vmatprep.mubr.bf16.mxu0 0
  %452 = vmatmul.mubr.bf16.gmra.mrb[0].mxu0 %v295
  %v453 = vpop.f32.mrb[0].mxu0
  %v454 = vadd.f32 0.0, %v453
  %v455 = vpop.f32.mrb[0].mxu0
  %v456 = vpop.f32.mrb[0].mxu0
  %v457 = vadd.f32 0.0, %v456
  %v458 = vpop.f32.mrb[0].mxu0
  %459 = vmatprep.mubr.bf16.mxu0 0
  %460 = vmatmul.mubr.bf16.gmra.mrb[0].mxu0 %v298
  %v461 = vpop.f32.mrb[0].mxu0
  %v462 = vadd.f32 0.0, %v461
  %v463 = vpop.f32.mrb[0].mxu0
  %v464 = vpop.f32.mrb[0].mxu0
  %v465 = vadd.f32 0.0, %v464
  %v466 = vpop.f32.mrb[0].mxu0
  %467 = vmatprep.mubr.bf16.mxu0 0
  %468 = vmatmul.mubr.bf16.gmra.mrb[0].mxu0 %v301
  %v469 = vpop.f32.mrb[0].mxu0
  %v470 = vadd.f32 0.0, %v469
  %v471 = vpop.f32.mrb[0].mxu0
  %v472 = vpop.f32.mrb[0].mxu0
  %v473 = vadd.f32 0.0, %v472
  %v474 = vpop.f32.mrb[0].mxu0
  %475 = vmatprep.mubr.bf16.mxu0 0
  %476 = vmatmul.mubr.bf16.gmra.mrb[0].mxu0 %v304
  %v477 = vpop.f32.mrb[0].mxu0
  %v478 = vadd.f32 0.0, %v477
  %v479 = vpop.f32.mrb[0].mxu0
  %v480 = vpop.f32.mrb[0].mxu0
  %v481 = vadd.f32 0.0, %v480
  %v482 = vpop.f32.mrb[0].mxu0
  %483 = vmatprep.mubr.bf16.mxu0 0
  %484 = vmatmul.mubr.bf16.gmra.mrb[0].mxu0 %v307
  %v485 = vpop.f32.mrb[0].mxu0
  %v486 = vadd.f32 0.0, %v485
  %v487 = vpop.f32.mrb[0].mxu0
  %v488 = vpop.f32.mrb[0].mxu0
  %v489 = vadd.f32 0.0, %v488
  %v490 = vpop.f32.mrb[0].mxu0
  %491 = vmatprep.mubr.bf16.mxu0 0
  %492 = vmatmul.mubr.bf16.gmra.mrb[0].mxu0 %v310
  %v493 = vpop.f32.mrb[0].mxu0
  %v494 = vadd.f32 0.0, %v493
  %v495 = vpop.f32.mrb[0].mxu0
  %v496 = vpop.f32.mrb[0].mxu0
  %v497 = vadd.f32 0.0, %v496
  %v498 = vpop.f32.mrb[0].mxu0
  %499 = vmatprep.mubr.bf16.mxu0 0
  %500 = vmatmul.mubr.bf16.gmra.mrb[0].mxu0 %v313
  %v501 = vpop.f32.mrb[0].mxu0
  %v502 = vadd.f32 0.0, %v501
  %v503 = vpop.f32.mrb[0].mxu0
  %v504 = vpop.f32.mrb[0].mxu0
  %v505 = vadd.f32 0.0, %v504
  %v506 = vpop.f32.mrb[0].mxu0
  %507 = vmatprep.mubr.bf16.mxu0 0
  %508 = vmatmul.mubr.bf16.gmra.mrb[0].mxu0 %v316
  %v509 = vpop.f32.mrb[0].mxu0
  %v510 = vadd.f32 0.0, %v509
  %v511 = vpop.f32.mrb[0].mxu0
  %v512 = vpop.f32.mrb[0].mxu0
  %v513 = vadd.f32 0.0, %v512
  %v514 = vpop.f32.mrb[0].mxu0
  %515 = vmatprep.mubr.bf16.mxu0 0
  %516 = vmatmul.mubr.bf16.gmra.mrb[0].mxu0 %v319
  %v517 = vpop.f32.mrb[0].mxu0
  %v518 = vadd.f32 0.0, %v517
  %v519 = vpop.f32.mrb[0].mxu0
  %v520 = vpop.f32.mrb[0].mxu0
  %v521 = vadd.f32 0.0, %v520
  %v522 = vpop.f32.mrb[0].mxu0
  %523 = vmatprep.mubr.bf16.mxu0 0
  %524 = vmatmul.mubr.bf16.gmra.mrb[0].mxu0 %v322
  %v525 = vpop.f32.mrb[0].mxu0
  %v526 = vadd.f32 0.0, %v525
  %v527 = vpop.f32.mrb[0].mxu0
  %v528 = vpop.f32.mrb[0].mxu0
  %v529 = vadd.f32 0.0, %v528
  %v530 = vpop.f32.mrb[0].mxu0
  %531 = vmatprep.mubr.bf16.mxu0 0
  %532 = vmatmul.mubr.bf16.gmra.mrb[0].mxu0 %v325
  %v533 = vpop.f32.mrb[0].mxu0
  %v534 = vadd.f32 0.0, %v533
  %v535 = vpop.f32.mrb[0].mxu0
  %v536 = vpop.f32.mrb[0].mxu0
  %v537 = vadd.f32 0.0, %v536
  %v538 = vpop.f32.mrb[0].mxu0
  %539 = vmatprep.mubr.bf16.mxu0 0
  %540 = vmatmul.mubr.bf16.gmra.mrb[0].mxu0 %v328
  %v541 = vpop.f32.mrb[0].mxu0
  %v542 = vadd.f32 0.0, %v541
  %v543 = vpop.f32.mrb[0].mxu0
  %v544 = vpop.f32.mrb[0].mxu0
  %v545 = vadd.f32 0.0, %v544
  %v546 = vpop.f32.mrb[0].mxu0
  %547 = vmatprep.mubr.bf16.mxu0 0
  %548 = vmatmul.mubr.bf16.gmra.mrb[0].mxu0 %v331
  %v549 = vpop.f32.mrb[0].mxu0
  %v550 = vadd.f32 0.0, %v549
  %v551 = vpop.f32.mrb[0].mxu0
  %v552 = vpop.f32.mrb[0].mxu0
  %v553 = vadd.f32 0.0, %v552
  %v554 = vpop.f32.mrb[0].mxu0
  %555 = vmatprep.mubr.bf16.mxu0 0
  %556 = vmatmul.mubr.bf16.gmra.mrb[0].mxu0 %v334
  %v557 = vpop.f32.mrb[0].mxu0
  %v558 = vadd.f32 0.0, %v557
  %v559 = vpop.f32.mrb[0].mxu0
  %v560 = vpop.f32.mrb[0].mxu0
  %v561 = vadd.f32 0.0, %v560
  %v562 = vpop.f32.mrb[0].mxu0
  %563 = vmatprep.mubr.bf16.mxu0 0
  %564 = vmatmul.mubr.bf16.gmra.mrb[0].mxu0 %v337
  %v565 = vpop.f32.mrb[0].mxu0
  %v566 = vadd.f32 0.0, %v565
  %v567 = vpop.f32.mrb[0].mxu0
  %v568 = vpop.f32.mrb[0].mxu0
  %v569 = vadd.f32 0.0, %v568
  %v570 = vpop.f32.mrb[0].mxu0
  %571 = vmatprep.mubr.bf16.mxu0 0
  %572 = vmatmul.mubr.bf16.gmra.mrb[0].mxu0 %v340
  %v573 = vpop.f32.mrb[0].mxu0
  %v574 = vadd.f32 0.0, %v573
  %v575 = vpop.f32.mrb[0].mxu0
  %v576 = vpop.f32.mrb[0].mxu0
  %v577 = vadd.f32 0.0, %v576
  %v578 = vpop.f32.mrb[0].mxu0
  %579 = vmatprep.mubr.bf16.mxu0 0
  %580 = vmatmul.mubr.bf16.gmra.mrb[0].mxu0 %v343
  %v581 = vpop.f32.mrb[0].mxu0
  %v582 = vadd.f32 0.0, %v581
  %v583 = vpop.f32.mrb[0].mxu0
  %v584 = vpop.f32.mrb[0].mxu0
  %v585 = vadd.f32 0.0, %v584
  %v586 = vpop.f32.mrb[0].mxu0
  %587 = vmatprep.mubr.bf16.mxu0 0
  %588 = vmatmul.mubr.bf16.gmra.mrb[0].mxu0 %v346
  %v589 = vpop.f32.mrb[0].mxu0
  %v590 = vadd.f32 0.0, %v589
  %v591 = vpop.f32.mrb[0].mxu0
  %v592 = vpop.f32.mrb[0].mxu0
  %v593 = vadd.f32 0.0, %v592
  %v594 = vpop.f32.mrb[0].mxu0
  %595 = vmatprep.mubr.bf16.mxu0 0
  %596 = vmatmul.mubr.bf16.gmra.mrb[0].mxu0 %v349
  %v597 = vpop.f32.mrb[0].mxu0
  %v598 = vadd.f32 0.0, %v597
  %v599 = vpop.f32.mrb[0].mxu0
  %v600 = vpop.f32.mrb[0].mxu0
  %v601 = vadd.f32 0.0, %v600
  %v602 = vpop.f32.mrb[0].mxu0
  %603 = vmatprep.mubr.bf16.mxu0 0
  %604 = vmatmul.mubr.bf16.gmra.mrb[0].mxu0 %v352
  %v605 = vpop.f32.mrb[0].mxu0
  %v606 = vadd.f32 0.0, %v605
  %v607 = vpop.f32.mrb[0].mxu0
  %v608 = vpop.f32.mrb[0].mxu0
  %v609 = vadd.f32 0.0, %v608
  %v610 = vpop.f32.mrb[0].mxu0
  %611 = vmatprep.mubr.bf16.mxu0 0
  %612 = vmatmul.mubr.bf16.gmra.mrb[0].mxu0 %v355
  %v613 = vpop.f32.mrb[0].mxu0
  %v614 = vadd.f32 0.0, %v613
  %v615 = vpop.f32.mrb[0].mxu0
  %v616 = vpop.f32.mrb[0].mxu0
  %v617 = vadd.f32 0.0, %v616
  %v618 = vpop.f32.mrb[0].mxu0
  %619 = vmatprep.mubr.bf16.mxu0 0
  %620 = vmatmul.mubr.bf16.gmra.mrb[0].mxu0 %v358
  %v621 = vpop.f32.mrb[0].mxu0
  %v622 = vadd.f32 0.0, %v621
  %v623 = vpop.f32.mrb[0].mxu0
  %v624 = vpop.f32.mrb[0].mxu0
  %v625 = vadd.f32 0.0, %v624
  %v626 = vpop.f32.mrb[0].mxu0
  %627 = vmatprep.mubr.bf16.mxu0 0
  %628 = vmatmul.mubr.bf16.gmra.mrb[0].mxu0 %v361
  %v629 = vpop.f32.mrb[0].mxu0
  %v630 = vadd.f32 0.0, %v629
  %v631 = vpop.f32.mrb[0].mxu0
  %v632 = vpop.f32.mrb[0].mxu0
  %v633 = vadd.f32 0.0, %v632
  %v634 = vpop.f32.mrb[0].mxu0
  %635 = vmatprep.mubr.bf16.mxu0 0
  %636 = vmatmul.mubr.bf16.gmra.mrb[0].mxu0 %v364
  %v637 = vpop.f32.mrb[0].mxu0
  %v638 = vadd.f32 0.0, %v637
  %v639 = vpop.f32.mrb[0].mxu0
  %v640 = vpop.f32.mrb[0].mxu0
  %v641 = vadd.f32 0.0, %v640
  %v642 = vpop.f32.mrb[0].mxu0
  %643 = vmatprep.mubr.bf16.mxu0 0
  %644 = vmatmul.mubr.bf16.gmra.mrb[0].mxu0 %v367
  %v645 = vpop.f32.mrb[0].mxu0
  %v646 = vadd.f32 0.0, %v645
  %v647 = vpop.f32.mrb[0].mxu0
  %v648 = vpop.f32.mrb[0].mxu0
  %v649 = vadd.f32 0.0, %v648
  %v650 = vpop.f32.mrb[0].mxu0
  %651 = vmatprep.mubr.bf16.mxu0 0
  %652 = vmatmul.mubr.bf16.gmra.mrb[0].mxu0 %v370
  %v653 = vpop.f32.mrb[0].mxu0
  %v654 = vadd.f32 0.0, %v653
  %v655 = vpop.f32.mrb[0].mxu0
  %v656 = vpop.f32.mrb[0].mxu0
  %v657 = vadd.f32 0.0, %v656
  %v658 = vpop.f32.mrb[0].mxu0
  %659 = vmatprep.mubr.bf16.mxu0 0
  %660 = vmatmul.mubr.bf16.gmra.mrb[0].mxu0 %v373
  %v661 = vpop.f32.mrb[0].mxu0
  %v662 = vadd.f32 0.0, %v661
  %v663 = vpop.f32.mrb[0].mxu0
  %v664 = vpop.f32.mrb[0].mxu0
  %v665 = vadd.f32 0.0, %v664
  %v666 = vpop.f32.mrb[0].mxu0
  %667 = vdwg.mxu0
  %v668 = vld [vmem:[%s2] sm:$0x1]
  %v669 = vld [vmem:[%s3] sm:$0x1]
  %v671 = vlaneseq
  %v672 = vshrl.u32 %v671, 7
  %v673 = vsub.s32 0, %v672
  %v674 = vrot.slane %v668, %v673
  %v676 = vmul.f32 %v414, %v674
  %v677 = vmul.f32 %v417, %v674
  %v678 = vmul.f32 %v422, %v674
  %v679 = vmul.f32 %v425, %v674
  %v680 = vmul.f32 %v430, %v674
  %v681 = vmul.f32 %v433, %v674
  %v682 = vmul.f32 %v438, %v674
  %v683 = vmul.f32 %v441, %v674
  %v684 = vmul.f32 %v446, %v674
  %v685 = vmul.f32 %v449, %v674
  %v686 = vmul.f32 %v454, %v674
  %v687 = vmul.f32 %v457, %v674
  %v688 = vmul.f32 %v462, %v674
  %v689 = vmul.f32 %v465, %v674
  %v690 = vmul.f32 %v470, %v674
  %v691 = vmul.f32 %v473, %v674
  %v692 = vmul.f32 %v478, %v674
  %v693 = vmul.f32 %v481, %v674
  %v694 = vmul.f32 %v486, %v674
  %v695 = vmul.f32 %v489, %v674
  %v696 = vmul.f32 %v494, %v674
  %v697 = vmul.f32 %v497, %v674
  %v698 = vmul.f32 %v502, %v674
  %v699 = vmul.f32 %v505, %v674
  %v700 = vmul.f32 %v510, %v674
  %v701 = vmul.f32 %v513, %v674
  %v702 = vmul.f32 %v518, %v674
  %v703 = vmul.f32 %v521, %v674
  %v704 = vmul.f32 %v526, %v674
  %v705 = vmul.f32 %v529, %v674
  %v706 = vmul.f32 %v534, %v674
  %v707 = vmul.f32 %v537, %v674
  %v708 = vmul.f32 %v542, %v674
  %v709 = vmul.f32 %v545, %v674
  %v710 = vmul.f32 %v550, %v674
  %v711 = vmul.f32 %v553, %v674
  %v712 = vmul.f32 %v558, %v674
  %v713 = vmul.f32 %v561, %v674
  %v714 = vmul.f32 %v566, %v674
  %v715 = vmul.f32 %v569, %v674
  %v716 = vmul.f32 %v574, %v674
  %v717 = vmul.f32 %v577, %v674
  %v718 = vmul.f32 %v582, %v674
  %v719 = vmul.f32 %v585, %v674
  %v720 = vmul.f32 %v590, %v674
  %v721 = vmul.f32 %v593, %v674
  %v722 = vmul.f32 %v598, %v674
  %v723 = vmul.f32 %v601, %v674
  %v724 = vmul.f32 %v606, %v674
  %v725 = vmul.f32 %v609, %v674
  %v726 = vmul.f32 %v614, %v674
  %v727 = vmul.f32 %v617, %v674
  %v728 = vmul.f32 %v622, %v674
  %v729 = vmul.f32 %v625, %v674
  %v730 = vmul.f32 %v630, %v674
  %v731 = vmul.f32 %v633, %v674
  %v732 = vmul.f32 %v638, %v674
  %v733 = vmul.f32 %v641, %v674
  %v734 = vmul.f32 %v646, %v674
  %v735 = vmul.f32 %v649, %v674
  %v736 = vmul.f32 %v654, %v674
  %v737 = vmul.f32 %v657, %v674
  %v738 = vmul.f32 %v662, %v674
  %v739 = vmul.f32 %v665, %v674
  %v741 = vlaneseq
  %v742 = vshrl.u32 %v741, 7
  %v743 = vsub.s32 0, %v742
  %v744 = vrot.slane %v669, %v743
  %v746 = vadd.f32 %v676, %v744
  %v747 = vadd.f32 %v677, %v744
  %v748 = vadd.f32 %v678, %v744
  %v749 = vadd.f32 %v679, %v744
  %v750 = vadd.f32 %v680, %v744
  %v751 = vadd.f32 %v681, %v744
  %v752 = vadd.f32 %v682, %v744
  %v753 = vadd.f32 %v683, %v744
  %v754 = vadd.f32 %v684, %v744
  %v755 = vadd.f32 %v685, %v744
  %v756 = vadd.f32 %v686, %v744
  %v757 = vadd.f32 %v687, %v744
  %v758 = vadd.f32 %v688, %v744
  %v759 = vadd.f32 %v689, %v744
  %v760 = vadd.f32 %v690, %v744
  %v761 = vadd.f32 %v691, %v744
  %v762 = vadd.f32 %v692, %v744
  %v763 = vadd.f32 %v693, %v744
  %v764 = vadd.f32 %v694, %v744
  %v765 = vadd.f32 %v695, %v744
  %v766 = vadd.f32 %v696, %v744
  %v767 = vadd.f32 %v697, %v744
  %v768 = vadd.f32 %v698, %v744
  %v769 = vadd.f32 %v699, %v744
  %v770 = vadd.f32 %v700, %v744
  %v771 = vadd.f32 %v701, %v744
  %v772 = vadd.f32 %v702, %v744
  %v773 = vadd.f32 %v703, %v744
  %v774 = vadd.f32 %v704, %v744
  %v775 = vadd.f32 %v705, %v744
  %v776 = vadd.f32 %v706, %v744
  %v777 = vadd.f32 %v707, %v744
  %v778 = vadd.f32 %v708, %v744
  %v779 = vadd.f32 %v709, %v744
  %v780 = vadd.f32 %v710, %v744
  %v781 = vadd.f32 %v711, %v744
  %v782 = vadd.f32 %v712, %v744
  %v783 = vadd.f32 %v713, %v744
  %v784 = vadd.f32 %v714, %v744
  %v785 = vadd.f32 %v715, %v744
  %v786 = vadd.f32 %v716, %v744
  %v787 = vadd.f32 %v717, %v744
  %v788 = vadd.f32 %v718, %v744
  %v789 = vadd.f32 %v719, %v744
  %v790 = vadd.f32 %v720, %v744
  %v791 = vadd.f32 %v721, %v744
  %v792 = vadd.f32 %v722, %v744
  %v793 = vadd.f32 %v723, %v744
  %v794 = vadd.f32 %v724, %v744
  %v795 = vadd.f32 %v725, %v744
  %v796 = vadd.f32 %v726, %v744
  %v797 = vadd.f32 %v727, %v744
  %v798 = vadd.f32 %v728, %v744
  %v799 = vadd.f32 %v729, %v744
  %v800 = vadd.f32 %v730, %v744
  %v801 = vadd.f32 %v731, %v744
  %v802 = vadd.f32 %v732, %v744
  %v803 = vadd.f32 %v733, %v744
  %v804 = vadd.f32 %v734, %v744
  %v805 = vadd.f32 %v735, %v744
  %v806 = vadd.f32 %v736, %v744
  %v807 = vadd.f32 %v737, %v744
  %v808 = vadd.f32 %v738, %v744
  %v809 = vadd.f32 %v739, %v744
  %vm810 = vcmp.ge.f32.partialorder %v746, 0.0
  %vm811 = vcmp.ge.f32.partialorder %v747, 0.0
  %vm812 = vcmp.ge.f32.partialorder %v748, 0.0
  %vm813 = vcmp.ge.f32.partialorder %v749, 0.0
  %vm814 = vcmp.ge.f32.partialorder %v750, 0.0
  %vm815 = vcmp.ge.f32.partialorder %v751, 0.0
  %vm816 = vcmp.ge.f32.partialorder %v752, 0.0
  %vm817 = vcmp.ge.f32.partialorder %v753, 0.0
  %vm818 = vcmp.ge.f32.partialorder %v754, 0.0
  %vm819 = vcmp.ge.f32.partialorder %v755, 0.0
  %vm820 = vcmp.ge.f32.partialorder %v756, 0.0
  %vm821 = vcmp.ge.f32.partialorder %v757, 0.0
  %vm822 = vcmp.ge.f32.partialorder %v758, 0.0
  %vm823 = vcmp.ge.f32.partialorder %v759, 0.0
  %vm824 = vcmp.ge.f32.partialorder %v760, 0.0
  %vm825 = vcmp.ge.f32.partialorder %v761, 0.0
  %vm826 = vcmp.ge.f32.partialorder %v762, 0.0
  %vm827 = vcmp.ge.f32.partialorder %v763, 0.0
  %vm828 = vcmp.ge.f32.partialorder %v764, 0.0
  %vm829 = vcmp.ge.f32.partialorder %v765, 0.0
  %vm830 = vcmp.ge.f32.partialorder %v766, 0.0
  %vm831 = vcmp.ge.f32.partialorder %v767, 0.0
  %vm832 = vcmp.ge.f32.partialorder %v768, 0.0
  %vm833 = vcmp.ge.f32.partialorder %v769, 0.0
  %vm834 = vcmp.ge.f32.partialorder %v770, 0.0
  %vm835 = vcmp.ge.f32.partialorder %v771, 0.0
  %vm836 = vcmp.ge.f32.partialorder %v772, 0.0
  %vm837 = vcmp.ge.f32.partialorder %v773, 0.0
  %vm838 = vcmp.ge.f32.partialorder %v774, 0.0
  %vm839 = vcmp.ge.f32.partialorder %v775, 0.0
  %vm840 = vcmp.ge.f32.partialorder %v776, 0.0
  %vm841 = vcmp.ge.f32.partialorder %v777, 0.0
  %vm842 = vcmp.ge.f32.partialorder %v778, 0.0
  %vm843 = vcmp.ge.f32.partialorder %v779, 0.0
  %vm844 = vcmp.ge.f32.partialorder %v780, 0.0
  %vm845 = vcmp.ge.f32.partialorder %v781, 0.0
  %vm846 = vcmp.ge.f32.partialorder %v782, 0.0
  %vm847 = vcmp.ge.f32.partialorder %v783, 0.0
  %vm848 = vcmp.ge.f32.partialorder %v784, 0.0
  %vm849 = vcmp.ge.f32.partialorder %v785, 0.0
  %vm850 = vcmp.ge.f32.partialorder %v786, 0.0
  %vm851 = vcmp.ge.f32.partialorder %v787, 0.0
  %vm852 = vcmp.ge.f32.partialorder %v788, 0.0
  %vm853 = vcmp.ge.f32.partialorder %v789, 0.0
  %vm854 = vcmp.ge.f32.partialorder %v790, 0.0
  %vm855 = vcmp.ge.f32.partialorder %v791, 0.0
  %vm856 = vcmp.ge.f32.partialorder %v792, 0.0
  %vm857 = vcmp.ge.f32.partialorder %v793, 0.0
  %vm858 = vcmp.ge.f32.partialorder %v794, 0.0
  %vm859 = vcmp.ge.f32.partialorder %v795, 0.0
  %vm860 = vcmp.ge.f32.partialorder %v796, 0.0
  %vm861 = vcmp.ge.f32.partialorder %v797, 0.0
  %vm862 = vcmp.ge.f32.partialorder %v798, 0.0
  %vm863 = vcmp.ge.f32.partialorder %v799, 0.0
  %vm864 = vcmp.ge.f32.partialorder %v800, 0.0
  %vm865 = vcmp.ge.f32.partialorder %v801, 0.0
  %vm866 = vcmp.ge.f32.partialorder %v802, 0.0
  %vm867 = vcmp.ge.f32.partialorder %v803, 0.0
  %vm868 = vcmp.ge.f32.partialorder %v804, 0.0
  %vm869 = vcmp.ge.f32.partialorder %v805, 0.0
  %vm870 = vcmp.ge.f32.partialorder %v806, 0.0
  %vm871 = vcmp.ge.f32.partialorder %v807, 0.0
  %vm872 = vcmp.ge.f32.partialorder %v808, 0.0
  %vm873 = vcmp.ge.f32.partialorder %v809, 0.0
  %v874 = vmul.f32 %v746, 0.25
  %v875 = vmul.f32 %v747, 0.25
  %v876 = vmul.f32 %v748, 0.25
  %v877 = vmul.f32 %v749, 0.25
  %v878 = vmul.f32 %v750, 0.25
  %v879 = vmul.f32 %v751, 0.25
  %v880 = vmul.f32 %v752, 0.25
  %v881 = vmul.f32 %v753, 0.25
  %v882 = vmul.f32 %v754, 0.25
  %v883 = vmul.f32 %v755, 0.25
  %v884 = vmul.f32 %v756, 0.25
  %v885 = vmul.f32 %v757, 0.25
  %v886 = vmul.f32 %v758, 0.25
  %v887 = vmul.f32 %v759, 0.25
  %v888 = vmul.f32 %v760, 0.25
  %v889 = vmul.f32 %v761, 0.25
  %v890 = vmul.f32 %v762, 0.25
  %v891 = vmul.f32 %v763, 0.25
  %v892 = vmul.f32 %v764, 0.25
  %v893 = vmul.f32 %v765, 0.25
  %v894 = vmul.f32 %v766, 0.25
  %v895 = vmul.f32 %v767, 0.25
  %v896 = vmul.f32 %v768, 0.25
  %v897 = vmul.f32 %v769, 0.25
  %v898 = vmul.f32 %v770, 0.25
  %v899 = vmul.f32 %v771, 0.25
  %v900 = vmul.f32 %v772, 0.25
  %v901 = vmul.f32 %v773, 0.25
  %v902 = vmul.f32 %v774, 0.25
  %v903 = vmul.f32 %v775, 0.25
  %v904 = vmul.f32 %v776, 0.25
  %v905 = vmul.f32 %v777, 0.25
  %v906 = vmul.f32 %v778, 0.25
  %v907 = vmul.f32 %v779, 0.25
  %v908 = vmul.f32 %v780, 0.25
  %v909 = vmul.f32 %v781, 0.25
  %v910 = vmul.f32 %v782, 0.25
  %v911 = vmul.f32 %v783, 0.25
  %v912 = vmul.f32 %v784, 0.25
  %v913 = vmul.f32 %v785, 0.25
  %v914 = vmul.f32 %v786, 0.25
  %v915 = vmul.f32 %v787, 0.25
  %v916 = vmul.f32 %v788, 0.25
  %v917 = vmul.f32 %v789, 0.25
  %v918 = vmul.f32 %v790, 0.25
  %v919 = vmul.f32 %v791, 0.25
  %v920 = vmul.f32 %v792, 0.25
  %v921 = vmul.f32 %v793, 0.25
  %v922 = vmul.f32 %v794, 0.25
  %v923 = vmul.f32 %v795, 0.25
  %v924 = vmul.f32 %v796, 0.25
  %v925 = vmul.f32 %v797, 0.25
  %v926 = vmul.f32 %v798, 0.25
  %v927 = vmul.f32 %v799, 0.25
  %v928 = vmul.f32 %v800, 0.25
  %v929 = vmul.f32 %v801, 0.25
  %v930 = vmul.f32 %v802, 0.25
  %v931 = vmul.f32 %v803, 0.25
  %v932 = vmul.f32 %v804, 0.25
  %v933 = vmul.f32 %v805, 0.25
  %v934 = vmul.f32 %v806, 0.25
  %v935 = vmul.f32 %v807, 0.25
  %v936 = vmul.f32 %v808, 0.25
  %v937 = vmul.f32 %v809, 0.25
  %v938 = vsel %vm810, %v746, %v874
  %v939 = vsel %vm811, %v747, %v875
  %v940 = vsel %vm812, %v748, %v876
  %v941 = vsel %vm813, %v749, %v877
  %v942 = vsel %vm814, %v750, %v878
  %v943 = vsel %vm815, %v751, %v879
  %v944 = vsel %vm816, %v752, %v880
  %v945 = vsel %vm817, %v753, %v881
  %v946 = vsel %vm818, %v754, %v882
  %v947 = vsel %vm819, %v755, %v883
  %v948 = vsel %vm820, %v756, %v884
  %v949 = vsel %vm821, %v757, %v885
  %v950 = vsel %vm822, %v758, %v886
  %v951 = vsel %vm823, %v759, %v887
  %v952 = vsel %vm824, %v760, %v888
  %v953 = vsel %vm825, %v761, %v889
  %v954 = vsel %vm826, %v762, %v890
  %v955 = vsel %vm827, %v763, %v891
  %v956 = vsel %vm828, %v764, %v892
  %v957 = vsel %vm829, %v765, %v893
  %v958 = vsel %vm830, %v766, %v894
  %v959 = vsel %vm831, %v767, %v895
  %v960 = vsel %vm832, %v768, %v896
  %v961 = vsel %vm833, %v769, %v897
  %v962 = vsel %vm834, %v770, %v898
  %v963 = vsel %vm835, %v771, %v899
  %v964 = vsel %vm836, %v772, %v900
  %v965 = vsel %vm837, %v773, %v901
  %v966 = vsel %vm838, %v774, %v902
  %v967 = vsel %vm839, %v775, %v903
  %v968 = vsel %vm840, %v776, %v904
  %v969 = vsel %vm841, %v777, %v905
  %v970 = vsel %vm842, %v778, %v906
  %v971 = vsel %vm843, %v779, %v907
  %v972 = vsel %vm844, %v780, %v908
  %v973 = vsel %vm845, %v781, %v909
  %v974 = vsel %vm846, %v782, %v910
  %v975 = vsel %vm847, %v783, %v911
  %v976 = vsel %vm848, %v784, %v912
  %v977 = vsel %vm849, %v785, %v913
  %v978 = vsel %vm850, %v786, %v914
  %v979 = vsel %vm851, %v787, %v915
  %v980 = vsel %vm852, %v788, %v916
  %v981 = vsel %vm853, %v789, %v917
  %v982 = vsel %vm854, %v790, %v918
  %v983 = vsel %vm855, %v791, %v919
  %v984 = vsel %vm856, %v792, %v920
  %v985 = vsel %vm857, %v793, %v921
  %v986 = vsel %vm858, %v794, %v922
  %v987 = vsel %vm859, %v795, %v923
  %v988 = vsel %vm860, %v796, %v924
  %v989 = vsel %vm861, %v797, %v925
  %v990 = vsel %vm862, %v798, %v926
  %v991 = vsel %vm863, %v799, %v927
  %v992 = vsel %vm864, %v800, %v928
  %v993 = vsel %vm865, %v801, %v929
  %v994 = vsel %vm866, %v802, %v930
  %v995 = vsel %vm867, %v803, %v931
  %v996 = vsel %vm868, %v804, %v932
  %v997 = vsel %vm869, %v805, %v933
  %v998 = vsel %vm870, %v806, %v934
  %v999 = vsel %vm871, %v807, %v935
  %v1000 = vsel %vm872, %v808, %v936
  %v1001 = vsel %vm873, %v809, %v937
  %1002 = vst [vmem:[%s4] sm:$0xff] %v938
  %1003 = vst [vmem:[%s4 + $0x8] sm:$0xff] %v939
  %1004 = vst [vmem:[%s4 + $0x10] sm:$0xff] %v940
  %1005 = vst [vmem:[%s4 + $0x18] sm:$0xff] %v941
  %1006 = vst [vmem:[%s4 + $0x20] sm:$0xff] %v942
  %1007 = vst [vmem:[%s4 + $0x28] sm:$0xff] %v943
  %1008 = vst [vmem:[%s4 + $0x30] sm:$0xff] %v944
  %1009 = vst [vmem:[%s4 + $0x38] sm:$0xff] %v945
  %1010 = vst [vmem:[%s4 + $0x40] sm:$0xff] %v946
  %1011 = vst [vmem:[%s4 + $0x48] sm:$0xff] %v947
  %1012 = vst [vmem:[%s4 + $0x50] sm:$0xff] %v948
  %1013 = vst [vmem:[%s4 + $0x58] sm:$0xff] %v949
  %1014 = vst [vmem:[%s4 + $0x60] sm:$0xff] %v950
  %1015 = vst [vmem:[%s4 + $0x68] sm:$0xff] %v951
  %1016 = vst [vmem:[%s4 + $0x70] sm:$0xff] %v952
  %1017 = vst [vmem:[%s4 + $0x78] sm:$0xff] %v953
  %1018 = vst [vmem:[%s4 + $0x80] sm:$0xff] %v954
  %1019 = vst [vmem:[%s4 + $0x88] sm:$0xff] %v955
  %1020 = vst [vmem:[%s4 + $0x90] sm:$0xff] %v956
  %1021 = vst [vmem:[%s4 + $0x98] sm:$0xff] %v957
  %1022 = vst [vmem:[%s4 + $0xa0] sm:$0xff] %v958
  %1023 = vst [vmem:[%s4 + $0xa8] sm:$0xff] %v959
  %1024 = vst [vmem:[%s4 + $0xb0] sm:$0xff] %v960
  %1025 = vst [vmem:[%s4 + $0xb8] sm:$0xff] %v961
  %1026 = vst [vmem:[%s4 + $0xc0] sm:$0xff] %v962
  %1027 = vst [vmem:[%s4 + $0xc8] sm:$0xff] %v963
  %1028 = vst [vmem:[%s4 + $0xd0] sm:$0xff] %v964
  %1029 = vst [vmem:[%s4 + $0xd8] sm:$0xff] %v965
  %1030 = vst [vmem:[%s4 + $0xe0] sm:$0xff] %v966
  %1031 = vst [vmem:[%s4 + $0xe8] sm:$0xff] %v967
  %1032 = vst [vmem:[%s4 + $0xf0] sm:$0xff] %v968
  %1033 = vst [vmem:[%s4 + $0xf8] sm:$0xff] %v969
  %1034 = vst [vmem:[%s4 + $0x100] sm:$0xff] %v970
  %1035 = vst [vmem:[%s4 + $0x108] sm:$0xff] %v971
  %1036 = vst [vmem:[%s4 + $0x110] sm:$0xff] %v972
  %1037 = vst [vmem:[%s4 + $0x118] sm:$0xff] %v973
  %1038 = vst [vmem:[%s4 + $0x120] sm:$0xff] %v974
  %1039 = vst [vmem:[%s4 + $0x128] sm:$0xff] %v975
  %1040 = vst [vmem:[%s4 + $0x130] sm:$0xff] %v976
  %1041 = vst [vmem:[%s4 + $0x138] sm:$0xff] %v977
  %1042 = vst [vmem:[%s4 + $0x140] sm:$0xff] %v978
  %1043 = vst [vmem:[%s4 + $0x148] sm:$0xff] %v979
  %1044 = vst [vmem:[%s4 + $0x150] sm:$0xff] %v980
  %1045 = vst [vmem:[%s4 + $0x158] sm:$0xff] %v981
  %1046 = vst [vmem:[%s4 + $0x160] sm:$0xff] %v982
  %1047 = vst [vmem:[%s4 + $0x168] sm:$0xff] %v983
  %1048 = vst [vmem:[%s4 + $0x170] sm:$0xff] %v984
  %1049 = vst [vmem:[%s4 + $0x178] sm:$0xff] %v985
  %1050 = vst [vmem:[%s4 + $0x180] sm:$0xff] %v986
  %1051 = vst [vmem:[%s4 + $0x188] sm:$0xff] %v987
  %1052 = vst [vmem:[%s4 + $0x190] sm:$0xff] %v988
  %1053 = vst [vmem:[%s4 + $0x198] sm:$0xff] %v989
  %1054 = vst [vmem:[%s4 + $0x1a0] sm:$0xff] %v990
  %1055 = vst [vmem:[%s4 + $0x1a8] sm:$0xff] %v991
  %1056 = vst [vmem:[%s4 + $0x1b0] sm:$0xff] %v992
  %1057 = vst [vmem:[%s4 + $0x1b8] sm:$0xff] %v993
  %1058 = vst [vmem:[%s4 + $0x1c0] sm:$0xff] %v994
  %1059 = vst [vmem:[%s4 + $0x1c8] sm:$0xff] %v995
  %1060 = vst [vmem:[%s4 + $0x1d0] sm:$0xff] %v996
  %1061 = vst [vmem:[%s4 + $0x1d8] sm:$0xff] %v997
  %1062 = vst [vmem:[%s4 + $0x1e0] sm:$0xff] %v998
  %1063 = vst [vmem:[%s4 + $0x1e8] sm:$0xff] %v999
  %1064 = vst [vmem:[%s4 + $0x1f0] sm:$0xff] %v1000
  %1065 = vst [vmem:[%s4 + $0x1f8] sm:$0xff] %v1001
  // Predicated region
  $region18: #{generator_forward.9} parent=0 // pred_check
    _
  $region19: #{generator_forward.9} parent=0 // pred_check_branch
    %1067 = sbr.rel (0) target = $region21
  $region20: #{generator_forward.9} parent=0 // pred_region
    _
  $region21: #{generator_forward.9} parent=0 // pred_fallthru
    _
  // Predicated region
  $region22: #{generator_forward.9} parent=0 // pred_check
    _
  $region23: #{generator_forward.9} parent=0 // pred_check_branch
    %1069 = sbr.rel (0) target = $region25
  $region24: #{generator_forward.9} parent=0 // pred_region
    _
  $region25: #{generator_forward.9} parent=0 // pred_fallthru
    _

// kernel: generator_forward.10
$region0: #{generator_forward.10}
  #allocation0 [shape = 'u32[]', space=smem, size = 0x4, offset = 0x4, fixed_abs, tag = 'smem constant byte address 0x4 - core index']
  #allocation1 [shape = 'u32[144,128]{1,0:T(1,128)}', space=vmem, size = 0x12000, scoped, tag = 'internal scratch']
  %s0 = inlined_call_operand.vmem [shape: bf16[512,72], index: 0, kind: input, shape index: {}]
  %s1 = inlined_call_operand.vmem [shape: bf16[72,128], index: 1, kind: input, shape index: {}]
  %s2 = inlined_call_operand.vmem [shape: f32[1,128], index: 2, kind: input, shape index: {}]
  %s3 = inlined_call_operand.vmem [shape: f32[1,128], index: 3, kind: input, shape index: {}]
  %s4 = inlined_call_operand.vmem [shape: f32[512,128], index: 4, kind: input, shape index: {}]
  %s5 = inlined_call_operand.vmem [shape: f32[512,128], index: 5, kind: output, shape index: {}]
  %s6 = sld [smem:[#allocation0]]
  $region30: #{generator_forward.10} parent=0
    _
  %s8 = ssub.s32 1, %s6
  %s9 = scalar_select 0, %s8, %s6
  // Predicated region
  $region2: #{generator_forward.10} parent=0 // pred_check
    _
  $region3: #{generator_forward.10} parent=0 // pred_check_branch
    %11 = sbr.rel (0) target = $region5
  $region4: #{generator_forward.10} parent=0 // pred_region
    _
  $region5: #{generator_forward.10} parent=0 // pred_fallthru
    _
  // Predicated region
  $region6: #{generator_forward.10} parent=0 // pred_check
    _
  $region7: #{generator_forward.10} parent=0 // pred_check_branch
    %13 = sbr.rel (0) target = $region9
  $region8: #{generator_forward.10} parent=0 // pred_region
    _
  $region9: #{generator_forward.10} parent=0 // pred_fallthru
    _
  // Predicated region
  $region10: #{generator_forward.10} parent=0 // pred_check
    _
  $region11: #{generator_forward.10} parent=0 // pred_check_branch
    %15 = sbr.rel (0) target = $region13
  $region12: #{generator_forward.10} parent=0 // pred_region
    _
  $region13: #{generator_forward.10} parent=0 // pred_fallthru
    _
  // Predicated region
  $region14: #{generator_forward.10} parent=0 // pred_check
    _
  $region15: #{generator_forward.10} parent=0 // pred_check_branch
    %17 = sbr.rel (0) target = $region17
  $region16: #{generator_forward.10} parent=0 // pred_region
    _
  $region17: #{generator_forward.10} parent=0 // pred_fallthru
    _
  // Predicated region
  $region18: #{generator_forward.10} parent=0 // pred_check
    _
  $region19: #{generator_forward.10} parent=0 // pred_check_branch
    %19 = sbr.rel (0) target = $region21
  $region20: #{generator_forward.10} parent=0 // pred_region
    _
  $region21: #{generator_forward.10} parent=0 // pred_fallthru
    _
  %v21 = vld [vmem:[%s0] sm:$0xf]
  %v22 = vld [vmem:[%s0 + $0x4] sm:$0xf]
  %v23 = vld [vmem:[%s0 + $0x8] sm:$0xf]
  %v24 = vld [vmem:[%s0 + $0xc] sm:$0xf]
  %v25 = vld [vmem:[%s0 + $0x10] sm:$0xf]
  %v26 = vld [vmem:[%s0 + $0x14] sm:$0xf]
  %v27 = vld [vmem:[%s0 + $0x18] sm:$0xf]
  %v28 = vld [vmem:[%s0 + $0x1c] sm:$0xf]
  %v29 = vld [vmem:[%s0 + $0x20] sm:$0xf]
  %v30 = vld [vmem:[%s0 + $0x24] sm:$0xf]
  %v31 = vld [vmem:[%s0 + $0x28] sm:$0xf]
  %v32 = vld [vmem:[%s0 + $0x2c] sm:$0xf]
  %v33 = vld [vmem:[%s0 + $0x30] sm:$0xf]
  %v34 = vld [vmem:[%s0 + $0x34] sm:$0xf]
  %v35 = vld [vmem:[%s0 + $0x38] sm:$0xf]
  %v36 = vld [vmem:[%s0 + $0x3c] sm:$0xf]
  %v37 = vld [vmem:[%s0 + $0x40] sm:$0xf]
  %v38 = vld [vmem:[%s0 + $0x44] sm:$0xf]
  %v39 = vld [vmem:[%s0 + $0x48] sm:$0xf]
  %v40 = vld [vmem:[%s0 + $0x4c] sm:$0xf]
  %v41 = vld [vmem:[%s0 + $0x50] sm:$0xf]
  %v42 = vld [vmem:[%s0 + $0x54] sm:$0xf]
  %v43 = vld [vmem:[%s0 + $0x58] sm:$0xf]
  %v44 = vld [vmem:[%s0 + $0x5c] sm:$0xf]
  %v45 = vld [vmem:[%s0 + $0x60] sm:$0xf]
  %v46 = vld [vmem:[%s0 + $0x64] sm:$0xf]
  %v47 = vld [vmem:[%s0 + $0x68] sm:$0xf]
  %v48 = vld [vmem:[%s0 + $0x6c] sm:$0xf]
  %v49 = vld [vmem:[%s0 + $0x70] sm:$0xf]
  %v50 = vld [vmem:[%s0 + $0x74] sm:$0xf]
  %v51 = vld [vmem:[%s0 + $0x78] sm:$0xf]
  %v52 = vld [vmem:[%s0 + $0x7c] sm:$0xf]
  %v53 = vld [vmem:[%s0 + $0x80] sm:$0xf]
  %v54 = vld [vmem:[%s0 + $0x84] sm:$0xf]
  %v55 = vld [vmem:[%s0 + $0x88] sm:$0xf]
  %v56 = vld [vmem:[%s0 + $0x8c] sm:$0xf]
  %v57 = vld [vmem:[%s0 + $0x90] sm:$0xf]
  %v58 = vld [vmem:[%s0 + $0x94] sm:$0xf]
  %v59 = vld [vmem:[%s0 + $0x98] sm:$0xf]
  %v60 = vld [vmem:[%s0 + $0x9c] sm:$0xf]
  %v61 = vld [vmem:[%s0 + $0xa0] sm:$0xf]
  %v62 = vld [vmem:[%s0 + $0xa4] sm:$0xf]
  %v63 = vld [vmem:[%s0 + $0xa8] sm:$0xf]
  %v64 = vld [vmem:[%s0 + $0xac] sm:$0xf]
  %v65 = vld [vmem:[%s0 + $0xb0] sm:$0xf]
  %v66 = vld [vmem:[%s0 + $0xb4] sm:$0xf]
  %v67 = vld [vmem:[%s0 + $0xb8] sm:$0xf]
  %v68 = vld [vmem:[%s0 + $0xbc] sm:$0xf]
  %v69 = vld [vmem:[%s0 + $0xc0] sm:$0xf]
  %v70 = vld [vmem:[%s0 + $0xc4] sm:$0xf]
  %v71 = vld [vmem:[%s0 + $0xc8] sm:$0xf]
  %v72 = vld [vmem:[%s0 + $0xcc] sm:$0xf]
  %v73 = vld [vmem:[%s0 + $0xd0] sm:$0xf]
  %v74 = vld [vmem:[%s0 + $0xd4] sm:$0xf]
  %v75 = vld [vmem:[%s0 + $0xd8] sm:$0xf]
  %v76 = vld [vmem:[%s0 + $0xdc] sm:$0xf]
  %v77 = vld [vmem:[%s0 + $0xe0] sm:$0xf]
  %v78 = vld [vmem:[%s0 + $0xe4] sm:$0xf]
  %v79 = vld [vmem:[%s0 + $0xe8] sm:$0xf]
  %v80 = vld [vmem:[%s0 + $0xec] sm:$0xf]
  %v81 = vld [vmem:[%s0 + $0xf0] sm:$0xf]
  %v82 = vld [vmem:[%s0 + $0xf4] sm:$0xf]
  %v83 = vld [vmem:[%s0 + $0xf8] sm:$0xf]
  %v84 = vld [vmem:[%s0 + $0xfc] sm:$0xf]
  %v85 = vld [vmem:[%s1] sm:$0xf]
  %v86 = vld [vmem:[%s1 + $0x4] sm:$0xf]
  %v87 = vld [vmem:[%s1 + $0x8] sm:$0xf]
  %v88 = vld [vmem:[%s1 + $0xc] sm:$0xf]
  %v89 = vld [vmem:[%s1 + $0x10] sm:$0xf]
  %v90 = vld [vmem:[%s1 + $0x14] sm:$0xf]
  %v91 = vld [vmem:[%s1 + $0x18] sm:$0xf]
  %v92 = vld [vmem:[%s1 + $0x1c] sm:$0xf]
  %v93 = vld [vmem:[%s1 + $0x20] sm:$0xf]
  %v158 = vunpack.c.l.b16 %v21
  %v159 = vunpack.c.l.b16 %v22
  %v160 = vunpack.c.l.b16 %v23
  %v161 = vunpack.c.l.b16 %v24
  %v162 = vunpack.c.l.b16 %v25
  %v163 = vunpack.c.l.b16 %v26
  %v164 = vunpack.c.l.b16 %v27
  %v165 = vunpack.c.l.b16 %v28
  %v166 = vunpack.c.l.b16 %v29
  %v167 = vunpack.c.l.b16 %v30
  %v168 = vunpack.c.l.b16 %v31
  %v169 = vunpack.c.l.b16 %v32
  %v170 = vunpack.c.l.b16 %v33
  %v171 = vunpack.c.l.b16 %v34
  %v172 = vunpack.c.l.b16 %v35
  %v173 = vunpack.c.l.b16 %v36
  %v174 = vunpack.c.l.b16 %v37
  %v175 = vunpack.c.l.b16 %v38
  %v176 = vunpack.c.l.b16 %v39
  %v177 = vunpack.c.l.b16 %v40
  %v178 = vunpack.c.l.b16 %v41
  %v179 = vunpack.c.l.b16 %v42
  %v180 = vunpack.c.l.b16 %v43
  %v181 = vunpack.c.l.b16 %v44
  %v182 = vunpack.c.l.b16 %v45
  %v183 = vunpack.c.l.b16 %v46
  %v184 = vunpack.c.l.b16 %v47
  %v185 = vunpack.c.l.b16 %v48
  %v186 = vunpack.c.l.b16 %v49
  %v187 = vunpack.c.l.b16 %v50
  %v188 = vunpack.c.l.b16 %v51
  %v189 = vunpack.c.l.b16 %v52
  %v190 = vunpack.c.l.b16 %v53
  %v191 = vunpack.c.l.b16 %v54
  %v192 = vunpack.c.l.b16 %v55
  %v193 = vunpack.c.l.b16 %v56
  %v194 = vunpack.c.l.b16 %v57
  %v195 = vunpack.c.l.b16 %v58
  %v196 = vunpack.c.l.b16 %v59
  %v197 = vunpack.c.l.b16 %v60
  %v198 = vunpack.c.l.b16 %v61
  %v199 = vunpack.c.l.b16 %v62
  %v200 = vunpack.c.l.b16 %v63
  %v201 = vunpack.c.l.b16 %v64
  %v202 = vunpack.c.l.b16 %v65
  %v203 = vunpack.c.l.b16 %v66
  %v204 = vunpack.c.l.b16 %v67
  %v205 = vunpack.c.l.b16 %v68
  %v206 = vunpack.c.l.b16 %v69
  %v207 = vunpack.c.l.b16 %v70
  %v208 = vunpack.c.l.b16 %v71
  %v209 = vunpack.c.l.b16 %v72
  %v210 = vunpack.c.l.b16 %v73
  %v211 = vunpack.c.l.b16 %v74
  %v212 = vunpack.c.l.b16 %v75
  %v213 = vunpack.c.l.b16 %v76
  %v214 = vunpack.c.l.b16 %v77
  %v215 = vunpack.c.l.b16 %v78
  %v216 = vunpack.c.l.b16 %v79
  %v217 = vunpack.c.l.b16 %v80
  %v218 = vunpack.c.l.b16 %v81
  %v219 = vunpack.c.l.b16 %v82
  %v220 = vunpack.c.l.b16 %v83
  %v221 = vunpack.c.l.b16 %v84
  %v222 = vpack.c.b16 %v159, %v158
  %v223 = vpack.c.b16 %v161, %v160
  %v224 = vpack.c.b16 %v163, %v162
  %v225 = vpack.c.b16 %v165, %v164
  %v226 = vpack.c.b16 %v167, %v166
  %v227 = vpack.c.b16 %v169, %v168
  %v228 = vpack.c.b16 %v171, %v170
  %v229 = vpack.c.b16 %v173, %v172
  %v230 = vpack.c.b16 %v175, %v174
  %v231 = vpack.c.b16 %v177, %v176
  %v232 = vpack.c.b16 %v179, %v178
  %v233 = vpack.c.b16 %v181, %v180
  %v234 = vpack.c.b16 %v183, %v182
  %v235 = vpack.c.b16 %v185, %v184
  %v236 = vpack.c.b16 %v187, %v186
  %v237 = vpack.c.b16 %v189, %v188
  %v238 = vpack.c.b16 %v191, %v190
  %v239 = vpack.c.b16 %v193, %v192
  %v240 = vpack.c.b16 %v195, %v194
  %v241 = vpack.c.b16 %v197, %v196
  %v242 = vpack.c.b16 %v199, %v198
  %v243 = vpack.c.b16 %v201, %v200
  %v244 = vpack.c.b16 %v203, %v202
  %v245 = vpack.c.b16 %v205, %v204
  %v246 = vpack.c.b16 %v207, %v206
  %v247 = vpack.c.b16 %v209, %v208
  %v248 = vpack.c.b16 %v211, %v210
  %v249 = vpack.c.b16 %v213, %v212
  %v250 = vpack.c.b16 %v215, %v214
  %v251 = vpack.c.b16 %v217, %v216
  %v252 = vpack.c.b16 %v219, %v218
  %v253 = vpack.c.b16 %v221, %v220
  %v263 = vunpack.c.l.b16 %v85
  %v264 = vunpack.c.l.b16 %v86
  %v265 = vunpack.c.l.b16 %v87
  %v266 = vunpack.c.l.b16 %v88
  %v267 = vunpack.c.l.b16 %v89
  %v268 = vunpack.c.l.b16 %v90
  %v269 = vunpack.c.l.b16 %v91
  %v270 = vunpack.c.l.b16 %v92
  %v271 = vunpack.c.l.b16 %v93
  %v272 = vpack.c.b16 %v264, %v263
  %v273 = vpack.c.b16 %v266, %v265
  %v274 = vpack.c.b16 %v268, %v267
  %v275 = vpack.c.b16 %v270, %v269
  %v276 = vpack.c.b16 %v271, %v271
  %vm281 = vcmask 588800
  %v283 = vsel %vm281, %v222, 0
  %v286 = vsel %vm281, %v223, 0
  %v289 = vsel %vm281, %v224, 0
  %v292 = vsel %vm281, %v225, 0
  %v295 = vsel %vm281, %v226, 0
  %v298 = vsel %vm281, %v227, 0
  %v301 = vsel %vm281, %v228, 0
  %v304 = vsel %vm281, %v229, 0
  %v307 = vsel %vm281, %v230, 0
  %v310 = vsel %vm281, %v231, 0
  %v313 = vsel %vm281, %v232, 0
  %v316 = vsel %vm281, %v233, 0
  %v319 = vsel %vm281, %v234, 0
  %v322 = vsel %vm281, %v235, 0
  %v325 = vsel %vm281, %v236, 0
  %v328 = vsel %vm281, %v237, 0
  %v331 = vsel %vm281, %v238, 0
  %v334 = vsel %vm281, %v239, 0
  %v337 = vsel %vm281, %v240, 0
  %v340 = vsel %vm281, %v241, 0
  %v343 = vsel %vm281, %v242, 0
  %v346 = vsel %vm281, %v243, 0
  %v349 = vsel %vm281, %v244, 0
  %v352 = vsel %vm281, %v245, 0
  %v355 = vsel %vm281, %v246, 0
  %v358 = vsel %vm281, %v247, 0
  %v361 = vsel %vm281, %v248, 0
  %v364 = vsel %vm281, %v249, 0
  %v367 = vsel %vm281, %v250, 0
  %v370 = vsel %vm281, %v251, 0
  %v373 = vsel %vm281, %v252, 0
  %v376 = vsel %vm281, %v253, 0
  %vm378 = vcmask 1043456
  %v380 = vsel %vm378, %v276, 0
  %382 = vmatprep.subr.bf16.mxu0 0
  %383 = vmatpush1.bf16.msra.mxu0 %v272
  %384 = vmatprep.subr.bf16.mxu0 0
  %385 = vmatpush1.bf16.msra.mxu0 %v273
  %386 = vmatprep.subr.bf16.mxu0 0
  %387 = vmatpush1.bf16.msra.mxu0 %v274
  %388 = vmatprep.subr.bf16.mxu0 0
  %389 = vmatpush1.bf16.msra.mxu0 %v275
  %390 = vmatprep.subr.bf16.mxu0 0
  %391 = vmatpush1.bf16.msra.mxu0 %v380
  %392 = vmatprep.subr.bf16.mxu0 0
  %393 = vmatpush1.bf16.msra.mxu0 0
  %394 = vmatprep.subr.bf16.mxu0 0
  %395 = vmatpush1.bf16.msra.mxu0 0
  %396 = vmatprep.subr.bf16.mxu0 0
  %397 = vmatpush1.bf16.msra.mxu0 0
  %398 = vmatprep.subr.bf16.mxu0 0
  %399 = vmatpush1.bf16.msra.mxu0 0
  %400 = vmatprep.subr.bf16.mxu0 0
  %401 = vmatpush1.bf16.msra.mxu0 0
  %402 = vmatprep.subr.bf16.mxu0 0
  %403 = vmatpush1.bf16.msra.mxu0 0
  %404 = vmatprep.subr.bf16.mxu0 0
  %405 = vmatpush1.bf16.msra.mxu0 0
  %406 = vmatprep.subr.bf16.mxu0 0
  %407 = vmatpush1.bf16.msra.mxu0 0
  %408 = vmatprep.subr.bf16.mxu0 0
  %409 = vmatpush1.bf16.msra.mxu0 0
  %410 = vmatprep.subr.bf16.mxu0 0
  %411 = vmatpush1.bf16.msra.mxu0 0
  %412 = vmatprep.subr.bf16.mxu0 0
  %413 = vmatpush1.bf16.msra.mxu0 0
  %414 = vmatprep.mubr.bf16.mxu0 0
  %415 = vmatmul.mubr.bf16.gmra.mrb[0].mxu0 %v283
  %v416 = vpop.f32.mrb[0].mxu0
  %v417 = vadd.f32 0.0, %v416
  %v418 = vpop.f32.mrb[0].mxu0
  %v419 = vpop.f32.mrb[0].mxu0
  %v420 = vadd.f32 0.0, %v419
  %v421 = vpop.f32.mrb[0].mxu0
  %422 = vmatprep.mubr.bf16.mxu0 0
  %423 = vmatmul.mubr.bf16.gmra.mrb[0].mxu0 %v286
  %v424 = vpop.f32.mrb[0].mxu0
  %v425 = vadd.f32 0.0, %v424
  %v426 = vpop.f32.mrb[0].mxu0
  %v427 = vpop.f32.mrb[0].mxu0
  %v428 = vadd.f32 0.0, %v427
  %v429 = vpop.f32.mrb[0].mxu0
  %430 = vmatprep.mubr.bf16.mxu0 0
  %431 = vmatmul.mubr.bf16.gmra.mrb[0].mxu0 %v289
  %v432 = vpop.f32.mrb[0].mxu0
  %v433 = vadd.f32 0.0, %v432
  %v434 = vpop.f32.mrb[0].mxu0
  %v435 = vpop.f32.mrb[0].mxu0
  %v436 = vadd.f32 0.0, %v435
  %v437 = vpop.f32.mrb[0].mxu0
  %438 = vmatprep.mubr.bf16.mxu0 0
  %439 = vmatmul.mubr.bf16.gmra.mrb[0].mxu0 %v292
  %v440 = vpop.f32.mrb[0].mxu0
  %v441 = vadd.f32 0.0, %v440
  %v442 = vpop.f32.mrb[0].mxu0
  %v443 = vpop.f32.mrb[0].mxu0
  %v444 = vadd.f32 0.0, %v443
  %v445 = vpop.f32.mrb[0].mxu0
  %446 = vmatprep.mubr.bf16.mxu0 0
  %447 = vmatmul.mubr.bf16.gmra.mrb[0].mxu0 %v295
  %v448 = vpop.f32.mrb[0].mxu0
  %v449 = vadd.f32 0.0, %v448
  %v450 = vpop.f32.mrb[0].mxu0
  %v451 = vpop.f32.mrb[0].mxu0
  %v452 = vadd.f32 0.0, %v451
  %v453 = vpop.f32.mrb[0].mxu0
  %454 = vmatprep.mubr.bf16.mxu0 0
  %455 = vmatmul.mubr.bf16.gmra.mrb[0].mxu0 %v298
  %v456 = vpop.f32.mrb[0].mxu0
  %v457 = vadd.f32 0.0, %v456
  %v458 = vpop.f32.mrb[0].mxu0
  %v459 = vpop.f32.mrb[0].mxu0
  %v460 = vadd.f32 0.0, %v459
  %v461 = vpop.f32.mrb[0].mxu0
  %462 = vmatprep.mubr.bf16.mxu0 0
  %463 = vmatmul.mubr.bf16.gmra.mrb[0].mxu0 %v301
  %v464 = vpop.f32.mrb[0].mxu0
  %v465 = vadd.f32 0.0, %v464
  %v466 = vpop.f32.mrb[0].mxu0
  %v467 = vpop.f32.mrb[0].mxu0
  %v468 = vadd.f32 0.0, %v467
  %v469 = vpop.f32.mrb[0].mxu0
  %470 = vmatprep.mubr.bf16.mxu0 0
  %471 = vmatmul.mubr.bf16.gmra.mrb[0].mxu0 %v304
  %v472 = vpop.f32.mrb[0].mxu0
  %v473 = vadd.f32 0.0, %v472
  %v474 = vpop.f32.mrb[0].mxu0
  %v475 = vpop.f32.mrb[0].mxu0
  %v476 = vadd.f32 0.0, %v475
  %v477 = vpop.f32.mrb[0].mxu0
  %478 = vmatprep.mubr.bf16.mxu0 0
  %479 = vmatmul.mubr.bf16.gmra.mrb[0].mxu0 %v307
  %v480 = vpop.f32.mrb[0].mxu0
  %v481 = vadd.f32 0.0, %v480
  %v482 = vpop.f32.mrb[0].mxu0
  %v483 = vpop.f32.mrb[0].mxu0
  %v484 = vadd.f32 0.0, %v483
  %v485 = vpop.f32.mrb[0].mxu0
  %486 = vmatprep.mubr.bf16.mxu0 0
  %487 = vmatmul.mubr.bf16.gmra.mrb[0].mxu0 %v310
  %v488 = vpop.f32.mrb[0].mxu0
  %v489 = vadd.f32 0.0, %v488
  %v490 = vpop.f32.mrb[0].mxu0
  %v491 = vpop.f32.mrb[0].mxu0
  %v492 = vadd.f32 0.0, %v491
  %v493 = vpop.f32.mrb[0].mxu0
  %494 = vmatprep.mubr.bf16.mxu0 0
  %495 = vmatmul.mubr.bf16.gmra.mrb[0].mxu0 %v313
  %v496 = vpop.f32.mrb[0].mxu0
  %v497 = vadd.f32 0.0, %v496
  %v498 = vpop.f32.mrb[0].mxu0
  %v499 = vpop.f32.mrb[0].mxu0
  %v500 = vadd.f32 0.0, %v499
  %v501 = vpop.f32.mrb[0].mxu0
  %502 = vmatprep.mubr.bf16.mxu0 0
  %503 = vmatmul.mubr.bf16.gmra.mrb[0].mxu0 %v316
  %v504 = vpop.f32.mrb[0].mxu0
  %v505 = vadd.f32 0.0, %v504
  %v506 = vpop.f32.mrb[0].mxu0
  %v507 = vpop.f32.mrb[0].mxu0
  %v508 = vadd.f32 0.0, %v507
  %v509 = vpop.f32.mrb[0].mxu0
  %510 = vmatprep.mubr.bf16.mxu0 0
  %511 = vmatmul.mubr.bf16.gmra.mrb[0].mxu0 %v319
  %v512 = vpop.f32.mrb[0].mxu0
  %v513 = vadd.f32 0.0, %v512
  %v514 = vpop.f32.mrb[0].mxu0
  %v515 = vpop.f32.mrb[0].mxu0
  %v516 = vadd.f32 0.0, %v515
  %v517 = vpop.f32.mrb[0].mxu0
  %518 = vmatprep.mubr.bf16.mxu0 0
  %519 = vmatmul.mubr.bf16.gmra.mrb[0].mxu0 %v322
  %v520 = vpop.f32.mrb[0].mxu0
  %v521 = vadd.f32 0.0, %v520
  %v522 = vpop.f32.mrb[0].mxu0
  %v523 = vpop.f32.mrb[0].mxu0
  %v524 = vadd.f32 0.0, %v523
  %v525 = vpop.f32.mrb[0].mxu0
  %526 = vmatprep.mubr.bf16.mxu0 0
  %527 = vmatmul.mubr.bf16.gmra.mrb[0].mxu0 %v325
  %v528 = vpop.f32.mrb[0].mxu0
  %v529 = vadd.f32 0.0, %v528
  %v530 = vpop.f32.mrb[0].mxu0
  %v531 = vpop.f32.mrb[0].mxu0
  %v532 = vadd.f32 0.0, %v531
  %v533 = vpop.f32.mrb[0].mxu0
  %534 = vmatprep.mubr.bf16.mxu0 0
  %535 = vmatmul.mubr.bf16.gmra.mrb[0].mxu0 %v328
  %v536 = vpop.f32.mrb[0].mxu0
  %v537 = vadd.f32 0.0, %v536
  %v538 = vpop.f32.mrb[0].mxu0
  %v539 = vpop.f32.mrb[0].mxu0
  %v540 = vadd.f32 0.0, %v539
  %v541 = vpop.f32.mrb[0].mxu0
  %542 = vmatprep.mubr.bf16.mxu0 0
  %543 = vmatmul.mubr.bf16.gmra.mrb[0].mxu0 %v331
  %v544 = vpop.f32.mrb[0].mxu0
  %v545 = vadd.f32 0.0, %v544
  %v546 = vpop.f32.mrb[0].mxu0
  %v547 = vpop.f32.mrb[0].mxu0
  %v548 = vadd.f32 0.0, %v547
  %v549 = vpop.f32.mrb[0].mxu0
  %550 = vmatprep.mubr.bf16.mxu0 0
  %551 = vmatmul.mubr.bf16.gmra.mrb[0].mxu0 %v334
  %v552 = vpop.f32.mrb[0].mxu0
  %v553 = vadd.f32 0.0, %v552
  %v554 = vpop.f32.mrb[0].mxu0
  %v555 = vpop.f32.mrb[0].mxu0
  %v556 = vadd.f32 0.0, %v555
  %v557 = vpop.f32.mrb[0].mxu0
  %558 = vmatprep.mubr.bf16.mxu0 0
  %559 = vmatmul.mubr.bf16.gmra.mrb[0].mxu0 %v337
  %v560 = vpop.f32.mrb[0].mxu0
  %v561 = vadd.f32 0.0, %v560
  %v562 = vpop.f32.mrb[0].mxu0
  %v563 = vpop.f32.mrb[0].mxu0
  %v564 = vadd.f32 0.0, %v563
  %v565 = vpop.f32.mrb[0].mxu0
  %566 = vmatprep.mubr.bf16.mxu0 0
  %567 = vmatmul.mubr.bf16.gmra.mrb[0].mxu0 %v340
  %v568 = vpop.f32.mrb[0].mxu0
  %v569 = vadd.f32 0.0, %v568
  %v570 = vpop.f32.mrb[0].mxu0
  %v571 = vpop.f32.mrb[0].mxu0
  %v572 = vadd.f32 0.0, %v571
  %v573 = vpop.f32.mrb[0].mxu0
  %574 = vmatprep.mubr.bf16.mxu0 0
  %575 = vmatmul.mubr.bf16.gmra.mrb[0].mxu0 %v343
  %v576 = vpop.f32.mrb[0].mxu0
  %v577 = vadd.f32 0.0, %v576
  %v578 = vpop.f32.mrb[0].mxu0
  %v579 = vpop.f32.mrb[0].mxu0
  %v580 = vadd.f32 0.0, %v579
  %v581 = vpop.f32.mrb[0].mxu0
  %582 = vmatprep.mubr.bf16.mxu0 0
  %583 = vmatmul.mubr.bf16.gmra.mrb[0].mxu0 %v346
  %v584 = vpop.f32.mrb[0].mxu0
  %v585 = vadd.f32 0.0, %v584
  %v586 = vpop.f32.mrb[0].mxu0
  %v587 = vpop.f32.mrb[0].mxu0
  %v588 = vadd.f32 0.0, %v587
  %v589 = vpop.f32.mrb[0].mxu0
  %590 = vmatprep.mubr.bf16.mxu0 0
  %591 = vmatmul.mubr.bf16.gmra.mrb[0].mxu0 %v349
  %v592 = vpop.f32.mrb[0].mxu0
  %v593 = vadd.f32 0.0, %v592
  %v594 = vpop.f32.mrb[0].mxu0
  %v595 = vpop.f32.mrb[0].mxu0
  %v596 = vadd.f32 0.0, %v595
  %v597 = vpop.f32.mrb[0].mxu0
  %598 = vmatprep.mubr.bf16.mxu0 0
  %599 = vmatmul.mubr.bf16.gmra.mrb[0].mxu0 %v352
  %v600 = vpop.f32.mrb[0].mxu0
  %v601 = vadd.f32 0.0, %v600
  %v602 = vpop.f32.mrb[0].mxu0
  %v603 = vpop.f32.mrb[0].mxu0
  %v604 = vadd.f32 0.0, %v603
  %v605 = vpop.f32.mrb[0].mxu0
  %606 = vmatprep.mubr.bf16.mxu0 0
  %607 = vmatmul.mubr.bf16.gmra.mrb[0].mxu0 %v355
  %v608 = vpop.f32.mrb[0].mxu0
  %v609 = vadd.f32 0.0, %v608
  %v610 = vpop.f32.mrb[0].mxu0
  %v611 = vpop.f32.mrb[0].mxu0
  %v612 = vadd.f32 0.0, %v611
  %v613 = vpop.f32.mrb[0].mxu0
  %614 = vmatprep.mubr.bf16.mxu0 0
  %615 = vmatmul.mubr.bf16.gmra.mrb[0].mxu0 %v358
  %v616 = vpop.f32.mrb[0].mxu0
  %v617 = vadd.f32 0.0, %v616
  %v618 = vpop.f32.mrb[0].mxu0
  %v619 = vpop.f32.mrb[0].mxu0
  %v620 = vadd.f32 0.0, %v619
  %v621 = vpop.f32.mrb[0].mxu0
  %622 = vmatprep.mubr.bf16.mxu0 0
  %623 = vmatmul.mubr.bf16.gmra.mrb[0].mxu0 %v361
  %v624 = vpop.f32.mrb[0].mxu0
  %v625 = vadd.f32 0.0, %v624
  %v626 = vpop.f32.mrb[0].mxu0
  %v627 = vpop.f32.mrb[0].mxu0
  %v628 = vadd.f32 0.0, %v627
  %v629 = vpop.f32.mrb[0].mxu0
  %630 = vmatprep.mubr.bf16.mxu0 0
  %631 = vmatmul.mubr.bf16.gmra.mrb[0].mxu0 %v364
  %v632 = vpop.f32.mrb[0].mxu0
  %v633 = vadd.f32 0.0, %v632
  %v634 = vpop.f32.mrb[0].mxu0
  %v635 = vpop.f32.mrb[0].mxu0
  %v636 = vadd.f32 0.0, %v635
  %v637 = vpop.f32.mrb[0].mxu0
  %638 = vmatprep.mubr.bf16.mxu0 0
  %639 = vmatmul.mubr.bf16.gmra.mrb[0].mxu0 %v367
  %v640 = vpop.f32.mrb[0].mxu0
  %v641 = vadd.f32 0.0, %v640
  %v642 = vpop.f32.mrb[0].mxu0
  %v643 = vpop.f32.mrb[0].mxu0
  %v644 = vadd.f32 0.0, %v643
  %v645 = vpop.f32.mrb[0].mxu0
  %646 = vmatprep.mubr.bf16.mxu0 0
  %647 = vmatmul.mubr.bf16.gmra.mrb[0].mxu0 %v370
  %v648 = vpop.f32.mrb[0].mxu0
  %v649 = vadd.f32 0.0, %v648
  %v650 = vpop.f32.mrb[0].mxu0
  %v651 = vpop.f32.mrb[0].mxu0
  %v652 = vadd.f32 0.0, %v651
  %v653 = vpop.f32.mrb[0].mxu0
  %654 = vmatprep.mubr.bf16.mxu0 0
  %655 = vmatmul.mubr.bf16.gmra.mrb[0].mxu0 %v373
  %v656 = vpop.f32.mrb[0].mxu0
  %v657 = vadd.f32 0.0, %v656
  %v658 = vpop.f32.mrb[0].mxu0
  %v659 = vpop.f32.mrb[0].mxu0
  %v660 = vadd.f32 0.0, %v659
  %v661 = vpop.f32.mrb[0].mxu0
  %662 = vmatprep.mubr.bf16.mxu0 0
  %663 = vmatmul.mubr.bf16.gmra.mrb[0].mxu0 %v376
  %v664 = vpop.f32.mrb[0].mxu0
  %v665 = vadd.f32 0.0, %v664
  %v666 = vpop.f32.mrb[0].mxu0
  %v667 = vpop.f32.mrb[0].mxu0
  %v668 = vadd.f32 0.0, %v667
  %v669 = vpop.f32.mrb[0].mxu0
  %670 = vdwg.mxu0
  %v671 = vld [vmem:[%s2] sm:$0x1]
  %v672 = vld [vmem:[%s3] sm:$0x1]
  %v674 = vlaneseq
  %v675 = vshrl.u32 %v674, 7
  %v676 = vsub.s32 0, %v675
  %v677 = vrot.slane %v671, %v676
  %v679 = vmul.f32 %v417, %v677
  %v680 = vmul.f32 %v420, %v677
  %v681 = vmul.f32 %v425, %v677
  %v682 = vmul.f32 %v428, %v677
  %v683 = vmul.f32 %v433, %v677
  %v684 = vmul.f32 %v436, %v677
  %v685 = vmul.f32 %v441, %v677
  %v686 = vmul.f32 %v444, %v677
  %v687 = vmul.f32 %v449, %v677
  %v688 = vmul.f32 %v452, %v677
  %v689 = vmul.f32 %v457, %v677
  %v690 = vmul.f32 %v460, %v677
  %v691 = vmul.f32 %v465, %v677
  %v692 = vmul.f32 %v468, %v677
  %v693 = vmul.f32 %v473, %v677
  %v694 = vmul.f32 %v476, %v677
  %v695 = vmul.f32 %v481, %v677
  %v696 = vmul.f32 %v484, %v677
  %v697 = vmul.f32 %v489, %v677
  %v698 = vmul.f32 %v492, %v677
  %v699 = vmul.f32 %v497, %v677
  %v700 = vmul.f32 %v500, %v677
  %v701 = vmul.f32 %v505, %v677
  %v702 = vmul.f32 %v508, %v677
  %v703 = vmul.f32 %v513, %v677
  %v704 = vmul.f32 %v516, %v677
  %v705 = vmul.f32 %v521, %v677
  %v706 = vmul.f32 %v524, %v677
  %v707 = vmul.f32 %v529, %v677
  %v708 = vmul.f32 %v532, %v677
  %v709 = vmul.f32 %v537, %v677
  %v710 = vmul.f32 %v540, %v677
  %v711 = vmul.f32 %v545, %v677
  %v712 = vmul.f32 %v548, %v677
  %v713 = vmul.f32 %v553, %v677
  %v714 = vmul.f32 %v556, %v677
  %v715 = vmul.f32 %v561, %v677
  %v716 = vmul.f32 %v564, %v677
  %v717 = vmul.f32 %v569, %v677
  %v718 = vmul.f32 %v572, %v677
  %v719 = vmul.f32 %v577, %v677
  %v720 = vmul.f32 %v580, %v677
  %v721 = vmul.f32 %v585, %v677
  %v722 = vmul.f32 %v588, %v677
  %v723 = vmul.f32 %v593, %v677
  %v724 = vmul.f32 %v596, %v677
  %v725 = vmul.f32 %v601, %v677
  %v726 = vmul.f32 %v604, %v677
  %v727 = vmul.f32 %v609, %v677
  %v728 = vmul.f32 %v612, %v677
  %v729 = vmul.f32 %v617, %v677
  %v730 = vmul.f32 %v620, %v677
  %v731 = vmul.f32 %v625, %v677
  %v732 = vmul.f32 %v628, %v677
  %v733 = vmul.f32 %v633, %v677
  %v734 = vmul.f32 %v636, %v677
  %v735 = vmul.f32 %v641, %v677
  %v736 = vmul.f32 %v644, %v677
  %v737 = vmul.f32 %v649, %v677
  %v738 = vmul.f32 %v652, %v677
  %v739 = vmul.f32 %v657, %v677
  %v740 = vmul.f32 %v660, %v677
  %v741 = vmul.f32 %v665, %v677
  %v742 = vmul.f32 %v668, %v677
  %v744 = vlaneseq
  %v745 = vshrl.u32 %v744, 7
  %v746 = vsub.s32 0, %v745
  %v747 = vrot.slane %v672, %v746
  %v749 = vadd.f32 %v679, %v747
  %v750 = vadd.f32 %v680, %v747
  %v751 = vadd.f32 %v681, %v747
  %v752 = vadd.f32 %v682, %v747
  %v753 = vadd.f32 %v683, %v747
  %v754 = vadd.f32 %v684, %v747
  %v755 = vadd.f32 %v685, %v747
  %v756 = vadd.f32 %v686, %v747
  %v757 = vadd.f32 %v687, %v747
  %v758 = vadd.f32 %v688, %v747
  %v759 = vadd.f32 %v689, %v747
  %v760 = vadd.f32 %v690, %v747
  %v761 = vadd.f32 %v691, %v747
  %v762 = vadd.f32 %v692, %v747
  %v763 = vadd.f32 %v693, %v747
  %v764 = vadd.f32 %v694, %v747
  %v765 = vadd.f32 %v695, %v747
  %v766 = vadd.f32 %v696, %v747
  %v767 = vadd.f32 %v697, %v747
  %v768 = vadd.f32 %v698, %v747
  %v769 = vadd.f32 %v699, %v747
  %v770 = vadd.f32 %v700, %v747
  %v771 = vadd.f32 %v701, %v747
  %v772 = vadd.f32 %v702, %v747
  %v773 = vadd.f32 %v703, %v747
  %v774 = vadd.f32 %v704, %v747
  %v775 = vadd.f32 %v705, %v747
  %v776 = vadd.f32 %v706, %v747
  %v777 = vadd.f32 %v707, %v747
  %v778 = vadd.f32 %v708, %v747
  %v779 = vadd.f32 %v709, %v747
  %v780 = vadd.f32 %v710, %v747
  %v781 = vadd.f32 %v711, %v747
  %v782 = vadd.f32 %v712, %v747
  %v783 = vadd.f32 %v713, %v747
  %v784 = vadd.f32 %v714, %v747
  %v785 = vadd.f32 %v715, %v747
  %v786 = vadd.f32 %v716, %v747
  %v787 = vadd.f32 %v717, %v747
  %v788 = vadd.f32 %v718, %v747
  %v789 = vadd.f32 %v719, %v747
  %v790 = vadd.f32 %v720, %v747
  %v791 = vadd.f32 %v721, %v747
  %v792 = vadd.f32 %v722, %v747
  %v793 = vadd.f32 %v723, %v747
  %v794 = vadd.f32 %v724, %v747
  %v795 = vadd.f32 %v725, %v747
  %v796 = vadd.f32 %v726, %v747
  %v797 = vadd.f32 %v727, %v747
  %v798 = vadd.f32 %v728, %v747
  %v799 = vadd.f32 %v729, %v747
  %v800 = vadd.f32 %v730, %v747
  %v801 = vadd.f32 %v731, %v747
  %v802 = vadd.f32 %v732, %v747
  %v803 = vadd.f32 %v733, %v747
  %v804 = vadd.f32 %v734, %v747
  %v805 = vadd.f32 %v735, %v747
  %v806 = vadd.f32 %v736, %v747
  %v807 = vadd.f32 %v737, %v747
  %v808 = vadd.f32 %v738, %v747
  %v809 = vadd.f32 %v739, %v747
  %v810 = vadd.f32 %v740, %v747
  %v811 = vadd.f32 %v741, %v747
  %v812 = vadd.f32 %v742, %v747
  %v813 = vld [vmem:[%s4] sm:$0xff]
  %v814 = vld [vmem:[%s4 + $0x8] sm:$0xff]
  %v815 = vld [vmem:[%s4 + $0x10] sm:$0xff]
  %v816 = vld [vmem:[%s4 + $0x18] sm:$0xff]
  %v817 = vld [vmem:[%s4 + $0x20] sm:$0xff]
  %v818 = vld [vmem:[%s4 + $0x28] sm:$0xff]
  %v819 = vld [vmem:[%s4 + $0x30] sm:$0xff]
  %v820 = vld [vmem:[%s4 + $0x38] sm:$0xff]
  %v821 = vld [vmem:[%s4 + $0x40] sm:$0xff]
  %v822 = vld [vmem:[%s4 + $0x48] sm:$0xff]
  %v823 = vld [vmem:[%s4 + $0x50] sm:$0xff]
  %v824 = vld [vmem:[%s4 + $0x58] sm:$0xff]
  %v825 = vld [vmem:[%s4 + $0x60] sm:$0xff]
  %v826 = vld [vmem:[%s4 + $0x68] sm:$0xff]
  %v827 = vld [vmem:[%s4 + $0x70] sm:$0xff]
  %v828 = vld [vmem:[%s4 + $0x78] sm:$0xff]
  %v829 = vld [vmem:[%s4 + $0x80] sm:$0xff]
  %v830 = vld [vmem:[%s4 + $0x88] sm:$0xff]
  %v831 = vld [vmem:[%s4 + $0x90] sm:$0xff]
  %v832 = vld [vmem:[%s4 + $0x98] sm:$0xff]
  %v833 = vld [vmem:[%s4 + $0xa0] sm:$0xff]
  %v834 = vld [vmem:[%s4 + $0xa8] sm:$0xff]
  %v835 = vld [vmem:[%s4 + $0xb0] sm:$0xff]
  %v836 = vld [vmem:[%s4 + $0xb8] sm:$0xff]
  %v837 = vld [vmem:[%s4 + $0xc0] sm:$0xff]
  %v838 = vld [vmem:[%s4 + $0xc8] sm:$0xff]
  %v839 = vld [vmem:[%s4 + $0xd0] sm:$0xff]
  %v840 = vld [vmem:[%s4 + $0xd8] sm:$0xff]
  %v841 = vld [vmem:[%s4 + $0xe0] sm:$0xff]
  %v842 = vld [vmem:[%s4 + $0xe8] sm:$0xff]
  %v843 = vld [vmem:[%s4 + $0xf0] sm:$0xff]
  %v844 = vld [vmem:[%s4 + $0xf8] sm:$0xff]
  %v845 = vld [vmem:[%s4 + $0x100] sm:$0xff]
  %v846 = vld [vmem:[%s4 + $0x108] sm:$0xff]
  %v847 = vld [vmem:[%s4 + $0x110] sm:$0xff]
  %v848 = vld [vmem:[%s4 + $0x118] sm:$0xff]
  %v849 = vld [vmem:[%s4 + $0x120] sm:$0xff]
  %v850 = vld [vmem:[%s4 + $0x128] sm:$0xff]
  %v851 = vld [vmem:[%s4 + $0x130] sm:$0xff]
  %v852 = vld [vmem:[%s4 + $0x138] sm:$0xff]
  %v853 = vld [vmem:[%s4 + $0x140] sm:$0xff]
  %v854 = vld [vmem:[%s4 + $0x148] sm:$0xff]
  %v855 = vld [vmem:[%s4 + $0x150] sm:$0xff]
  %v856 = vld [vmem:[%s4 + $0x158] sm:$0xff]
  %v857 = vld [vmem:[%s4 + $0x160] sm:$0xff]
  %v858 = vld [vmem:[%s4 + $0x168] sm:$0xff]
  %v859 = vld [vmem:[%s4 + $0x170] sm:$0xff]
  %v860 = vld [vmem:[%s4 + $0x178] sm:$0xff]
  %v861 = vld [vmem:[%s4 + $0x180] sm:$0xff]
  %v862 = vld [vmem:[%s4 + $0x188] sm:$0xff]
  %v863 = vld [vmem:[%s4 + $0x190] sm:$0xff]
  %v864 = vld [vmem:[%s4 + $0x198] sm:$0xff]
  %v865 = vld [vmem:[%s4 + $0x1a0] sm:$0xff]
  %v866 = vld [vmem:[%s4 + $0x1a8] sm:$0xff]
  %v867 = vld [vmem:[%s4 + $0x1b0] sm:$0xff]
  %v868 = vld [vmem:[%s4 + $0x1b8] sm:$0xff]
  %v869 = vld [vmem:[%s4 + $0x1c0] sm:$0xff]
  %v870 = vld [vmem:[%s4 + $0x1c8] sm:$0xff]
  %v871 = vld [vmem:[%s4 + $0x1d0] sm:$0xff]
  %v872 = vld [vmem:[%s4 + $0x1d8] sm:$0xff]
  %v873 = vld [vmem:[%s4 + $0x1e0] sm:$0xff]
  %v874 = vld [vmem:[%s4 + $0x1e8] sm:$0xff]
  %v875 = vld [vmem:[%s4 + $0x1f0] sm:$0xff]
  %v876 = vld [vmem:[%s4 + $0x1f8] sm:$0xff]
  %v877 = vadd.f32 %v749, %v813
  %v878 = vadd.f32 %v750, %v814
  %v879 = vadd.f32 %v751, %v815
  %v880 = vadd.f32 %v752, %v816
  %v881 = vadd.f32 %v753, %v817
  %v882 = vadd.f32 %v754, %v818
  %v883 = vadd.f32 %v755, %v819
  %v884 = vadd.f32 %v756, %v820
  %v885 = vadd.f32 %v757, %v821
  %v886 = vadd.f32 %v758, %v822
  %v887 = vadd.f32 %v759, %v823
  %v888 = vadd.f32 %v760, %v824
  %v889 = vadd.f32 %v761, %v825
  %v890 = vadd.f32 %v762, %v826
  %v891 = vadd.f32 %v763, %v827
  %v892 = vadd.f32 %v764, %v828
  %v893 = vadd.f32 %v765, %v829
  %v894 = vadd.f32 %v766, %v830
  %v895 = vadd.f32 %v767, %v831
  %v896 = vadd.f32 %v768, %v832
  %v897 = vadd.f32 %v769, %v833
  %v898 = vadd.f32 %v770, %v834
  %v899 = vadd.f32 %v771, %v835
  %v900 = vadd.f32 %v772, %v836
  %v901 = vadd.f32 %v773, %v837
  %v902 = vadd.f32 %v774, %v838
  %v903 = vadd.f32 %v775, %v839
  %v904 = vadd.f32 %v776, %v840
  %v905 = vadd.f32 %v777, %v841
  %v906 = vadd.f32 %v778, %v842
  %v907 = vadd.f32 %v779, %v843
  %v908 = vadd.f32 %v780, %v844
  %v909 = vadd.f32 %v781, %v845
  %v910 = vadd.f32 %v782, %v846
  %v911 = vadd.f32 %v783, %v847
  %v912 = vadd.f32 %v784, %v848
  %v913 = vadd.f32 %v785, %v849
  %v914 = vadd.f32 %v786, %v850
  %v915 = vadd.f32 %v787, %v851
  %v916 = vadd.f32 %v788, %v852
  %v917 = vadd.f32 %v789, %v853
  %v918 = vadd.f32 %v790, %v854
  %v919 = vadd.f32 %v791, %v855
  %v920 = vadd.f32 %v792, %v856
  %v921 = vadd.f32 %v793, %v857
  %v922 = vadd.f32 %v794, %v858
  %v923 = vadd.f32 %v795, %v859
  %v924 = vadd.f32 %v796, %v860
  %v925 = vadd.f32 %v797, %v861
  %v926 = vadd.f32 %v798, %v862
  %v927 = vadd.f32 %v799, %v863
  %v928 = vadd.f32 %v800, %v864
  %v929 = vadd.f32 %v801, %v865
  %v930 = vadd.f32 %v802, %v866
  %v931 = vadd.f32 %v803, %v867
  %v932 = vadd.f32 %v804, %v868
  %v933 = vadd.f32 %v805, %v869
  %v934 = vadd.f32 %v806, %v870
  %v935 = vadd.f32 %v807, %v871
  %v936 = vadd.f32 %v808, %v872
  %v937 = vadd.f32 %v809, %v873
  %v938 = vadd.f32 %v810, %v874
  %v939 = vadd.f32 %v811, %v875
  %v940 = vadd.f32 %v812, %v876
  %941 = vst [vmem:[%s5] sm:$0xff] %v877
  %942 = vst [vmem:[%s5 + $0x8] sm:$0xff] %v878
  %943 = vst [vmem:[%s5 + $0x10] sm:$0xff] %v879
  %944 = vst [vmem:[%s5 + $0x18] sm:$0xff] %v880
  %945 = vst [vmem:[%s5 + $0x20] sm:$0xff] %v881
  %946 = vst [vmem:[%s5 + $0x28] sm:$0xff] %v882
  %947 = vst [vmem:[%s5 + $0x30] sm:$0xff] %v883
  %948 = vst [vmem:[%s5 + $0x38] sm:$0xff] %v884
  %949 = vst [vmem:[%s5 + $0x40] sm:$0xff] %v885
  %950 = vst [vmem:[%s5 + $0x48] sm:$0xff] %v886
  %951 = vst [vmem:[%s5 + $0x50] sm:$0xff] %v887
  %952 = vst [vmem:[%s5 + $0x58] sm:$0xff] %v888
  %953 = vst [vmem:[%s5 + $0x60] sm:$0xff] %v889
  %954 = vst [vmem:[%s5 + $0x68] sm:$0xff] %v890
  %955 = vst [vmem:[%s5 + $0x70] sm:$0xff] %v891
  %956 = vst [vmem:[%s5 + $0x78] sm:$0xff] %v892
  %957 = vst [vmem:[%s5 + $0x80] sm:$0xff] %v893
  %958 = vst [vmem:[%s5 + $0x88] sm:$0xff] %v894
  %959 = vst [vmem:[%s5 + $0x90] sm:$0xff] %v895
  %960 = vst [vmem:[%s5 + $0x98] sm:$0xff] %v896
  %961 = vst [vmem:[%s5 + $0xa0] sm:$0xff] %v897
  %962 = vst [vmem:[%s5 + $0xa8] sm:$0xff] %v898
  %963 = vst [vmem:[%s5 + $0xb0] sm:$0xff] %v899
  %964 = vst [vmem:[%s5 + $0xb8] sm:$0xff] %v900
  %965 = vst [vmem:[%s5 + $0xc0] sm:$0xff] %v901
  %966 = vst [vmem:[%s5 + $0xc8] sm:$0xff] %v902
  %967 = vst [vmem:[%s5 + $0xd0] sm:$0xff] %v903
  %968 = vst [vmem:[%s5 + $0xd8] sm:$0xff] %v904
  %969 = vst [vmem:[%s5 + $0xe0] sm:$0xff] %v905
  %970 = vst [vmem:[%s5 + $0xe8] sm:$0xff] %v906
  %971 = vst [vmem:[%s5 + $0xf0] sm:$0xff] %v907
  %972 = vst [vmem:[%s5 + $0xf8] sm:$0xff] %v908
  %973 = vst [vmem:[%s5 + $0x100] sm:$0xff] %v909
  %974 = vst [vmem:[%s5 + $0x108] sm:$0xff] %v910
  %975 = vst [vmem:[%s5 + $0x110] sm:$0xff] %v911
  %976 = vst [vmem:[%s5 + $0x118] sm:$0xff] %v912
  %977 = vst [vmem:[%s5 + $0x120] sm:$0xff] %v913
  %978 = vst [vmem:[%s5 + $0x128] sm:$0xff] %v914
  %979 = vst [vmem:[%s5 + $0x130] sm:$0xff] %v915
  %980 = vst [vmem:[%s5 + $0x138] sm:$0xff] %v916
  %981 = vst [vmem:[%s5 + $0x140] sm:$0xff] %v917
  %982 = vst [vmem:[%s5 + $0x148] sm:$0xff] %v918
  %983 = vst [vmem:[%s5 + $0x150] sm:$0xff] %v919
  %984 = vst [vmem:[%s5 + $0x158] sm:$0xff] %v920
  %985 = vst [vmem:[%s5 + $0x160] sm:$0xff] %v921
  %986 = vst [vmem:[%s5 + $0x168] sm:$0xff] %v922
  %987 = vst [vmem:[%s5 + $0x170] sm:$0xff] %v923
  %988 = vst [vmem:[%s5 + $0x178] sm:$0xff] %v924
  %989 = vst [vmem:[%s5 + $0x180] sm:$0xff] %v925
  %990 = vst [vmem:[%s5 + $0x188] sm:$0xff] %v926
  %991 = vst [vmem:[%s5 + $0x190] sm:$0xff] %v927
  %992 = vst [vmem:[%s5 + $0x198] sm:$0xff] %v928
  %993 = vst [vmem:[%s5 + $0x1a0] sm:$0xff] %v929
  %994 = vst [vmem:[%s5 + $0x1a8] sm:$0xff] %v930
  %995 = vst [vmem:[%s5 + $0x1b0] sm:$0xff] %v931
  %996 = vst [vmem:[%s5 + $0x1b8] sm:$0xff] %v932
  %997 = vst [vmem:[%s5 + $0x1c0] sm:$0xff] %v933
  %998 = vst [vmem:[%s5 + $0x1c8] sm:$0xff] %v934
  %999 = vst [vmem:[%s5 + $0x1d0] sm:$0xff] %v935
  %1000 = vst [vmem:[%s5 + $0x1d8] sm:$0xff] %v936
  %1001 = vst [vmem:[%s5 + $0x1e0] sm:$0xff] %v937
  %1002 = vst [vmem:[%s5 + $0x1e8] sm:$0xff] %v938
  %1003 = vst [vmem:[%s5 + $0x1f0] sm:$0xff] %v939
  %1004 = vst [vmem:[%s5 + $0x1f8] sm:$0xff] %v940
  // Predicated region
  $region22: #{generator_forward.10} parent=0 // pred_check
    _
  $region23: #{generator_forward.10} parent=0 // pred_check_branch
    %1006 = sbr.rel (0) target = $region25
  $region24: #{generator_forward.10} parent=0 // pred_region
    _
  $region25: #{generator_forward.10} parent=0 // pred_fallthru
    _
  // Predicated region
  $region26: #{generator_forward.10} parent=0 // pred_check
    _
  $region27: #{generator_forward.10} parent=0 // pred_check_branch
    %1008 = sbr.rel (0) target = $region29
  $region28: #{generator_forward.10} parent=0 // pred_region
    _
  $region29: #{generator_forward.10} parent=0 // pred_fallthru
    _

// kernel: generator_forward.15
$region0: #{generator_forward.15}
  #allocation0 [shape = 'u32[]', space=smem, size = 0x4, offset = 0x4, fixed_abs, tag = 'smem constant byte address 0x4 - core index']
  #allocation1 [shape = 'u32[144,128]{1,0:T(1,128)}', space=vmem, size = 0x12000, scoped, tag = 'internal scratch']
  %s0 = inlined_call_operand.vmem [shape: bf16[2048,36], index: 0, kind: input, shape index: {}]
  %s1 = inlined_call_operand.vmem [shape: bf16[36,128], index: 1, kind: input, shape index: {}]
  %s2 = inlined_call_operand.vmem [shape: f32[1,128], index: 2, kind: input, shape index: {}]
  %s3 = inlined_call_operand.vmem [shape: f32[1,128], index: 3, kind: input, shape index: {}]
  %s4 = inlined_call_operand.vmem [shape: f32[2048,128], index: 4, kind: output, shape index: {}]
  %s5 = sld [smem:[#allocation0]]
  $region49: #{generator_forward.15} parent=0
    _
  %s7 = ssub.s32 1, %s5
  %s8 = scalar_select 0, %s7, %s5
  loop: start=0, step=1, limit=6
  $region2: #{generator_forward.15} parent=0 // loop_pre_header
    _
  $region3: #{generator_forward.15} parent=0 // loop_header
    %s10 = sphi 0, %s14
    %p11 = scmp.ge.s32.totalorder %s10, 6
    %s17 = sphi 0, %s29
    %s18 = sphi 0, %s25
    %s19 = sphi 0, %s17
    %s20 = sphi 0, %s18
    %s21 = sphi 0, %s19
    %s22 = sphi 0, %s20
    %s32 = sphi 0, %s34
    %s35 = sphi 0, %s32
    %s36 = sphi 0, %s35
    %s52 = sphi 0, %s36
    %s58 = sphi 0, %s60
    %s61 = sphi 0, %s58
    %s62 = sphi 0, %s61
    %s78 = sphi 0, %s62
    %s84 = sphi 0, %s86
    %s87 = sphi 0, %s84
    %s88 = sphi 0, %s87
    %s104 = sphi 0, %s88
    %s110 = sphi 0, %s112
    %s113 = sphi 0, %s110
    %s114 = sphi 0, %s113
    %s130 = sphi 0, %s114
    %s138 = sphi 0, %s140
    %s141 = sphi 0, %s138
    %s142 = sphi 0, %s141
    %s158 = sphi 0, %s142
  $region4: #{generator_forward.15} parent=0 // loop_header_branch
    %13 = sbr.rel (%p11) target = $region8
  $region5: #{generator_forward.15} parent=0 // loop_body
    %s15 = ssub.s32 %s10, 1
    %s16 = ssub.s32 %s10, 2
    %s23 = sadd.s32 1, %s18
    %p24 = scmp.ge.s32.totalorder %s23, 1
    %s25 = scalar_select %p24, 0, %s23
    %s26 = sadd.s32 1, %s17
    %s27 = scalar_select %p24, %s26, %s17
    %p28 = scmp.ge.s32.totalorder %s27, 4
    %s29 = scalar_select %p28, 0, %s27
    %s30 = ssub.s32 %s17, %s29
    %p31 = scmp.eq.s32.totalorder %s30, 0
    %s33 = sadd.s32 %s32, 1
    %s34 = scalar_select %p31, %s32, %s33
    %p37 = pneg %p31
    %p38 = scmp.eq.s32.totalorder %s10, 3
    %p39 = por %p37, %p38
    %p40 = scmp.ne.s32.totalorder %s32, %s35
    %p41 = scmp.eq.s32.totalorder %s10, 0
    %p42 = por %p40, %p41
    %p43 = scmp.ne.s32.totalorder %s32, %s35
    %p44 = scmp.eq.s32.totalorder %s15, 3
    %p45 = por %p43, %p44
    %p46 = scmp.ne.s32.totalorder %s35, %s36
    %p47 = scmp.eq.s32.totalorder %s15, 0
    %p48 = por %p46, %p47
    %p49 = scmp.ne.s32.totalorder %s35, %s36
    %p50 = scmp.eq.s32.totalorder %s16, 3
    %p51 = por %p49, %p50
    %p53 = scmp.ne.s32.totalorder %s36, %s52
    %p54 = scmp.eq.s32.totalorder %s16, 0
    %p55 = por %p53, %p54
    %s56 = ssub.s32 %s18, %s25
    %p57 = scmp.eq.s32.totalorder %s56, 0
    %s59 = sadd.s32 %s58, 1
    %s60 = scalar_select %p57, %s58, %s59
    %p63 = pneg %p57
    %p64 = scmp.eq.s32.totalorder %s10, 3
    %p65 = por %p63, %p64
    %p66 = scmp.ne.s32.totalorder %s58, %s61
    %p67 = scmp.eq.s32.totalorder %s10, 0
    %p68 = por %p66, %p67
    %p69 = scmp.ne.s32.totalorder %s58, %s61
    %p70 = scmp.eq.s32.totalorder %s15, 3
    %p71 = por %p69, %p70
    %p72 = scmp.ne.s32.totalorder %s61, %s62
    %p73 = scmp.eq.s32.totalorder %s15, 0
    %p74 = por %p72, %p73
    %p75 = scmp.ne.s32.totalorder %s61, %s62
    %p76 = scmp.eq.s32.totalorder %s16, 3
    %p77 = por %p75, %p76
    %p79 = scmp.ne.s32.totalorder %s62, %s78
    %p80 = scmp.eq.s32.totalorder %s16, 0
    %p81 = por %p79, %p80
    %s82 = ssub.s32 %s18, %s25
    %p83 = scmp.eq.s32.totalorder %s82, 0
    %s85 = sadd.s32 %s84, 1
    %s86 = scalar_select %p83, %s84, %s85
    %p89 = pneg %p83
    %p90 = scmp.eq.s32.totalorder %s10, 3
    %p91 = por %p89, %p90
    %p92 = scmp.ne.s32.totalorder %s84, %s87
    %p93 = scmp.eq.s32.totalorder %s10, 0
    %p94 = por %p92, %p93
    %p95 = scmp.ne.s32.totalorder %s84, %s87
    %p96 = scmp.eq.s32.totalorder %s15, 3
    %p97 = por %p95, %p96
    %p98 = scmp.ne.s32.totalorder %s87, %s88
    %p99 = scmp.eq.s32.totalorder %s15, 0
    %p100 = por %p98, %p99
    %p101 = scmp.ne.s32.totalorder %s87, %s88
    %p102 = scmp.eq.s32.totalorder %s16, 3
    %p103 = por %p101, %p102
    %p105 = scmp.ne.s32.totalorder %s88, %s104
    %p106 = scmp.eq.s32.totalorder %s16, 0
    %p107 = por %p105, %p106
    %s108 = ssub.s32 %s18, %s25
    %p109 = scmp.eq.s32.totalorder %s108, 0
    %s111 = sadd.s32 %s110, 1
    %s112 = scalar_select %p109, %s110, %s111
    %p115 = pneg %p109
    %p116 = scmp.eq.s32.totalorder %s10, 3
    %p117 = por %p115, %p116
    %p118 = scmp.ne.s32.totalorder %s110, %s113
    %p119 = scmp.eq.s32.totalorder %s10, 0
    %p120 = por %p118, %p119
    %p121 = scmp.ne.s32.totalorder %s110, %s113
    %p122 = scmp.eq.s32.totalorder %s15, 3
    %p123 = por %p121, %p122
    %p124 = scmp.ne.s32.totalorder %s113, %s114
    %p125 = scmp.eq.s32.totalorder %s15, 0
    %p126 = por %p124, %p125
    %p127 = scmp.ne.s32.totalorder %s113, %s114
    %p128 = scmp.eq.s32.totalorder %s16, 3
    %p129 = por %p127, %p128
    %p131 = scmp.ne.s32.totalorder %s114, %s130
    %p132 = scmp.eq.s32.totalorder %s16, 0
    %p133 = por %p131, %p132
    %s134 = ssub.s32 %s17, %s29
    %s135 = ssub.s32 %s18, %s25
    %s136 = sor.u32 %s134, %s135
    %p137 = scmp.eq.s32.totalorder %s136, 0
    %s139 = sadd.s32 %s138, 1
    %s140 = scalar_select %p137, %s138, %s139
    %p143 = pneg %p137
    %p144 = scmp.eq.s32.totalorder %s10, 3
    %p145 = por %p143, %p144
    %p146 = scmp.ne.s32.totalorder %s138, %s141
    %p147 = scmp.eq.s32.totalorder %s10, 0
    %p148 = por %p146, %p147
    %p149 = scmp.ne.s32.totalorder %s138, %s141
    %p150 = scmp.eq.s32.totalorder %s15, 3
    %p151 = por %p149, %p150
    %p152 = scmp.ne.s32.totalorder %s141, %s142
    %p153 = scmp.eq.s32.totalorder %s15, 0
    %p154 = por %p152, %p153
    %p155 = scmp.ne.s32.totalorder %s141, %s142
    %p156 = scmp.eq.s32.totalorder %s16, 3
    %p157 = por %p155, %p156
    %p159 = scmp.ne.s32.totalorder %s142, %s158
    %p160 = scmp.eq.s32.totalorder %s16, 0
    %p161 = por %p159, %p160
    %p162 = scmp.le.s32.totalorder 1, %s10
    %p163 = scmp.lt.s32.totalorder %s10, 5
    %p164 = pnand %p162, %p163
    %p165 = pneg %p164
    // Predicated region
    $region9: #{generator_forward.15} parent=5 // pred_check
      _
    $region10: #{generator_forward.15} parent=5 // pred_check_branch
      %167 = sbr.rel (%p164) target = $region12
    $region11: #{generator_forward.15} parent=5 // pred_region
      %s168 = ssub.s32 %s10, 1
      // Predicated region
      $region13: #{generator_forward.15} parent=11 // pred_check
        %p169 = pneg %p74
      $region14: #{generator_forward.15} parent=11 // pred_check_branch
        %171 = sbr.rel (%p169) target = $region16
      $region15: #{generator_forward.15} parent=11 // pred_region
        %p172 = scmp.lt.s32.totalorder %s20, 0
        %s173 = scalar_select %p172, %s20, 0
        %s174 = smul.addr %s173, 4
        %s175 = scalar_lea.vmem %s1, %s174
      $region16: #{generator_forward.15} parent=11 // pred_fallthru
        _
      // Predicated region
      $region17: #{generator_forward.15} parent=11 // pred_check
        %p176 = pneg %p100
      $region18: #{generator_forward.15} parent=11 // pred_check_branch
        %178 = sbr.rel (%p176) target = $region20
      $region19: #{generator_forward.15} parent=11 // pred_region
        %p179 = scmp.lt.s32.totalorder %s20, 0
        %s180 = scalar_select %p179, %s20, 0
        %s181 = scalar_lea.vmem %s2, %s180
      $region20: #{generator_forward.15} parent=11 // pred_fallthru
        _
      // Predicated region
      $region21: #{generator_forward.15} parent=11 // pred_check
        %p182 = pneg %p126
      $region22: #{generator_forward.15} parent=11 // pred_check_branch
        %184 = sbr.rel (%p182) target = $region24
      $region23: #{generator_forward.15} parent=11 // pred_region
        %p185 = scmp.lt.s32.totalorder %s20, 0
        %s186 = scalar_select %p185, %s20, 0
        %s187 = scalar_lea.vmem %s3, %s186
      $region24: #{generator_forward.15} parent=11 // pred_fallthru
        _
    $region12: #{generator_forward.15} parent=5 // pred_fallthru
      _
    %p188 = scmp.lt.s32.totalorder %s10, 4
    // Predicated region
    $region25: #{generator_forward.15} parent=5 // pred_check
      %p189 = pneg %p188
    $region26: #{generator_forward.15} parent=5 // pred_check_branch
      %191 = sbr.rel (%p189) target = $region28
    $region27: #{generator_forward.15} parent=5 // pred_region
      // Predicated region
      $region29: #{generator_forward.15} parent=27 // pred_check
        %p192 = pneg %p42
      $region30: #{generator_forward.15} parent=27 // pred_check_branch
        %194 = sbr.rel (%p192) target = $region32
      $region31: #{generator_forward.15} parent=27 // pred_region
        %s195 = smul.u32 64, %s17
        %p196 = scmp.lt.s32.totalorder %s195, 255
        %s197 = scalar_select %p196, %s195, 255
        %s198 = smul.addr %s197, 4
        %s199 = scalar_lea.vmem %s0, %s198
        %s200 = smul.u32 64, %s17
      $region32: #{generator_forward.15} parent=27 // pred_fallthru
        _
    $region28: #{generator_forward.15} parent=5 // pred_fallthru
      _
    %p201 = scmp.le.s32.totalorder 1, %s10
    %p202 = scmp.lt.s32.totalorder %s10, 5
    %p203 = pnand %p201, %p202
    %p204 = pneg %p203
    // Predicated region
    $region33: #{generator_forward.15} parent=5 // pred_check
      _
    $region34: #{generator_forward.15} parent=5 // pred_check_branch
      %206 = sbr.rel (%p203) target = $region36
    $region35: #{generator_forward.15} parent=5 // pred_region
      %s207 = ssub.s32 %s10, 1
      %s208 = smul.u32 64, %s19
      %p209 = scmp.lt.s32.totalorder %s208, 255
      %s210 = scalar_select %p209, %s208, 255
      %s211 = smul.addr %s210, 4
      %s212 = scalar_lea.vmem %s0, %s211
      %p213 = pneg %p48
      %p214 = pneg %p45
      %p215 = scmp.lt.s32.totalorder %s20, 0
      %s216 = scalar_select %p215, %s20, 0
      %s217 = smul.addr %s216, 4
      %s218 = scalar_lea.vmem %s1, %s217
      %p219 = pneg %p74
      %p220 = pneg %p71
      %p221 = scmp.lt.s32.totalorder %s20, 0
      %s222 = scalar_select %p221, %s20, 0
      %s223 = scalar_lea.vmem %s2, %s222
      %p224 = pneg %p100
      %p225 = pneg %p97
      %p226 = scmp.lt.s32.totalorder %s20, 0
      %s227 = scalar_select %p226, %s20, 0
      %s228 = scalar_lea.vmem %s3, %s227
      %p229 = pneg %p126
      %p230 = pneg %p123
      %p231 = pneg %p154
      %p232 = pneg %p151
      %s233 = smul.u32 64, %s19
      %p234 = scmp.lt.s32.totalorder %s233, 255
      %s235 = scalar_select %p234, %s233, 255
      %p236 = scmp.lt.s32.totalorder %s20, 0
      %s237 = scalar_select %p236, %s20, 0
      %s238 = sadd.s32 %s237, %s235
      %s239 = smul.addr %s238, 8
      %s240 = scalar_lea.vmem %s4, %s239
      %s241 = smul.u32 64, %s19
      %p242 = scmp.lt.s32.totalorder %s241, 255
      %s243 = scalar_select %p242, %s241, 255
      %s244 = smul.addr %s243, 4
      %s245 = scalar_lea.vmem %s0, %s244
      %s246 = smul.u32 64, %s19
      %p247 = scmp.lt.s32.totalorder %s20, 0
      %s248 = scalar_select %p247, %s20, 0
      %s249 = smul.addr %s248, 4
      %s250 = scalar_lea.vmem %s1, %s249
      %p251 = scmp.lt.s32.totalorder %s20, 0
      %s252 = scalar_select %p251, %s20, 0
      %s253 = scalar_lea.vmem %s2, %s252
      %p254 = scmp.lt.s32.totalorder %s20, 0
      %s255 = scalar_select %p254, %s20, 0
      %s256 = scalar_lea.vmem %s3, %s255
      %s257 = smul.u32 64, %s19
      %p258 = scmp.lt.s32.totalorder %s257, 255
      %s259 = scalar_select %p258, %s257, 255
      %p260 = scmp.lt.s32.totalorder %s20, 0
      %s261 = scalar_select %p260, %s20, 0
      %s262 = sadd.s32 %s261, %s259
      %s263 = smul.addr %s262, 8
      %s264 = scalar_lea.vmem %s4, %s263
      %s265 = smul.u32 64, %s19
      %v267 = vld [vmem:[%s245] sm:$0xf]
      %v268 = vld [vmem:[%s245 + $0x4] sm:$0xf]
      %v269 = vld [vmem:[%s245 + $0x8] sm:$0xf]
      %v270 = vld [vmem:[%s245 + $0xc] sm:$0xf]
      %v271 = vld [vmem:[%s245 + $0x10] sm:$0xf]
      %v272 = vld [vmem:[%s245 + $0x14] sm:$0xf]
      %v273 = vld [vmem:[%s245 + $0x18] sm:$0xf]
      %v274 = vld [vmem:[%s245 + $0x1c] sm:$0xf]
      %v275 = vld [vmem:[%s245 + $0x20] sm:$0xf]
      %v276 = vld [vmem:[%s245 + $0x24] sm:$0xf]
      %v277 = vld [vmem:[%s245 + $0x28] sm:$0xf]
      %v278 = vld [vmem:[%s245 + $0x2c] sm:$0xf]
      %v279 = vld [vmem:[%s245 + $0x30] sm:$0xf]
      %v280 = vld [vmem:[%s245 + $0x34] sm:$0xf]
      %v281 = vld [vmem:[%s245 + $0x38] sm:$0xf]
      %v282 = vld [vmem:[%s245 + $0x3c] sm:$0xf]
      %v283 = vld [vmem:[%s245 + $0x40] sm:$0xf]
      %v284 = vld [vmem:[%s245 + $0x44] sm:$0xf]
      %v285 = vld [vmem:[%s245 + $0x48] sm:$0xf]
      %v286 = vld [vmem:[%s245 + $0x4c] sm:$0xf]
      %v287 = vld [vmem:[%s245 + $0x50] sm:$0xf]
      %v288 = vld [vmem:[%s245 + $0x54] sm:$0xf]
      %v289 = vld [vmem:[%s245 + $0x58] sm:$0xf]
      %v290 = vld [vmem:[%s245 + $0x5c] sm:$0xf]
      %v291 = vld [vmem:[%s245 + $0x60] sm:$0xf]
      %v292 = vld [vmem:[%s245 + $0x64] sm:$0xf]
      %v293 = vld [vmem:[%s245 + $0x68] sm:$0xf]
      %v294 = vld [vmem:[%s245 + $0x6c] sm:$0xf]
      %v295 = vld [vmem:[%s245 + $0x70] sm:$0xf]
      %v296 = vld [vmem:[%s245 + $0x74] sm:$0xf]
      %v297 = vld [vmem:[%s245 + $0x78] sm:$0xf]
      %v298 = vld [vmem:[%s245 + $0x7c] sm:$0xf]
      %v299 = vld [vmem:[%s245 + $0x80] sm:$0xf]
      %v300 = vld [vmem:[%s245 + $0x84] sm:$0xf]
      %v301 = vld [vmem:[%s245 + $0x88] sm:$0xf]
      %v302 = vld [vmem:[%s245 + $0x8c] sm:$0xf]
      %v303 = vld [vmem:[%s245 + $0x90] sm:$0xf]
      %v304 = vld [vmem:[%s245 + $0x94] sm:$0xf]
      %v305 = vld [vmem:[%s245 + $0x98] sm:$0xf]
      %v306 = vld [vmem:[%s245 + $0x9c] sm:$0xf]
      %v307 = vld [vmem:[%s245 + $0xa0] sm:$0xf]
      %v308 = vld [vmem:[%s245 + $0xa4] sm:$0xf]
      %v309 = vld [vmem:[%s245 + $0xa8] sm:$0xf]
      %v310 = vld [vmem:[%s245 + $0xac] sm:$0xf]
      %v311 = vld [vmem:[%s245 + $0xb0] sm:$0xf]
      %v312 = vld [vmem:[%s245 + $0xb4] sm:$0xf]
      %v313 = vld [vmem:[%s245 + $0xb8] sm:$0xf]
      %v314 = vld [vmem:[%s245 + $0xbc] sm:$0xf]
      %v315 = vld [vmem:[%s245 + $0xc0] sm:$0xf]
      %v316 = vld [vmem:[%s245 + $0xc4] sm:$0xf]
      %v317 = vld [vmem:[%s245 + $0xc8] sm:$0xf]
      %v318 = vld [vmem:[%s245 + $0xcc] sm:$0xf]
      %v319 = vld [vmem:[%s245 + $0xd0] sm:$0xf]
      %v320 = vld [vmem:[%s245 + $0xd4] sm:$0xf]
      %v321 = vld [vmem:[%s245 + $0xd8] sm:$0xf]
      %v322 = vld [vmem:[%s245 + $0xdc] sm:$0xf]
      %v323 = vld [vmem:[%s245 + $0xe0] sm:$0xf]
      %v324 = vld [vmem:[%s245 + $0xe4] sm:$0xf]
      %v325 = vld [vmem:[%s245 + $0xe8] sm:$0xf]
      %v326 = vld [vmem:[%s245 + $0xec] sm:$0xf]
      %v327 = vld [vmem:[%s245 + $0xf0] sm:$0xf]
      %v328 = vld [vmem:[%s245 + $0xf4] sm:$0xf]
      %v329 = vld [vmem:[%s245 + $0xf8] sm:$0xf]
      %v330 = vld [vmem:[%s245 + $0xfc] sm:$0xf]
      %v331 = vld [vmem:[%s250] sm:$0xf]
      %v332 = vld [vmem:[%s250 + $0x4] sm:$0xf]
      %v333 = vld [vmem:[%s250 + $0x8] sm:$0xf]
      %v334 = vld [vmem:[%s250 + $0xc] sm:$0xf]
      %v335 = vld [vmem:[%s250 + $0x10] sm:$0x3]
      %v400 = vunpack.c.l.b16 %v267
      %v401 = vunpack.c.l.b16 %v268
      %v402 = vunpack.c.l.b16 %v269
      %v403 = vunpack.c.l.b16 %v270
      %v404 = vunpack.c.l.b16 %v271
      %v405 = vunpack.c.l.b16 %v272
      %v406 = vunpack.c.l.b16 %v273
      %v407 = vunpack.c.l.b16 %v274
      %v408 = vunpack.c.l.b16 %v275
      %v409 = vunpack.c.l.b16 %v276
      %v410 = vunpack.c.l.b16 %v277
      %v411 = vunpack.c.l.b16 %v278
      %v412 = vunpack.c.l.b16 %v279
      %v413 = vunpack.c.l.b16 %v280
      %v414 = vunpack.c.l.b16 %v281
      %v415 = vunpack.c.l.b16 %v282
      %v416 = vunpack.c.l.b16 %v283
      %v417 = vunpack.c.l.b16 %v284
      %v418 = vunpack.c.l.b16 %v285
      %v419 = vunpack.c.l.b16 %v286
      %v420 = vunpack.c.l.b16 %v287
      %v421 = vunpack.c.l.b16 %v288
      %v422 = vunpack.c.l.b16 %v289
      %v423 = vunpack.c.l.b16 %v290
      %v424 = vunpack.c.l.b16 %v291
      %v425 = vunpack.c.l.b16 %v292
      %v426 = vunpack.c.l.b16 %v293
      %v427 = vunpack.c.l.b16 %v294
      %v428 = vunpack.c.l.b16 %v295
      %v429 = vunpack.c.l.b16 %v296
      %v430 = vunpack.c.l.b16 %v297
      %v431 = vunpack.c.l.b16 %v298
      %v432 = vunpack.c.l.b16 %v299
      %v433 = vunpack.c.l.b16 %v300
      %v434 = vunpack.c.l.b16 %v301
      %v435 = vunpack.c.l.b16 %v302
      %v436 = vunpack.c.l.b16 %v303
      %v437 = vunpack.c.l.b16 %v304
      %v438 = vunpack.c.l.b16 %v305
      %v439 = vunpack.c.l.b16 %v306
      %v440 = vunpack.c.l.b16 %v307
      %v441 = vunpack.c.l.b16 %v308
      %v442 = vunpack.c.l.b16 %v309
      %v443 = vunpack.c.l.b16 %v310
      %v444 = vunpack.c.l.b16 %v311
      %v445 = vunpack.c.l.b16 %v312
      %v446 = vunpack.c.l.b16 %v313
      %v447 = vunpack.c.l.b16 %v314
      %v448 = vunpack.c.l.b16 %v315
      %v449 = vunpack.c.l.b16 %v316
      %v450 = vunpack.c.l.b16 %v317
      %v451 = vunpack.c.l.b16 %v318
      %v452 = vunpack.c.l.b16 %v319
      %v453 = vunpack.c.l.b16 %v320
      %v454 = vunpack.c.l.b16 %v321
      %v455 = vunpack.c.l.b16 %v322
      %v456 = vunpack.c.l.b16 %v323
      %v457 = vunpack.c.l.b16 %v324
      %v458 = vunpack.c.l.b16 %v325
      %v459 = vunpack.c.l.b16 %v326
      %v460 = vunpack.c.l.b16 %v327
      %v461 = vunpack.c.l.b16 %v328
      %v462 = vunpack.c.l.b16 %v329
      %v463 = vunpack.c.l.b16 %v330
      %v464 = vpack.c.b16 %v401, %v400
      %v465 = vpack.c.b16 %v403, %v402
      %v466 = vpack.c.b16 %v405, %v404
      %v467 = vpack.c.b16 %v407, %v406
      %v468 = vpack.c.b16 %v409, %v408
      %v469 = vpack.c.b16 %v411, %v410
      %v470 = vpack.c.b16 %v413, %v412
      %v471 = vpack.c.b16 %v415, %v414
      %v472 = vpack.c.b16 %v417, %v416
      %v473 = vpack.c.b16 %v419, %v418
      %v474 = vpack.c.b16 %v421, %v420
      %v475 = vpack.c.b16 %v423, %v422
      %v476 = vpack.c.b16 %v425, %v424
      %v477 = vpack.c.b16 %v427, %v426
      %v478 = vpack.c.b16 %v429, %v428
      %v479 = vpack.c.b16 %v431, %v430
      %v480 = vpack.c.b16 %v433, %v432
      %v481 = vpack.c.b16 %v435, %v434
      %v482 = vpack.c.b16 %v437, %v436
      %v483 = vpack.c.b16 %v439, %v438
      %v484 = vpack.c.b16 %v441, %v440
      %v485 = vpack.c.b16 %v443, %v442
      %v486 = vpack.c.b16 %v445, %v444
      %v487 = vpack.c.b16 %v447, %v446
      %v488 = vpack.c.b16 %v449, %v448
      %v489 = vpack.c.b16 %v451, %v450
      %v490 = vpack.c.b16 %v453, %v452
      %v491 = vpack.c.b16 %v455, %v454
      %v492 = vpack.c.b16 %v457, %v456
      %v493 = vpack.c.b16 %v459, %v458
      %v494 = vpack.c.b16 %v461, %v460
      %v495 = vpack.c.b16 %v463, %v462
      %v501 = vunpack.c.l.b16 %v331
      %v502 = vunpack.c.l.b16 %v332
      %v503 = vunpack.c.l.b16 %v333
      %v504 = vunpack.c.l.b16 %v334
      %v505 = vunpack.c.l.b16 %v335
      %v506 = vpack.c.b16 %v502, %v501
      %v507 = vpack.c.b16 %v504, %v503
      %v508 = vpack.c.b16 %v505, %v505
      %vm511 = vcmask 293888
      %v513 = vsel %vm511, %v464, 0
      %v516 = vsel %vm511, %v465, 0
      %v519 = vsel %vm511, %v466, 0
      %v522 = vsel %vm511, %v467, 0
      %v525 = vsel %vm511, %v468, 0
      %v528 = vsel %vm511, %v469, 0
      %v531 = vsel %vm511, %v470, 0
      %v534 = vsel %vm511, %v471, 0
      %v537 = vsel %vm511, %v472, 0
      %v540 = vsel %vm511, %v473, 0
      %v543 = vsel %vm511, %v474, 0
      %v546 = vsel %vm511, %v475, 0
      %v549 = vsel %vm511, %v476, 0
      %v552 = vsel %vm511, %v477, 0
      %v555 = vsel %vm511, %v478, 0
      %v558 = vsel %vm511, %v479, 0
      %v561 = vsel %vm511, %v480, 0
      %v564 = vsel %vm511, %v481, 0
      %v567 = vsel %vm511, %v482, 0
      %v570 = vsel %vm511, %v483, 0
      %v573 = vsel %vm511, %v484, 0
      %v576 = vsel %vm511, %v485, 0
      %v579 = vsel %vm511, %v486, 0
      %v582 = vsel %vm511, %v487, 0
      %v585 = vsel %vm511, %v488, 0
      %v588 = vsel %vm511, %v489, 0
      %v591 = vsel %vm511, %v490, 0
      %v594 = vsel %vm511, %v491, 0
      %v597 = vsel %vm511, %v492, 0
      %v600 = vsel %vm511, %v493, 0
      %v603 = vsel %vm511, %v494, 0
      %v606 = vsel %vm511, %v495, 0
      %vm608 = vcmask 1041408
      %v610 = vsel %vm608, %v508, 0
      %612 = vmatprep.subr.bf16.mxu0 0
      %613 = vmatpush1.bf16.msra.mxu0 %v506
      %614 = vmatprep.subr.bf16.mxu0 0
      %615 = vmatpush1.bf16.msra.mxu0 %v507
      %616 = vmatprep.subr.bf16.mxu0 0
      %617 = vmatpush1.bf16.msra.mxu0 %v610
      %618 = vmatprep.subr.bf16.mxu0 0
      %619 = vmatpush1.bf16.msra.mxu0 0
      %620 = vmatprep.subr.bf16.mxu0 0
      %621 = vmatpush1.bf16.msra.mxu0 0
      %622 = vmatprep.subr.bf16.mxu0 0
      %623 = vmatpush1.bf16.msra.mxu0 0
      %624 = vmatprep.subr.bf16.mxu0 0
      %625 = vmatpush1.bf16.msra.mxu0 0
      %626 = vmatprep.subr.bf16.mxu0 0
      %627 = vmatpush1.bf16.msra.mxu0 0
      %628 = vmatprep.subr.bf16.mxu0 0
      %629 = vmatpush1.bf16.msra.mxu0 0
      %630 = vmatprep.subr.bf16.mxu0 0
      %631 = vmatpush1.bf16.msra.mxu0 0
      %632 = vmatprep.subr.bf16.mxu0 0
      %633 = vmatpush1.bf16.msra.mxu0 0
      %634 = vmatprep.subr.bf16.mxu0 0
      %635 = vmatpush1.bf16.msra.mxu0 0
      %636 = vmatprep.subr.bf16.mxu0 0
      %637 = vmatpush1.bf16.msra.mxu0 0
      %638 = vmatprep.subr.bf16.mxu0 0
      %639 = vmatpush1.bf16.msra.mxu0 0
      %640 = vmatprep.subr.bf16.mxu0 0
      %641 = vmatpush1.bf16.msra.mxu0 0
      %642 = vmatprep.subr.bf16.mxu0 0
      %643 = vmatpush1.bf16.msra.mxu0 0
      %644 = vmatprep.mubr.bf16.mxu0 0
      %645 = vmatmul.mubr.bf16.gmra.mrb[0].mxu0 %v513
      %v646 = vpop.f32.mrb[0].mxu0
      %v647 = vadd.f32 0.0, %v646
      %v648 = vpop.f32.mrb[0].mxu0
      %v649 = vpop.f32.mrb[0].mxu0
      %v650 = vadd.f32 0.0, %v649
      %v651 = vpop.f32.mrb[0].mxu0
      %652 = vmatprep.mubr.bf16.mxu0 0
      %653 = vmatmul.mubr.bf16.gmra.mrb[0].mxu0 %v516
      %v654 = vpop.f32.mrb[0].mxu0
      %v655 = vadd.f32 0.0, %v654
      %v656 = vpop.f32.mrb[0].mxu0
      %v657 = vpop.f32.mrb[0].mxu0
      %v658 = vadd.f32 0.0, %v657
      %v659 = vpop.f32.mrb[0].mxu0
      %660 = vmatprep.mubr.bf16.mxu0 0
      %661 = vmatmul.mubr.bf16.gmra.mrb[0].mxu0 %v519
      %v662 = vpop.f32.mrb[0].mxu0
      %v663 = vadd.f32 0.0, %v662
      %v664 = vpop.f32.mrb[0].mxu0
      %v665 = vpop.f32.mrb[0].mxu0
      %v666 = vadd.f32 0.0, %v665
      %v667 = vpop.f32.mrb[0].mxu0
      %668 = vmatprep.mubr.bf16.mxu0 0
      %669 = vmatmul.mubr.bf16.gmra.mrb[0].mxu0 %v522
      %v670 = vpop.f32.mrb[0].mxu0
      %v671 = vadd.f32 0.0, %v670
      %v672 = vpop.f32.mrb[0].mxu0
      %v673 = vpop.f32.mrb[0].mxu0
      %v674 = vadd.f32 0.0, %v673
      %v675 = vpop.f32.mrb[0].mxu0
      %676 = vmatprep.mubr.bf16.mxu0 0
      %677 = vmatmul.mubr.bf16.gmra.mrb[0].mxu0 %v525
      %v678 = vpop.f32.mrb[0].mxu0
      %v679 = vadd.f32 0.0, %v678
      %v680 = vpop.f32.mrb[0].mxu0
      %v681 = vpop.f32.mrb[0].mxu0
      %v682 = vadd.f32 0.0, %v681
      %v683 = vpop.f32.mrb[0].mxu0
      %684 = vmatprep.mubr.bf16.mxu0 0
      %685 = vmatmul.mubr.bf16.gmra.mrb[0].mxu0 %v528
      %v686 = vpop.f32.mrb[0].mxu0
      %v687 = vadd.f32 0.0, %v686
      %v688 = vpop.f32.mrb[0].mxu0
      %v689 = vpop.f32.mrb[0].mxu0
      %v690 = vadd.f32 0.0, %v689
      %v691 = vpop.f32.mrb[0].mxu0
      %692 = vmatprep.mubr.bf16.mxu0 0
      %693 = vmatmul.mubr.bf16.gmra.mrb[0].mxu0 %v531
      %v694 = vpop.f32.mrb[0].mxu0
      %v695 = vadd.f32 0.0, %v694
      %v696 = vpop.f32.mrb[0].mxu0
      %v697 = vpop.f32.mrb[0].mxu0
      %v698 = vadd.f32 0.0, %v697
      %v699 = vpop.f32.mrb[0].mxu0
      %700 = vmatprep.mubr.bf16.mxu0 0
      %701 = vmatmul.mubr.bf16.gmra.mrb[0].mxu0 %v534
      %v702 = vpop.f32.mrb[0].mxu0
      %v703 = vadd.f32 0.0, %v702
      %v704 = vpop.f32.mrb[0].mxu0
      %v705 = vpop.f32.mrb[0].mxu0
      %v706 = vadd.f32 0.0, %v705
      %v707 = vpop.f32.mrb[0].mxu0
      %708 = vmatprep.mubr.bf16.mxu0 0
      %709 = vmatmul.mubr.bf16.gmra.mrb[0].mxu0 %v537
      %v710 = vpop.f32.mrb[0].mxu0
      %v711 = vadd.f32 0.0, %v710
      %v712 = vpop.f32.mrb[0].mxu0
      %v713 = vpop.f32.mrb[0].mxu0
      %v714 = vadd.f32 0.0, %v713
      %v715 = vpop.f32.mrb[0].mxu0
      %716 = vmatprep.mubr.bf16.mxu0 0
      %717 = vmatmul.mubr.bf16.gmra.mrb[0].mxu0 %v540
      %v718 = vpop.f32.mrb[0].mxu0
      %v719 = vadd.f32 0.0, %v718
      %v720 = vpop.f32.mrb[0].mxu0
      %v721 = vpop.f32.mrb[0].mxu0
      %v722 = vadd.f32 0.0, %v721
      %v723 = vpop.f32.mrb[0].mxu0
      %724 = vmatprep.mubr.bf16.mxu0 0
      %725 = vmatmul.mubr.bf16.gmra.mrb[0].mxu0 %v543
      %v726 = vpop.f32.mrb[0].mxu0
      %v727 = vadd.f32 0.0, %v726
      %v728 = vpop.f32.mrb[0].mxu0
      %v729 = vpop.f32.mrb[0].mxu0
      %v730 = vadd.f32 0.0, %v729
      %v731 = vpop.f32.mrb[0].mxu0
      %732 = vmatprep.mubr.bf16.mxu0 0
      %733 = vmatmul.mubr.bf16.gmra.mrb[0].mxu0 %v546
      %v734 = vpop.f32.mrb[0].mxu0
      %v735 = vadd.f32 0.0, %v734
      %v736 = vpop.f32.mrb[0].mxu0
      %v737 = vpop.f32.mrb[0].mxu0
      %v738 = vadd.f32 0.0, %v737
      %v739 = vpop.f32.mrb[0].mxu0
      %740 = vmatprep.mubr.bf16.mxu0 0
      %741 = vmatmul.mubr.bf16.gmra.mrb[0].mxu0 %v549
      %v742 = vpop.f32.mrb[0].mxu0
      %v743 = vadd.f32 0.0, %v742
      %v744 = vpop.f32.mrb[0].mxu0
      %v745 = vpop.f32.mrb[0].mxu0
      %v746 = vadd.f32 0.0, %v745
      %v747 = vpop.f32.mrb[0].mxu0
      %748 = vmatprep.mubr.bf16.mxu0 0
      %749 = vmatmul.mubr.bf16.gmra.mrb[0].mxu0 %v552
      %v750 = vpop.f32.mrb[0].mxu0
      %v751 = vadd.f32 0.0, %v750
      %v752 = vpop.f32.mrb[0].mxu0
      %v753 = vpop.f32.mrb[0].mxu0
      %v754 = vadd.f32 0.0, %v753
      %v755 = vpop.f32.mrb[0].mxu0
      %756 = vmatprep.mubr.bf16.mxu0 0
      %757 = vmatmul.mubr.bf16.gmra.mrb[0].mxu0 %v555
      %v758 = vpop.f32.mrb[0].mxu0
      %v759 = vadd.f32 0.0, %v758
      %v760 = vpop.f32.mrb[0].mxu0
      %v761 = vpop.f32.mrb[0].mxu0
      %v762 = vadd.f32 0.0, %v761
      %v763 = vpop.f32.mrb[0].mxu0
      %764 = vmatprep.mubr.bf16.mxu0 0
      %765 = vmatmul.mubr.bf16.gmra.mrb[0].mxu0 %v558
      %v766 = vpop.f32.mrb[0].mxu0
      %v767 = vadd.f32 0.0, %v766
      %v768 = vpop.f32.mrb[0].mxu0
      %v769 = vpop.f32.mrb[0].mxu0
      %v770 = vadd.f32 0.0, %v769
      %v771 = vpop.f32.mrb[0].mxu0
      %772 = vmatprep.mubr.bf16.mxu0 0
      %773 = vmatmul.mubr.bf16.gmra.mrb[0].mxu0 %v561
      %v774 = vpop.f32.mrb[0].mxu0
      %v775 = vadd.f32 0.0, %v774
      %v776 = vpop.f32.mrb[0].mxu0
      %v777 = vpop.f32.mrb[0].mxu0
      %v778 = vadd.f32 0.0, %v777
      %v779 = vpop.f32.mrb[0].mxu0
      %780 = vmatprep.mubr.bf16.mxu0 0
      %781 = vmatmul.mubr.bf16.gmra.mrb[0].mxu0 %v564
      %v782 = vpop.f32.mrb[0].mxu0
      %v783 = vadd.f32 0.0, %v782
      %v784 = vpop.f32.mrb[0].mxu0
      %v785 = vpop.f32.mrb[0].mxu0
      %v786 = vadd.f32 0.0, %v785
      %v787 = vpop.f32.mrb[0].mxu0
      %788 = vmatprep.mubr.bf16.mxu0 0
      %789 = vmatmul.mubr.bf16.gmra.mrb[0].mxu0 %v567
      %v790 = vpop.f32.mrb[0].mxu0
      %v791 = vadd.f32 0.0, %v790
      %v792 = vpop.f32.mrb[0].mxu0
      %v793 = vpop.f32.mrb[0].mxu0
      %v794 = vadd.f32 0.0, %v793
      %v795 = vpop.f32.mrb[0].mxu0
      %796 = vmatprep.mubr.bf16.mxu0 0
      %797 = vmatmul.mubr.bf16.gmra.mrb[0].mxu0 %v570
      %v798 = vpop.f32.mrb[0].mxu0
      %v799 = vadd.f32 0.0, %v798
      %v800 = vpop.f32.mrb[0].mxu0
      %v801 = vpop.f32.mrb[0].mxu0
      %v802 = vadd.f32 0.0, %v801
      %v803 = vpop.f32.mrb[0].mxu0
      %804 = vmatprep.mubr.bf16.mxu0 0
      %805 = vmatmul.mubr.bf16.gmra.mrb[0].mxu0 %v573
      %v806 = vpop.f32.mrb[0].mxu0
      %v807 = vadd.f32 0.0, %v806
      %v808 = vpop.f32.mrb[0].mxu0
      %v809 = vpop.f32.mrb[0].mxu0
      %v810 = vadd.f32 0.0, %v809
      %v811 = vpop.f32.mrb[0].mxu0
      %812 = vmatprep.mubr.bf16.mxu0 0
      %813 = vmatmul.mubr.bf16.gmra.mrb[0].mxu0 %v576
      %v814 = vpop.f32.mrb[0].mxu0
      %v815 = vadd.f32 0.0, %v814
      %v816 = vpop.f32.mrb[0].mxu0
      %v817 = vpop.f32.mrb[0].mxu0
      %v818 = vadd.f32 0.0, %v817
      %v819 = vpop.f32.mrb[0].mxu0
      %820 = vmatprep.mubr.bf16.mxu0 0
      %821 = vmatmul.mubr.bf16.gmra.mrb[0].mxu0 %v579
      %v822 = vpop.f32.mrb[0].mxu0
      %v823 = vadd.f32 0.0, %v822
      %v824 = vpop.f32.mrb[0].mxu0
      %v825 = vpop.f32.mrb[0].mxu0
      %v826 = vadd.f32 0.0, %v825
      %v827 = vpop.f32.mrb[0].mxu0
      %828 = vmatprep.mubr.bf16.mxu0 0
      %829 = vmatmul.mubr.bf16.gmra.mrb[0].mxu0 %v582
      %v830 = vpop.f32.mrb[0].mxu0
      %v831 = vadd.f32 0.0, %v830
      %v832 = vpop.f32.mrb[0].mxu0
      %v833 = vpop.f32.mrb[0].mxu0
      %v834 = vadd.f32 0.0, %v833
      %v835 = vpop.f32.mrb[0].mxu0
      %836 = vmatprep.mubr.bf16.mxu0 0
      %837 = vmatmul.mubr.bf16.gmra.mrb[0].mxu0 %v585
      %v838 = vpop.f32.mrb[0].mxu0
      %v839 = vadd.f32 0.0, %v838
      %v840 = vpop.f32.mrb[0].mxu0
      %v841 = vpop.f32.mrb[0].mxu0
      %v842 = vadd.f32 0.0, %v841
      %v843 = vpop.f32.mrb[0].mxu0
      %844 = vmatprep.mubr.bf16.mxu0 0
      %845 = vmatmul.mubr.bf16.gmra.mrb[0].mxu0 %v588
      %v846 = vpop.f32.mrb[0].mxu0
      %v847 = vadd.f32 0.0, %v846
      %v848 = vpop.f32.mrb[0].mxu0
      %v849 = vpop.f32.mrb[0].mxu0
      %v850 = vadd.f32 0.0, %v849
      %v851 = vpop.f32.mrb[0].mxu0
      %852 = vmatprep.mubr.bf16.mxu0 0
      %853 = vmatmul.mubr.bf16.gmra.mrb[0].mxu0 %v591
      %v854 = vpop.f32.mrb[0].mxu0
      %v855 = vadd.f32 0.0, %v854
      %v856 = vpop.f32.mrb[0].mxu0
      %v857 = vpop.f32.mrb[0].mxu0
      %v858 = vadd.f32 0.0, %v857
      %v859 = vpop.f32.mrb[0].mxu0
      %860 = vmatprep.mubr.bf16.mxu0 0
      %861 = vmatmul.mubr.bf16.gmra.mrb[0].mxu0 %v594
      %v862 = vpop.f32.mrb[0].mxu0
      %v863 = vadd.f32 0.0, %v862
      %v864 = vpop.f32.mrb[0].mxu0
      %v865 = vpop.f32.mrb[0].mxu0
      %v866 = vadd.f32 0.0, %v865
      %v867 = vpop.f32.mrb[0].mxu0
      %868 = vmatprep.mubr.bf16.mxu0 0
      %869 = vmatmul.mubr.bf16.gmra.mrb[0].mxu0 %v597
      %v870 = vpop.f32.mrb[0].mxu0
      %v871 = vadd.f32 0.0, %v870
      %v872 = vpop.f32.mrb[0].mxu0
      %v873 = vpop.f32.mrb[0].mxu0
      %v874 = vadd.f32 0.0, %v873
      %v875 = vpop.f32.mrb[0].mxu0
      %876 = vmatprep.mubr.bf16.mxu0 0
      %877 = vmatmul.mubr.bf16.gmra.mrb[0].mxu0 %v600
      %v878 = vpop.f32.mrb[0].mxu0
      %v879 = vadd.f32 0.0, %v878
      %v880 = vpop.f32.mrb[0].mxu0
      %v881 = vpop.f32.mrb[0].mxu0
      %v882 = vadd.f32 0.0, %v881
      %v883 = vpop.f32.mrb[0].mxu0
      %884 = vmatprep.mubr.bf16.mxu0 0
      %885 = vmatmul.mubr.bf16.gmra.mrb[0].mxu0 %v603
      %v886 = vpop.f32.mrb[0].mxu0
      %v887 = vadd.f32 0.0, %v886
      %v888 = vpop.f32.mrb[0].mxu0
      %v889 = vpop.f32.mrb[0].mxu0
      %v890 = vadd.f32 0.0, %v889
      %v891 = vpop.f32.mrb[0].mxu0
      %892 = vmatprep.mubr.bf16.mxu0 0
      %893 = vmatmul.mubr.bf16.gmra.mrb[0].mxu0 %v606
      %v894 = vpop.f32.mrb[0].mxu0
      %v895 = vadd.f32 0.0, %v894
      %v896 = vpop.f32.mrb[0].mxu0
      %v897 = vpop.f32.mrb[0].mxu0
      %v898 = vadd.f32 0.0, %v897
      %v899 = vpop.f32.mrb[0].mxu0
      %900 = vdwg.mxu0
      %v901 = vld [vmem:[%s253] sm:$0x1]
      %v902 = vld [vmem:[%s256] sm:$0x1]
      %v904 = vlaneseq
      %v905 = vshrl.u32 %v904, 7
      %v906 = vsub.s32 0, %v905
      %v907 = vrot.slane %v901, %v906
      %v909 = vmul.f32 %v647, %v907
      %v910 = vmul.f32 %v650, %v907
      %v911 = vmul.f32 %v655, %v907
      %v912 = vmul.f32 %v658, %v907
      %v913 = vmul.f32 %v663, %v907
      %v914 = vmul.f32 %v666, %v907
      %v915 = vmul.f32 %v671, %v907
      %v916 = vmul.f32 %v674, %v907
      %v917 = vmul.f32 %v679, %v907
      %v918 = vmul.f32 %v682, %v907
      %v919 = vmul.f32 %v687, %v907
      %v920 = vmul.f32 %v690, %v907
      %v921 = vmul.f32 %v695, %v907
      %v922 = vmul.f32 %v698, %v907
      %v923 = vmul.f32 %v703, %v907
      %v924 = vmul.f32 %v706, %v907
      %v925 = vmul.f32 %v711, %v907
      %v926 = vmul.f32 %v714, %v907
      %v927 = vmul.f32 %v719, %v907
      %v928 = vmul.f32 %v722, %v907
      %v929 = vmul.f32 %v727, %v907
      %v930 = vmul.f32 %v730, %v907
      %v931 = vmul.f32 %v735, %v907
      %v932 = vmul.f32 %v738, %v907
      %v933 = vmul.f32 %v743, %v907
      %v934 = vmul.f32 %v746, %v907
      %v935 = vmul.f32 %v751, %v907
      %v936 = vmul.f32 %v754, %v907
      %v937 = vmul.f32 %v759, %v907
      %v938 = vmul.f32 %v762, %v907
      %v939 = vmul.f32 %v767, %v907
      %v940 = vmul.f32 %v770, %v907
      %v941 = vmul.f32 %v775, %v907
      %v942 = vmul.f32 %v778, %v907
      %v943 = vmul.f32 %v783, %v907
      %v944 = vmul.f32 %v786, %v907
      %v945 = vmul.f32 %v791, %v907
      %v946 = vmul.f32 %v794, %v907
      %v947 = vmul.f32 %v799, %v907
      %v948 = vmul.f32 %v802, %v907
      %v949 = vmul.f32 %v807, %v907
      %v950 = vmul.f32 %v810, %v907
      %v951 = vmul.f32 %v815, %v907
      %v952 = vmul.f32 %v818, %v907
      %v953 = vmul.f32 %v823, %v907
      %v954 = vmul.f32 %v826, %v907
      %v955 = vmul.f32 %v831, %v907
      %v956 = vmul.f32 %v834, %v907
      %v957 = vmul.f32 %v839, %v907
      %v958 = vmul.f32 %v842, %v907
      %v959 = vmul.f32 %v847, %v907
      %v960 = vmul.f32 %v850, %v907
      %v961 = vmul.f32 %v855, %v907
      %v962 = vmul.f32 %v858, %v907
      %v963 = vmul.f32 %v863, %v907
      %v964 = vmul.f32 %v866, %v907
      %v965 = vmul.f32 %v871, %v907
      %v966 = vmul.f32 %v874, %v907
      %v967 = vmul.f32 %v879, %v907
      %v968 = vmul.f32 %v882, %v907
      %v969 = vmul.f32 %v887, %v907
      %v970 = vmul.f32 %v890, %v907
      %v971 = vmul.f32 %v895, %v907
      %v972 = vmul.f32 %v898, %v907
      %v974 = vlaneseq
      %v975 = vshrl.u32 %v974, 7
      %v976 = vsub.s32 0, %v975
      %v977 = vrot.slane %v902, %v976
      %v979 = vadd.f32 %v909, %v977
      %v980 = vadd.f32 %v910, %v977
      %v981 = vadd.f32 %v911, %v977
      %v982 = vadd.f32 %v912, %v977
      %v983 = vadd.f32 %v913, %v977
      %v984 = vadd.f32 %v914, %v977
      %v985 = vadd.f32 %v915, %v977
      %v986 = vadd.f32 %v916, %v977
      %v987 = vadd.f32 %v917, %v977
      %v988 = vadd.f32 %v918, %v977
      %v989 = vadd.f32 %v919, %v977
      %v990 = vadd.f32 %v920, %v977
      %v991 = vadd.f32 %v921, %v977
      %v992 = vadd.f32 %v922, %v977
      %v993 = vadd.f32 %v923, %v977
      %v994 = vadd.f32 %v924, %v977
      %v995 = vadd.f32 %v925, %v977
      %v996 = vadd.f32 %v926, %v977
      %v997 = vadd.f32 %v927, %v977
      %v998 = vadd.f32 %v928, %v977
      %v999 = vadd.f32 %v929, %v977
      %v1000 = vadd.f32 %v930, %v977
      %v1001 = vadd.f32 %v931, %v977
      %v1002 = vadd.f32 %v932, %v977
      %v1003 = vadd.f32 %v933, %v977
      %v1004 = vadd.f32 %v934, %v977
      %v1005 = vadd.f32 %v935, %v977
      %v1006 = vadd.f32 %v936, %v977
      %v1007 = vadd.f32 %v937, %v977
      %v1008 = vadd.f32 %v938, %v977
      %v1009 = vadd.f32 %v939, %v977
      %v1010 = vadd.f32 %v940, %v977
      %v1011 = vadd.f32 %v941, %v977
      %v1012 = vadd.f32 %v942, %v977
      %v1013 = vadd.f32 %v943, %v977
      %v1014 = vadd.f32 %v944, %v977
      %v1015 = vadd.f32 %v945, %v977
      %v1016 = vadd.f32 %v946, %v977
      %v1017 = vadd.f32 %v947, %v977
      %v1018 = vadd.f32 %v948, %v977
      %v1019 = vadd.f32 %v949, %v977
      %v1020 = vadd.f32 %v950, %v977
      %v1021 = vadd.f32 %v951, %v977
      %v1022 = vadd.f32 %v952, %v977
      %v1023 = vadd.f32 %v953, %v977
      %v1024 = vadd.f32 %v954, %v977
      %v1025 = vadd.f32 %v955, %v977
      %v1026 = vadd.f32 %v956, %v977
      %v1027 = vadd.f32 %v957, %v977
      %v1028 = vadd.f32 %v958, %v977
      %v1029 = vadd.f32 %v959, %v977
      %v1030 = vadd.f32 %v960, %v977
      %v1031 = vadd.f32 %v961, %v977
      %v1032 = vadd.f32 %v962, %v977
      %v1033 = vadd.f32 %v963, %v977
      %v1034 = vadd.f32 %v964, %v977
      %v1035 = vadd.f32 %v965, %v977
      %v1036 = vadd.f32 %v966, %v977
      %v1037 = vadd.f32 %v967, %v977
      %v1038 = vadd.f32 %v968, %v977
      %v1039 = vadd.f32 %v969, %v977
      %v1040 = vadd.f32 %v970, %v977
      %v1041 = vadd.f32 %v971, %v977
      %v1042 = vadd.f32 %v972, %v977
      %v1043 = vtanh.pop %v979
      %v1044 = vtanh.pop %v980
      %v1045 = vtanh.pop %v981
      %v1046 = vtanh.pop %v982
      %v1047 = vtanh.pop %v983
      %v1048 = vtanh.pop %v984
      %v1049 = vtanh.pop %v985
      %v1050 = vtanh.pop %v986
      %v1051 = vtanh.pop %v987
      %v1052 = vtanh.pop %v988
      %v1053 = vtanh.pop %v989
      %v1054 = vtanh.pop %v990
      %v1055 = vtanh.pop %v991
      %v1056 = vtanh.pop %v992
      %v1057 = vtanh.pop %v993
      %v1058 = vtanh.pop %v994
      %v1059 = vtanh.pop %v995
      %v1060 = vtanh.pop %v996
      %v1061 = vtanh.pop %v997
      %v1062 = vtanh.pop %v998
      %v1063 = vtanh.pop %v999
      %v1064 = vtanh.pop %v1000
      %v1065 = vtanh.pop %v1001
      %v1066 = vtanh.pop %v1002
      %v1067 = vtanh.pop %v1003
      %v1068 = vtanh.pop %v1004
      %v1069 = vtanh.pop %v1005
      %v1070 = vtanh.pop %v1006
      %v1071 = vtanh.pop %v1007
      %v1072 = vtanh.pop %v1008
      %v1073 = vtanh.pop %v1009
      %v1074 = vtanh.pop %v1010
      %v1075 = vtanh.pop %v1011
      %v1076 = vtanh.pop %v1012
      %v1077 = vtanh.pop %v1013
      %v1078 = vtanh.pop %v1014
      %v1079 = vtanh.pop %v1015
      %v1080 = vtanh.pop %v1016
      %v1081 = vtanh.pop %v1017
      %v1082 = vtanh.pop %v1018
      %v1083 = vtanh.pop %v1019
      %v1084 = vtanh.pop %v1020
      %v1085 = vtanh.pop %v1021
      %v1086 = vtanh.pop %v1022
      %v1087 = vtanh.pop %v1023
      %v1088 = vtanh.pop %v1024
      %v1089 = vtanh.pop %v1025
      %v1090 = vtanh.pop %v1026
      %v1091 = vtanh.pop %v1027
      %v1092 = vtanh.pop %v1028
      %v1093 = vtanh.pop %v1029
      %v1094 = vtanh.pop %v1030
      %v1095 = vtanh.pop %v1031
      %v1096 = vtanh.pop %v1032
      %v1097 = vtanh.pop %v1033
      %v1098 = vtanh.pop %v1034
      %v1099 = vtanh.pop %v1035
      %v1100 = vtanh.pop %v1036
      %v1101 = vtanh.pop %v1037
      %v1102 = vtanh.pop %v1038
      %v1103 = vtanh.pop %v1039
      %v1104 = vtanh.pop %v1040
      %v1105 = vtanh.pop %v1041
      %v1106 = vtanh.pop %v1042
      %1107 = vst [vmem:[%s264] sm:$0xff] %v1043
      %1108 = vst [vmem:[%s264 + $0x8] sm:$0xff] %v1044
      %1109 = vst [vmem:[%s264 + $0x10] sm:$0xff] %v1045
      %1110 = vst [vmem:[%s264 + $0x18] sm:$0xff] %v1046
      %1111 = vst [vmem:[%s264 + $0x20] sm:$0xff] %v1047
      %1112 = vst [vmem:[%s264 + $0x28] sm:$0xff] %v1048
      %1113 = vst [vmem:[%s264 + $0x30] sm:$0xff] %v1049
      %1114 = vst [vmem:[%s264 + $0x38] sm:$0xff] %v1050
      %1115 = vst [vmem:[%s264 + $0x40] sm:$0xff] %v1051
      %1116 = vst [vmem:[%s264 + $0x48] sm:$0xff] %v1052
      %1117 = vst [vmem:[%s264 + $0x50] sm:$0xff] %v1053
      %1118 = vst [vmem:[%s264 + $0x58] sm:$0xff] %v1054
      %1119 = vst [vmem:[%s264 + $0x60] sm:$0xff] %v1055
      %1120 = vst [vmem:[%s264 + $0x68] sm:$0xff] %v1056
      %1121 = vst [vmem:[%s264 + $0x70] sm:$0xff] %v1057
      %1122 = vst [vmem:[%s264 + $0x78] sm:$0xff] %v1058
      %1123 = vst [vmem:[%s264 + $0x80] sm:$0xff] %v1059
      %1124 = vst [vmem:[%s264 + $0x88] sm:$0xff] %v1060
      %1125 = vst [vmem:[%s264 + $0x90] sm:$0xff] %v1061
      %1126 = vst [vmem:[%s264 + $0x98] sm:$0xff] %v1062
      %1127 = vst [vmem:[%s264 + $0xa0] sm:$0xff] %v1063
      %1128 = vst [vmem:[%s264 + $0xa8] sm:$0xff] %v1064
      %1129 = vst [vmem:[%s264 + $0xb0] sm:$0xff] %v1065
      %1130 = vst [vmem:[%s264 + $0xb8] sm:$0xff] %v1066
      %1131 = vst [vmem:[%s264 + $0xc0] sm:$0xff] %v1067
      %1132 = vst [vmem:[%s264 + $0xc8] sm:$0xff] %v1068
      %1133 = vst [vmem:[%s264 + $0xd0] sm:$0xff] %v1069
      %1134 = vst [vmem:[%s264 + $0xd8] sm:$0xff] %v1070
      %1135 = vst [vmem:[%s264 + $0xe0] sm:$0xff] %v1071
      %1136 = vst [vmem:[%s264 + $0xe8] sm:$0xff] %v1072
      %1137 = vst [vmem:[%s264 + $0xf0] sm:$0xff] %v1073
      %1138 = vst [vmem:[%s264 + $0xf8] sm:$0xff] %v1074
      %1139 = vst [vmem:[%s264 + $0x100] sm:$0xff] %v1075
      %1140 = vst [vmem:[%s264 + $0x108] sm:$0xff] %v1076
      %1141 = vst [vmem:[%s264 + $0x110] sm:$0xff] %v1077
      %1142 = vst [vmem:[%s264 + $0x118] sm:$0xff] %v1078
      %1143 = vst [vmem:[%s264 + $0x120] sm:$0xff] %v1079
      %1144 = vst [vmem:[%s264 + $0x128] sm:$0xff] %v1080
      %1145 = vst [vmem:[%s264 + $0x130] sm:$0xff] %v1081
      %1146 = vst [vmem:[%s264 + $0x138] sm:$0xff] %v1082
      %1147 = vst [vmem:[%s264 + $0x140] sm:$0xff] %v1083
      %1148 = vst [vmem:[%s264 + $0x148] sm:$0xff] %v1084
      %1149 = vst [vmem:[%s264 + $0x150] sm:$0xff] %v1085
      %1150 = vst [vmem:[%s264 + $0x158] sm:$0xff] %v1086
      %1151 = vst [vmem:[%s264 + $0x160] sm:$0xff] %v1087
      %1152 = vst [vmem:[%s264 + $0x168] sm:$0xff] %v1088
      %1153 = vst [vmem:[%s264 + $0x170] sm:$0xff] %v1089
      %1154 = vst [vmem:[%s264 + $0x178] sm:$0xff] %v1090
      %1155 = vst [vmem:[%s264 + $0x180] sm:$0xff] %v1091
      %1156 = vst [vmem:[%s264 + $0x188] sm:$0xff] %v1092
      %1157 = vst [vmem:[%s264 + $0x190] sm:$0xff] %v1093
      %1158 = vst [vmem:[%s264 + $0x198] sm:$0xff] %v1094
      %1159 = vst [vmem:[%s264 + $0x1a0] sm:$0xff] %v1095
      %1160 = vst [vmem:[%s264 + $0x1a8] sm:$0xff] %v1096
      %1161 = vst [vmem:[%s264 + $0x1b0] sm:$0xff] %v1097
      %1162 = vst [vmem:[%s264 + $0x1b8] sm:$0xff] %v1098
      %1163 = vst [vmem:[%s264 + $0x1c0] sm:$0xff] %v1099
      %1164 = vst [vmem:[%s264 + $0x1c8] sm:$0xff] %v1100
      %1165 = vst [vmem:[%s264 + $0x1d0] sm:$0xff] %v1101
      %1166 = vst [vmem:[%s264 + $0x1d8] sm:$0xff] %v1102
      %1167 = vst [vmem:[%s264 + $0x1e0] sm:$0xff] %v1103
      %1168 = vst [vmem:[%s264 + $0x1e8] sm:$0xff] %v1104
      %1169 = vst [vmem:[%s264 + $0x1f0] sm:$0xff] %v1105
      %1170 = vst [vmem:[%s264 + $0x1f8] sm:$0xff] %v1106
      %s1171 = smul.u32 64, %s19
      %p1172 = scmp.lt.s32.totalorder %s1171, 255
      %s1173 = scalar_select %p1172, %s1171, 255
      %p1174 = scmp.lt.s32.totalorder %s20, 0
      %s1175 = scalar_select %p1174, %s20, 0
      %s1176 = sadd.s32 %s1175, %s1173
      %s1177 = smul.addr %s1176, 8
      %s1178 = scalar_lea.vmem %s4, %s1177
      // Predicated region
      $region37: #{generator_forward.15} parent=35 // pred_check
        %p1179 = pneg %p151
      $region38: #{generator_forward.15} parent=35 // pred_check_branch
        %1181 = sbr.rel (%p1179) target = $region40
      $region39: #{generator_forward.15} parent=35 // pred_region
        %s1182 = smul.u32 64, %s19
      $region40: #{generator_forward.15} parent=35 // pred_fallthru
        _
    $region36: #{generator_forward.15} parent=5 // pred_fallthru
      _
    %p1183 = scmp.le.s32.totalorder 2, %s10
    // Predicated region
    $region41: #{generator_forward.15} parent=5 // pred_check
      %p1184 = pneg %p1183
    $region42: #{generator_forward.15} parent=5 // pred_check_branch
      %1186 = sbr.rel (%p1184) target = $region44
    $region43: #{generator_forward.15} parent=5 // pred_region
      %s1187 = ssub.s32 %s10, 2
      // Predicated region
      $region45: #{generator_forward.15} parent=43 // pred_check
        %p1188 = pneg %p157
      $region46: #{generator_forward.15} parent=43 // pred_check_branch
        %1190 = sbr.rel (%p1188) target = $region48
      $region47: #{generator_forward.15} parent=43 // pred_region
        %s1191 = smul.u32 64, %s21
        %p1192 = scmp.lt.s32.totalorder %s1191, 255
        %s1193 = scalar_select %p1192, %s1191, 255
        %p1194 = scmp.lt.s32.totalorder %s22, 0
        %s1195 = scalar_select %p1194, %s22, 0
        %s1196 = sadd.s32 %s1195, %s1193
        %s1197 = smul.addr %s1196, 8
        %s1198 = scalar_lea.vmem %s4, %s1197
      $region48: #{generator_forward.15} parent=43 // pred_fallthru
        _
    $region44: #{generator_forward.15} parent=5 // pred_fallthru
      _
  $region6: #{generator_forward.15} parent=0 // loop_footer
    %s14 = sadd.s32 1, %s10
  $region7: #{generator_forward.15} parent=0 // loop_footer_branch
    %9 = sbr.rel target = $region3
  $region8: #{generator_forward.15} parent=0 // loop_exit
    _

</llo_original>
